<compile_context>
chip_gen: v5e
topology: v5e:2x2
jax: 0.10.0
libtpu: 0.0.40
codegen_flags: <defaults>
</compile_context>

<pallas_src>
import functools

import jax
import jax.numpy as jnp
from jax import lax
from jax.experimental import pallas as pl
from jax.experimental.pallas import tpu as pltpu


# --------------------------------------------------------------------------- #
# Kernel
# --------------------------------------------------------------------------- #
def _head_kernel(x_ref, w_ref, o_ref, *, head_size, padded_head):
    # x_ref: (Bb, T, C) bf16   w_ref: (C, 3*Hp) bf16   o_ref: (Bb, T, H)
    Bb, T, C = x_ref.shape
    H, Hp = head_size, padded_head

    # ---- fused QKV projection: one MXU matmul on the flattened (Bb*T, C) slab ----
    x2 = x_ref[...].reshape(Bb * T, C)
    qkv = jnp.dot(x2, w_ref[...], preferred_element_type=jnp.float32)   # (Bb*T, 3Hp)
    qkv = qkv.reshape(Bb, T, 3 * Hp)

    # 128-aligned slices (free vreg views). Padding columns are exactly zero and
    # 1/sqrt(H) is already folded into the Q columns of the fused weight.
    k = qkv[:, :, :Hp].astype(jnp.bfloat16)
    q = qkv[:, :, Hp:2 * Hp].astype(jnp.bfloat16)
    v = qkv[:, :, 2 * Hp:].astype(jnp.bfloat16)

    # ---- scores + causal mask (mask built once, broadcast over the batch block) ----
    s = jnp.einsum('bqd,bkd->bqk', q, k,
                   preferred_element_type=jnp.float32)                  # (Bb, T, T)
    row = lax.broadcasted_iota(jnp.int32, (T, T), 0)
    col = lax.broadcasted_iota(jnp.int32, (T, T), 1)
    s = jnp.where((col <= row)[None, :, :], s, -jnp.inf)

    # ---- numerically stable softmax; denominator on the EUP (approx reciprocal);
    #      the reciprocal-multiply is fused with the bf16 cast of p ----
    s = s - jnp.max(s, axis=-1, keepdims=True)
    p = jnp.exp(s)
    inv = pl.reciprocal(jnp.sum(p, axis=-1, keepdims=True), approx=True)
    p = (p * inv).astype(jnp.bfloat16)

    # dropout: identity (eval mode)

    # ---- PV matmul; store only the H real columns (64-lane masked store beats a
    #      padded store + separate full-output HBM slice copy in the wrapper) ----
    out = jnp.einsum('bqk,bkd->bqd', p, v,
                     preferred_element_type=jnp.float32)                # (Bb, T, Hp)
    o_ref[...] = out[:, :, :H].astype(o_ref.dtype)


# --------------------------------------------------------------------------- #
# Sizing helpers
# --------------------------------------------------------------------------- #
def _round_up(n, m):
    return ((n + m - 1) // m) * m


def _vmem_capacity_bytes():
    try:
        return int(pltpu.get_tpu_info().vmem_capacity_bytes)
    except Exception:
        return 64 * 1024 * 1024          # conservative (v7x per-core VMEM)


def _num_tensorcores():
    # v7x packs 2 TensorCores per chip; v5e/v6e have 1.
    try:
        kind = jax.devices()[0].device_kind.lower()
        if "v7" in kind or "7x" in kind:
            return 2
    except Exception:
        pass
    return 1


def _pick_block_b(B, T, C, H, Hp, out_itemsize, *, vmem_budget, min_grid_steps):
    """Largest divisor of B whose per-step VMEM footprint fits the budget while
    keeping >= min_grid_steps grid steps (2 only on v7x so both TCs get work)."""
    def est(bb):
        x_blk   = 2 * bb * T * C * 2             # bf16 input, double-buffered
        w_blk   = C * 3 * Hp * 2                 # bf16 weight, single-buffered
        o_blk   = 2 * bb * T * H * out_itemsize  # output, double-buffered
        qkv_f32 = bb * T * 3 * Hp * 4            # projection accumulator
        score   = 2 * bb * T * T * 4             # s and p live together (f32)
        out_f32 = bb * T * Hp * 4                # PV accumulator
        return x_blk + w_blk + o_blk + qkv_f32 + score + out_f32

    best = 1
    for bb in range(1, B + 1):
        if B % bb:
            continue
        if est(bb) > vmem_budget:
            continue
        if B // bb < min_grid_steps and bb != 1:
            continue
        best = bb
    return best


# --------------------------------------------------------------------------- #
# Host-side wrappers
# --------------------------------------------------------------------------- #
def prepare_head_weights(wk, wq, wv):
    """One-time weight prep: fold 1/sqrt(H) into Q, zero-pad each segment to Hp
    lanes, fuse into a single (C, 3*Hp) matrix and cast to bf16."""
    C, H = wk.shape
    Hp = _round_up(H, 128)
    pad = ((0, 0), (0, Hp - H))
    scale = jnp.asarray(H ** -0.5, wq.dtype)
    w_qkv = jnp.concatenate(
        [jnp.pad(wk, pad), jnp.pad(wq * scale, pad), jnp.pad(wv, pad)], axis=1)
    return w_qkv.astype(jnp.bfloat16), H


def head_forward(x, w_qkv, head_size, *, block_b=None):
    """x: (B, T, C); w_qkv: prepared (C, 3*Hp) bf16 weight -> (B, T, H)."""
    B, T, C = x.shape
    H = head_size
    Hp = w_qkv.shape[1] // 3
    assert w_qkv.shape == (C, 3 * Hp) and Hp % 128 == 0 and Hp >= H
    assert T % 8 == 0, "T should be a multiple of 8 (sublane) for dense tiles"

    # bf16 input stream (ideally produced upstream as bf16 already).
    x_bf16 = x if x.dtype == jnp.bfloat16 else x.astype(jnp.bfloat16)

    cap = _vmem_capacity_bytes()
    vmem_limit = min(cap * 3 // 4, 96 * 1024 * 1024)
    vmem_budget = vmem_limit * 3 // 4            # headroom for Pallas internals
    min_steps = 2 if _num_tensorcores() >= 2 else 1

    if block_b is None:
        block_b = _pick_block_b(B, T, C, H, Hp, jnp.dtype(x.dtype).itemsize,
                                vmem_budget=vmem_budget, min_grid_steps=min_steps)
    assert B % block_b == 0

    kernel = functools.partial(_head_kernel, head_size=H, padded_head=Hp)

    def call(weight_buffer_count):
        w_kwargs = {}
        if weight_buffer_count is not None:
            w_kwargs["pipeline_mode"] = pl.Buffered(weight_buffer_count)
        return pl.pallas_call(
            kernel,
            out_shape=jax.ShapeDtypeStruct((B, T, H), x.dtype),
            grid_spec=pltpu.PrefetchScalarGridSpec(
                num_scalar_prefetch=0,
                grid=(B // block_b,),
                in_specs=[
                    pl.BlockSpec((block_b, T, C), lambda b: (b, 0, 0)),
                    pl.BlockSpec((C, 3 * Hp), lambda b: (0, 0), **w_kwargs),
                ],
                out_specs=pl.BlockSpec((block_b, T, H), lambda b: (b, 0, 0)),
            ),
            compiler_params=pltpu.CompilerParams(
                dimension_semantics=("parallel",),
                vmem_limit_bytes=vmem_limit,
            ),
        )(x_bf16, w_qkv)

    try:
        # Constant index_map -> a second weight VMEM buffer is redundant.
        return call(1)
    except Exception:
        # Graceful fallback if single-buffered pipeline_mode is unsupported.
        return call(None)


def _reference(x, wk, wq, wv):
    """Pure-JAX f32 reference mirroring the PyTorch forward (eval-mode dropout)."""
    k = x @ wk
    q = x @ wq
    v = x @ wv
    H = k.shape[-1]
    w = (q @ jnp.swapaxes(k, -2, -1)) * (H ** -0.5)
    T = x.shape[1]
    tril = jnp.tril(jnp.ones((T, T), dtype=bool))
    w = jnp.where(tril, w, -jnp.inf)
    w = jax.nn.softmax(w, axis=-1)
    return w @ v


# --------------------------------------------------------------------------- #
# Demo / correctness check
# --------------------------------------------------------------------------- #
if __name__ == "__main__":
    # small, TPU-friendly shapes consistent with the module's forward
    batch = 4
    seq = 128        # seq_len
    emb = 128        # emb_dim
    head_size = 64

    key = jax.random.PRNGKey(0)
    kx, kk, kq, kv = jax.random.split(key, 4)

    x = jax.random.normal(kx, (batch, seq, emb), dtype=jnp.float32)
    # nn.Linear weights stored transposed as (emb_dim, head_size): y = x @ w
    wk = jax.random.normal(kk, (emb, head_size), dtype=jnp.float32) * 0.02
    wq = jax.random.normal(kq, (emb, head_size), dtype=jnp.float32) * 0.02
    wv = jax.random.normal(kv, (emb, head_size), dtype=jnp.float32) * 0.02

    # weight prep (pad + fuse + fold scale + bf16 cast) happens ONCE, not per call
    w_qkv, H = prepare_head_weights(wk, wq, wv)

    out = head_forward(x, w_qkv, H)
    out = jax.block_until_ready(out)

    ref = _reference(x, wk, wq, wv)
    assert out.shape == (batch, seq, head_size)
    # tolerance relaxed vs pure-f32: MXU operands are bf16 (f32 accumulation) and
    # the softmax denominator uses the approximate EUP reciprocal
    assert jnp.allclose(out, ref, atol=2e-2, rtol=2e-2), "mismatch vs reference"

    print("KERNEL_OK")
</pallas_src>

<mosaic_0001>
module attributes {stable_mosaic.version = 11 : i64} {
  func.func @_head_kernel(%arg0: i32, %arg1: memref<4x128x128xbf16, #tpu.memory_space<vmem>>, %arg2: memref<128x384xbf16, #tpu.memory_space<vmem>>, %arg3: memref<4x128x64xf32, #tpu.memory_space<vmem>>) attributes {dimension_semantics = [#tpu.dimension_semantics<parallel>], iteration_bounds = array<i64: 1>, scalar_prefetch = 0 : i64, scratch_operands = 0 : i64, tpu.core_type = #tpu.core_type<tc>, window_params = [{transform_indices = @transform_0, window_bounds = array<i64: 4, 128, 128>}, {pipeline_mode = #tpu.pipeline_mode<synchronous>, transform_indices = @transform_1, window_bounds = array<i64: 128, 384>}, {transform_indices = @transform_2, window_bounds = array<i64: 4, 128, 64>}]} {
    %c0 = arith.constant 0 : index
    %c0_0 = arith.constant 0 : index
    %c0_1 = arith.constant 0 : index
    %0 = vector.load %arg1[%c0, %c0_0, %c0_1] : memref<4x128x128xbf16, #tpu.memory_space<vmem>>, vector<4x128x128xbf16>
    %1 = vector.shape_cast %0 : vector<4x128x128xbf16> to vector<512x128xbf16>
    %c0_2 = arith.constant 0 : index
    %c0_3 = arith.constant 0 : index
    %2 = vector.load %arg2[%c0_2, %c0_3] : memref<128x384xbf16, #tpu.memory_space<vmem>>, vector<128x384xbf16>
    %cst = arith.constant dense<0.000000e+00> : vector<512x384xf32>
    %3 = tpu.matmul %1, %2, %cst {dimension_numbers = #tpu.dot_dimension_numbers<[1], [0], [0], [1], [0, 0, 1, 1], [], []>} : vector<512x128xbf16>, vector<128x384xbf16>, vector<512x384xf32> -> vector<512x384xf32>
    %4 = vector.shape_cast %3 : vector<512x384xf32> to vector<4x128x384xf32>
    %5 = vector.extract_strided_slice %4 {offsets = [0, 0, 0], sizes = [4, 128, 128], strides = [1, 1, 1]} : vector<4x128x384xf32> to vector<4x128x128xf32>
    %6 = arith.truncf %5 : vector<4x128x128xf32> to vector<4x128x128xbf16>
    %7 = vector.extract_strided_slice %4 {offsets = [0, 0, 128], sizes = [4, 128, 128], strides = [1, 1, 1]} : vector<4x128x384xf32> to vector<4x128x128xf32>
    %8 = arith.truncf %7 : vector<4x128x128xf32> to vector<4x128x128xbf16>
    %9 = vector.extract_strided_slice %4 {offsets = [0, 0, 256], sizes = [4, 128, 128], strides = [1, 1, 1]} : vector<4x128x384xf32> to vector<4x128x128xf32>
    %10 = arith.truncf %9 : vector<4x128x128xf32> to vector<4x128x128xbf16>
    "tpu.trace_start"() <{level = 10 : i32, message = "bqd,bkd->bqk"}> : () -> ()
    %cst_4 = arith.constant dense<0.000000e+00> : vector<4x128x128xf32>
    %11 = tpu.matmul %8, %6, %cst_4 {dimension_numbers = #tpu.dot_dimension_numbers<[2], [2], [1], [1], [0, 0, 0, 1, 1, 1], [0], [0]>} : vector<4x128x128xbf16>, vector<4x128x128xbf16>, vector<4x128x128xf32> -> vector<4x128x128xf32>
    "tpu.trace_stop"() : () -> ()
    %12 = tpu.iota {dimensions = array<i32: 0>} : vector<128x128xi32>
    %13 = tpu.iota {dimensions = array<i32: 1>} : vector<128x128xi32>
    %14 = arith.cmpi sle, %13, %12 : vector<128x128xi32>
    %15 = vector.shape_cast %14 : vector<128x128xi1> to vector<1x128x128xi1>
    %cst_5 = arith.constant 0xFF800000 : f32
    %16 = vector.shape_cast %15 : vector<1x128x128xi1> to vector<1x128x128xi1>
    %17 = vector.broadcast %16 : vector<1x128x128xi1> to vector<4x128x128xi1>
    %18 = vector.broadcast %cst_5 : f32 to vector<4x128x128xf32>
    %19 = arith.select %17, %11, %18 : vector<4x128x128xi1>, vector<4x128x128xf32>
    %cst_6 = arith.constant dense<0xFF800000> : vector<4x128xf32>
    %20 = vector.multi_reduction <maximumf>, %19, %cst_6 [2] : vector<4x128x128xf32> to vector<4x128xf32>
    %21 = vector.shape_cast %20 : vector<4x128xf32> to vector<4x128x1xf32>
    %22 = vector.broadcast %21 : vector<4x128x1xf32> to vector<4x128x128xf32>
    %23 = arith.subf %19, %22 : vector<4x128x128xf32>
    %24 = math.exp %23 : vector<4x128x128xf32>
    %cst_7 = arith.constant dense<0.000000e+00> : vector<4x128xf32>
    %25 = vector.multi_reduction <add>, %24, %cst_7 [2] : vector<4x128x128xf32> to vector<4x128xf32>
    %26 = vector.shape_cast %25 : vector<4x128xf32> to vector<4x128x1xf32>
    %27 = tpu.reciprocal %26 {approx = true} : vector<4x128x1xf32> -> vector<4x128x1xf32>
    %28 = vector.broadcast %27 : vector<4x128x1xf32> to vector<4x128x128xf32>
    %29 = arith.mulf %24, %28 : vector<4x128x128xf32>
    %30 = arith.truncf %29 : vector<4x128x128xf32> to vector<4x128x128xbf16>
    "tpu.trace_start"() <{level = 10 : i32, message = "bqk,bkd->bqd"}> : () -> ()
    %cst_8 = arith.constant dense<0.000000e+00> : vector<4x128x128xf32>
    %31 = tpu.matmul %30, %10, %cst_8 {dimension_numbers = #tpu.dot_dimension_numbers<[2], [1], [1], [2], [0, 0, 0, 1, 1, 2], [0], [0]>} : vector<4x128x128xbf16>, vector<4x128x128xbf16>, vector<4x128x128xf32> -> vector<4x128x128xf32>
    "tpu.trace_stop"() : () -> ()
    %32 = vector.extract_strided_slice %31 {offsets = [0, 0, 0], sizes = [4, 128, 64], strides = [1, 1, 1]} : vector<4x128x128xf32> to vector<4x128x64xf32>
    %c0_9 = arith.constant 0 : index
    %c0_10 = arith.constant 0 : index
    %c0_11 = arith.constant 0 : index
    %33 = vector.load %arg3[%c0_9, %c0_10, %c0_11] : memref<4x128x64xf32, #tpu.memory_space<vmem>>, vector<4x128x64xf32>
    tpu.vector_store %arg3[%c0_9, %c0_10, %c0_11], %32 {strides = array<i32>} : memref<4x128x64xf32, #tpu.memory_space<vmem>>, vector<4x128x64xf32>,
    return
  }
  func.func @transform_0(%arg0: i32) -> (i32, i32, i32) {
    %c0_i32 = arith.constant 0 : i32
    %c0_i32_0 = arith.constant 0 : i32
    %c0_i32_1 = arith.constant 0 : i32
    return %arg0, %c0_i32, %c0_i32_0 : i32, i32, i32
  }
  func.func @transform_1(%arg0: i32) -> (i32, i32) {
    %c0_i32 = arith.constant 0 : i32
    %c0_i32_0 = arith.constant 0 : i32
    %c0_i32_1 = arith.constant 0 : i32
    return %c0_i32, %c0_i32_0 : i32, i32
  }
  func.func @transform_2(%arg0: i32) -> (i32, i32, i32) {
    %c0_i32 = arith.constant 0 : i32
    %c0_i32_0 = arith.constant 0 : i32
    %c0_i32_1 = arith.constant 0 : i32
    return %arg0, %c0_i32, %c0_i32_0 : i32, i32, i32
  }
}

module attributes {stable_mosaic.version = 11 : i64} {
  func.func @_head_kernel(%arg0: i32, %arg1: memref<4x128x128xbf16, #tpu.memory_space<vmem>>, %arg2: memref<128x384xbf16, #tpu.memory_space<vmem>>, %arg3: memref<4x128x64xf32, #tpu.memory_space<vmem>>) attributes {dimension_semantics = [#tpu.dimension_semantics<parallel>], iteration_bounds = array<i64: 1>, scalar_prefetch = 0 : i64, scratch_operands = 0 : i64, tpu.core_type = #tpu.core_type<tc>, window_params = [{transform_indices = @transform_0, window_bounds = array<i64: 4, 128, 128>}, {pipeline_mode = #tpu.pipeline_mode<synchronous>, transform_indices = @transform_1, window_bounds = array<i64: 128, 384>}, {transform_indices = @transform_2, window_bounds = array<i64: 4, 128, 64>}]} {
    %c0 = arith.constant 0 : index
    %c0_0 = arith.constant 0 : index
    %c0_1 = arith.constant 0 : index
    %0 = vector.load %arg1[%c0, %c0_0, %c0_1] : memref<4x128x128xbf16, #tpu.memory_space<vmem>>, vector<4x128x128xbf16>
    %1 = vector.shape_cast %0 : vector<4x128x128xbf16> to vector<512x128xbf16>
    %c0_2 = arith.constant 0 : index
    %c0_3 = arith.constant 0 : index
    %2 = vector.load %arg2[%c0_2, %c0_3] : memref<128x384xbf16, #tpu.memory_space<vmem>>, vector<128x384xbf16>
    %cst = arith.constant dense<0.000000e+00> : vector<512x384xf32>
    %3 = tpu.matmul %1, %2, %cst {dimension_numbers = #tpu.dot_dimension_numbers<[1], [0], [0], [1], [0, 0, 1, 1], [], []>} : vector<512x128xbf16>, vector<128x384xbf16>, vector<512x384xf32> -> vector<512x384xf32>
    %4 = vector.shape_cast %3 : vector<512x384xf32> to vector<4x128x384xf32>
    %5 = vector.extract_strided_slice %4 {offsets = [0, 0, 0], sizes = [4, 128, 128], strides = [1, 1, 1]} : vector<4x128x384xf32> to vector<4x128x128xf32>
    %6 = arith.truncf %5 : vector<4x128x128xf32> to vector<4x128x128xbf16>
    %7 = vector.extract_strided_slice %4 {offsets = [0, 0, 128], sizes = [4, 128, 128], strides = [1, 1, 1]} : vector<4x128x384xf32> to vector<4x128x128xf32>
    %8 = arith.truncf %7 : vector<4x128x128xf32> to vector<4x128x128xbf16>
    %9 = vector.extract_strided_slice %4 {offsets = [0, 0, 256], sizes = [4, 128, 128], strides = [1, 1, 1]} : vector<4x128x384xf32> to vector<4x128x128xf32>
    %10 = arith.truncf %9 : vector<4x128x128xf32> to vector<4x128x128xbf16>
    "tpu.trace_start"() <{level = 10 : i32, message = "bqd,bkd->bqk"}> : () -> ()
    %cst_4 = arith.constant dense<0.000000e+00> : vector<4x128x128xf32>
    %11 = tpu.matmul %8, %6, %cst_4 {dimension_numbers = #tpu.dot_dimension_numbers<[2], [2], [1], [1], [0, 0, 0, 1, 1, 1], [0], [0]>} : vector<4x128x128xbf16>, vector<4x128x128xbf16>, vector<4x128x128xf32> -> vector<4x128x128xf32>
    "tpu.trace_stop"() : () -> ()
    %12 = tpu.iota {dimensions = array<i32: 0>} : vector<128x128xi32>
    %13 = tpu.iota {dimensions = array<i32: 1>} : vector<128x128xi32>
    %14 = arith.cmpi sle, %13, %12 : vector<128x128xi32>
    %15 = vector.shape_cast %14 : vector<128x128xi1> to vector<1x128x128xi1>
    %cst_5 = arith.constant 0xFF800000 : f32
    %16 = vector.shape_cast %15 : vector<1x128x128xi1> to vector<1x128x128xi1>
    %17 = vector.broadcast %16 : vector<1x128x128xi1> to vector<4x128x128xi1>
    %18 = vector.broadcast %cst_5 : f32 to vector<4x128x128xf32>
    %19 = arith.select %17, %11, %18 : vector<4x128x128xi1>, vector<4x128x128xf32>
    %cst_6 = arith.constant dense<0xFF800000> : vector<4x128xf32>
    %20 = vector.multi_reduction <maximumf>, %19, %cst_6 [2] : vector<4x128x128xf32> to vector<4x128xf32>
    %21 = vector.shape_cast %20 : vector<4x128xf32> to vector<4x128x1xf32>
    %22 = vector.broadcast %21 : vector<4x128x1xf32> to vector<4x128x128xf32>
    %23 = arith.subf %19, %22 : vector<4x128x128xf32>
    %24 = math.exp %23 : vector<4x128x128xf32>
    %cst_7 = arith.constant dense<0.000000e+00> : vector<4x128xf32>
    %25 = vector.multi_reduction <add>, %24, %cst_7 [2] : vector<4x128x128xf32> to vector<4x128xf32>
    %26 = vector.shape_cast %25 : vector<4x128xf32> to vector<4x128x1xf32>
    %27 = tpu.reciprocal %26 {approx = true} : vector<4x128x1xf32> -> vector<4x128x1xf32>
    %28 = vector.broadcast %27 : vector<4x128x1xf32> to vector<4x128x128xf32>
    %29 = arith.mulf %24, %28 : vector<4x128x128xf32>
    %30 = arith.truncf %29 : vector<4x128x128xf32> to vector<4x128x128xbf16>
    "tpu.trace_start"() <{level = 10 : i32, message = "bqk,bkd->bqd"}> : () -> ()
    %cst_8 = arith.constant dense<0.000000e+00> : vector<4x128x128xf32>
    %31 = tpu.matmul %30, %10, %cst_8 {dimension_numbers = #tpu.dot_dimension_numbers<[2], [1], [1], [2], [0, 0, 0, 1, 1, 2], [0], [0]>} : vector<4x128x128xbf16>, vector<4x128x128xbf16>, vector<4x128x128xf32> -> vector<4x128x128xf32>
    "tpu.trace_stop"() : () -> ()
    %32 = vector.extract_strided_slice %31 {offsets = [0, 0, 0], sizes = [4, 128, 64], strides = [1, 1, 1]} : vector<4x128x128xf32> to vector<4x128x64xf32>
    %c0_9 = arith.constant 0 : index
    %c0_10 = arith.constant 0 : index
    %c0_11 = arith.constant 0 : index
    %33 = vector.load %arg3[%c0_9, %c0_10, %c0_11] : memref<4x128x64xf32, #tpu.memory_space<vmem>>, vector<4x128x64xf32>
    tpu.vector_store %arg3[%c0_9, %c0_10, %c0_11], %32 {strides = array<i32>} : memref<4x128x64xf32, #tpu.memory_space<vmem>>, vector<4x128x64xf32>,
    return
  }
  func.func @transform_0(%arg0: i32) -> (i32, i32, i32) {
    %c0_i32 = arith.constant 0 : i32
    %c0_i32_0 = arith.constant 0 : i32
    %c0_i32_1 = arith.constant 0 : i32
    return %arg0, %c0_i32, %c0_i32_0 : i32, i32, i32
  }
  func.func @transform_1(%arg0: i32) -> (i32, i32) {
    %c0_i32 = arith.constant 0 : i32
    %c0_i32_0 = arith.constant 0 : i32
    %c0_i32_1 = arith.constant 0 : i32
    return %c0_i32, %c0_i32_0 : i32, i32
  }
  func.func @transform_2(%arg0: i32) -> (i32, i32, i32) {
    %c0_i32 = arith.constant 0 : i32
    %c0_i32_0 = arith.constant 0 : i32
    %c0_i32_1 = arith.constant 0 : i32
    return %arg0, %c0_i32, %c0_i32_0 : i32, i32, i32
  }
}

</mosaic_0001>

<llo_original>
// kernel: tpu_custom_call.1
$region0: #{tpu_custom_call.1}
  #allocation0 [shape = 'u32[]', space=smem, size = 0x4, offset = 0x4, fixed_abs, tag = 'smem constant byte address 0x4 - core index']
  #allocation1 [shape = 'u32[72,128]{1,0:T(1,128)}', space=vmem, size = 0x9000, scoped, tag = 'internal scratch']
  %s0 = inlined_call_operand.hbm [shape: bf16[4,128,128], index: 0, kind: input, shape index: {}]
  %s1 = inlined_call_operand.hbm [shape: bf16[128,384], index: 1, kind: input, shape index: {}]
  %s2 = inlined_call_operand.vmem [shape: f32[4,128,64], index: 2, kind: output, shape index: {}]
  %s3 = sld [smem:[#allocation0]]
  $region26: #{tpu_custom_call.1} parent=0
    _
  %s5 = ssub.s32 1, %s3
  %s6 = scalar_select 0, %s5, %s3
  $region1: #{tpu_custom_call.1} parent=0
    #allocation2 [shape = 'u8[131072]{0}', space=vmem, size = 0x20000, scoped, tag = 'input window, operand 0, single buffered']
    #allocation3 [shape = 's32[1]{0}', space=sflag, size = 0x4, scoped, tag = 'scoped memory for tpu_custom_call.1']
    #allocation4 [shape = 'u8[98304]{0}', space=vmem, size = 0x18000, scoped, tag = 'input window, operand 1, single buffered']
    #allocation5 [shape = 's32[1]{0}', space=sflag, size = 0x4, scoped, tag = 'scoped memory for tpu_custom_call.1']
    %7 = vsyncpa [#allocation3], 0
    %8 = vsyncpa [#allocation5], 0
    // Predicated region
    $region2: #{tpu_custom_call.1} parent=1 // pred_check
      _
    $region3: #{tpu_custom_call.1} parent=1 // pred_check_branch
      %10 = sbr.rel (0) target = $region5
    $region4: #{tpu_custom_call.1} parent=1 // pred_region
      %12 = vsyncadd [#allocation3], 0
      %s13 = sshll.u32 %s0, 4
      %s14 = int_to_ptr.hbm [resolvable:$true] %s13
      %s15 = sshll.u32 [#allocation2], 4
      %s16 = int_to_ptr.vmem [resolvable:$true] %s15
      %21 = dma.hbm_to_vmem [thread:$0]  %s14, 4096, %s16, [#allocation3], 64, 64, 4
    $region5: #{tpu_custom_call.1} parent=1 // pred_fallthru
      _
    // Predicated region
    $region6: #{tpu_custom_call.1} parent=1 // pred_check
      _
    $region7: #{tpu_custom_call.1} parent=1 // pred_check_branch
      %23 = sbr.rel (0) target = $region9
    $region8: #{tpu_custom_call.1} parent=1 // pred_region
      %25 = vsyncadd [#allocation5], 0
      %s26 = sshll.u32 %s1, 4
      %s27 = int_to_ptr.hbm [resolvable:$true] %s26
      %s28 = sshll.u32 [#allocation4], 4
      %s29 = int_to_ptr.vmem [resolvable:$true] %s28
      %34 = dma.hbm_to_vmem [thread:$0]  %s27, 3072, %s29, [#allocation5], 192, 192, 12
    $region9: #{tpu_custom_call.1} parent=1 // pred_fallthru
      _
    // Predicated region
    $region10: #{tpu_custom_call.1} parent=1 // pred_check
      _
    $region11: #{tpu_custom_call.1} parent=1 // pred_check_branch
      %36 = sbr.rel (0) target = $region13
    $region12: #{tpu_custom_call.1} parent=1 // pred_region
      %38 = dma.done [#allocation3], 4096
    $region13: #{tpu_custom_call.1} parent=1 // pred_fallthru
      _
    // Predicated region
    $region14: #{tpu_custom_call.1} parent=1 // pred_check
      _
    $region15: #{tpu_custom_call.1} parent=1 // pred_check_branch
      %40 = sbr.rel (0) target = $region17
    $region16: #{tpu_custom_call.1} parent=1 // pred_region
      %42 = dma.done [#allocation5], 3072
    $region17: #{tpu_custom_call.1} parent=1 // pred_fallthru
      _
    %v43 = vld [vmem:[#allocation2] sm:$0xf]
    %v44 = vld [vmem:[#allocation2 + $0x4] sm:$0xf]
    %v45 = vld [vmem:[#allocation2 + $0x8] sm:$0xf]
    %v46 = vld [vmem:[#allocation2 + $0xc] sm:$0xf]
    %v47 = vld [vmem:[#allocation2 + $0x10] sm:$0xf]
    %v48 = vld [vmem:[#allocation2 + $0x14] sm:$0xf]
    %v49 = vld [vmem:[#allocation2 + $0x18] sm:$0xf]
    %v50 = vld [vmem:[#allocation2 + $0x1c] sm:$0xf]
    %v51 = vld [vmem:[#allocation2 + $0x20] sm:$0xf]
    %v52 = vld [vmem:[#allocation2 + $0x24] sm:$0xf]
    %v53 = vld [vmem:[#allocation2 + $0x28] sm:$0xf]
    %v54 = vld [vmem:[#allocation2 + $0x2c] sm:$0xf]
    %v55 = vld [vmem:[#allocation2 + $0x30] sm:$0xf]
    %v56 = vld [vmem:[#allocation2 + $0x34] sm:$0xf]
    %v57 = vld [vmem:[#allocation2 + $0x38] sm:$0xf]
    %v58 = vld [vmem:[#allocation2 + $0x3c] sm:$0xf]
    %v59 = vld [vmem:[#allocation2 + $0x40] sm:$0xf]
    %v60 = vld [vmem:[#allocation2 + $0x44] sm:$0xf]
    %v61 = vld [vmem:[#allocation2 + $0x48] sm:$0xf]
    %v62 = vld [vmem:[#allocation2 + $0x4c] sm:$0xf]
    %v63 = vld [vmem:[#allocation2 + $0x50] sm:$0xf]
    %v64 = vld [vmem:[#allocation2 + $0x54] sm:$0xf]
    %v65 = vld [vmem:[#allocation2 + $0x58] sm:$0xf]
    %v66 = vld [vmem:[#allocation2 + $0x5c] sm:$0xf]
    %v67 = vld [vmem:[#allocation2 + $0x60] sm:$0xf]
    %v68 = vld [vmem:[#allocation2 + $0x64] sm:$0xf]
    %v69 = vld [vmem:[#allocation2 + $0x68] sm:$0xf]
    %v70 = vld [vmem:[#allocation2 + $0x6c] sm:$0xf]
    %v71 = vld [vmem:[#allocation2 + $0x70] sm:$0xf]
    %v72 = vld [vmem:[#allocation2 + $0x74] sm:$0xf]
    %v73 = vld [vmem:[#allocation2 + $0x78] sm:$0xf]
    %v74 = vld [vmem:[#allocation2 + $0x7c] sm:$0xf]
    %v75 = vld [vmem:[#allocation2 + $0x80] sm:$0xf]
    %v76 = vld [vmem:[#allocation2 + $0x84] sm:$0xf]
    %v77 = vld [vmem:[#allocation2 + $0x88] sm:$0xf]
    %v78 = vld [vmem:[#allocation2 + $0x8c] sm:$0xf]
    %v79 = vld [vmem:[#allocation2 + $0x90] sm:$0xf]
    %v80 = vld [vmem:[#allocation2 + $0x94] sm:$0xf]
    %v81 = vld [vmem:[#allocation2 + $0x98] sm:$0xf]
    %v82 = vld [vmem:[#allocation2 + $0x9c] sm:$0xf]
    %v83 = vld [vmem:[#allocation2 + $0xa0] sm:$0xf]
    %v84 = vld [vmem:[#allocation2 + $0xa4] sm:$0xf]
    %v85 = vld [vmem:[#allocation2 + $0xa8] sm:$0xf]
    %v86 = vld [vmem:[#allocation2 + $0xac] sm:$0xf]
    %v87 = vld [vmem:[#allocation2 + $0xb0] sm:$0xf]
    %v88 = vld [vmem:[#allocation2 + $0xb4] sm:$0xf]
    %v89 = vld [vmem:[#allocation2 + $0xb8] sm:$0xf]
    %v90 = vld [vmem:[#allocation2 + $0xbc] sm:$0xf]
    %v91 = vld [vmem:[#allocation2 + $0xc0] sm:$0xf]
    %v92 = vld [vmem:[#allocation2 + $0xc4] sm:$0xf]
    %v93 = vld [vmem:[#allocation2 + $0xc8] sm:$0xf]
    %v94 = vld [vmem:[#allocation2 + $0xcc] sm:$0xf]
    %v95 = vld [vmem:[#allocation2 + $0xd0] sm:$0xf]
    %v96 = vld [vmem:[#allocation2 + $0xd4] sm:$0xf]
    %v97 = vld [vmem:[#allocation2 + $0xd8] sm:$0xf]
    %v98 = vld [vmem:[#allocation2 + $0xdc] sm:$0xf]
    %v99 = vld [vmem:[#allocation2 + $0xe0] sm:$0xf]
    %v100 = vld [vmem:[#allocation2 + $0xe4] sm:$0xf]
    %v101 = vld [vmem:[#allocation2 + $0xe8] sm:$0xf]
    %v102 = vld [vmem:[#allocation2 + $0xec] sm:$0xf]
    %v103 = vld [vmem:[#allocation2 + $0xf0] sm:$0xf]
    %v104 = vld [vmem:[#allocation2 + $0xf4] sm:$0xf]
    %v105 = vld [vmem:[#allocation2 + $0xf8] sm:$0xf]
    %v106 = vld [vmem:[#allocation2 + $0xfc] sm:$0xf]
    %v107 = vld [vmem:[#allocation4] sm:$0xff]
    %v108 = vld [vmem:[#allocation4 + $0x8] sm:$0xf]
    %v109 = vld [vmem:[#allocation4 + $0xc] sm:$0xff]
    %v110 = vld [vmem:[#allocation4 + $0x14] sm:$0xf]
    %v111 = vld [vmem:[#allocation4 + $0x18] sm:$0xff]
    %v112 = vld [vmem:[#allocation4 + $0x20] sm:$0xf]
    %v113 = vld [vmem:[#allocation4 + $0x24] sm:$0xff]
    %v114 = vld [vmem:[#allocation4 + $0x2c] sm:$0xf]
    %v115 = vld [vmem:[#allocation4 + $0x30] sm:$0xff]
    %v116 = vld [vmem:[#allocation4 + $0x38] sm:$0xf]
    %v117 = vld [vmem:[#allocation4 + $0x3c] sm:$0xff]
    %v118 = vld [vmem:[#allocation4 + $0x44] sm:$0xf]
    %v119 = vld [vmem:[#allocation4 + $0x48] sm:$0xff]
    %v120 = vld [vmem:[#allocation4 + $0x50] sm:$0xf]
    %v121 = vld [vmem:[#allocation4 + $0x54] sm:$0xff]
    %v122 = vld [vmem:[#allocation4 + $0x5c] sm:$0xf]
    %v123 = vld [vmem:[#allocation4 + $0x60] sm:$0xff]
    %v124 = vld [vmem:[#allocation4 + $0x68] sm:$0xf]
    %v125 = vld [vmem:[#allocation4 + $0x6c] sm:$0xff]
    %v126 = vld [vmem:[#allocation4 + $0x74] sm:$0xf]
    %v127 = vld [vmem:[#allocation4 + $0x78] sm:$0xff]
    %v128 = vld [vmem:[#allocation4 + $0x80] sm:$0xf]
    %v129 = vld [vmem:[#allocation4 + $0x84] sm:$0xff]
    %v130 = vld [vmem:[#allocation4 + $0x8c] sm:$0xf]
    %v131 = vld [vmem:[#allocation4 + $0x90] sm:$0xff]
    %v132 = vld [vmem:[#allocation4 + $0x98] sm:$0xf]
    %v133 = vld [vmem:[#allocation4 + $0x9c] sm:$0xff]
    %v134 = vld [vmem:[#allocation4 + $0xa4] sm:$0xf]
    %v135 = vld [vmem:[#allocation4 + $0xa8] sm:$0xff]
    %v136 = vld [vmem:[#allocation4 + $0xb0] sm:$0xf]
    %v137 = vld [vmem:[#allocation4 + $0xb4] sm:$0xff]
    %v138 = vld [vmem:[#allocation4 + $0xbc] sm:$0xf]
    %v203 = vunpack.c.l.b16 %v43
    %v204 = vunpack.c.l.b16 %v44
    %v205 = vunpack.c.l.b16 %v45
    %v206 = vunpack.c.l.b16 %v46
    %v207 = vunpack.c.l.b16 %v47
    %v208 = vunpack.c.l.b16 %v48
    %v209 = vunpack.c.l.b16 %v49
    %v210 = vunpack.c.l.b16 %v50
    %v211 = vunpack.c.l.b16 %v51
    %v212 = vunpack.c.l.b16 %v52
    %v213 = vunpack.c.l.b16 %v53
    %v214 = vunpack.c.l.b16 %v54
    %v215 = vunpack.c.l.b16 %v55
    %v216 = vunpack.c.l.b16 %v56
    %v217 = vunpack.c.l.b16 %v57
    %v218 = vunpack.c.l.b16 %v58
    %v219 = vunpack.c.l.b16 %v59
    %v220 = vunpack.c.l.b16 %v60
    %v221 = vunpack.c.l.b16 %v61
    %v222 = vunpack.c.l.b16 %v62
    %v223 = vunpack.c.l.b16 %v63
    %v224 = vunpack.c.l.b16 %v64
    %v225 = vunpack.c.l.b16 %v65
    %v226 = vunpack.c.l.b16 %v66
    %v227 = vunpack.c.l.b16 %v67
    %v228 = vunpack.c.l.b16 %v68
    %v229 = vunpack.c.l.b16 %v69
    %v230 = vunpack.c.l.b16 %v70
    %v231 = vunpack.c.l.b16 %v71
    %v232 = vunpack.c.l.b16 %v72
    %v233 = vunpack.c.l.b16 %v73
    %v234 = vunpack.c.l.b16 %v74
    %v235 = vunpack.c.l.b16 %v75
    %v236 = vunpack.c.l.b16 %v76
    %v237 = vunpack.c.l.b16 %v77
    %v238 = vunpack.c.l.b16 %v78
    %v239 = vunpack.c.l.b16 %v79
    %v240 = vunpack.c.l.b16 %v80
    %v241 = vunpack.c.l.b16 %v81
    %v242 = vunpack.c.l.b16 %v82
    %v243 = vunpack.c.l.b16 %v83
    %v244 = vunpack.c.l.b16 %v84
    %v245 = vunpack.c.l.b16 %v85
    %v246 = vunpack.c.l.b16 %v86
    %v247 = vunpack.c.l.b16 %v87
    %v248 = vunpack.c.l.b16 %v88
    %v249 = vunpack.c.l.b16 %v89
    %v250 = vunpack.c.l.b16 %v90
    %v251 = vunpack.c.l.b16 %v91
    %v252 = vunpack.c.l.b16 %v92
    %v253 = vunpack.c.l.b16 %v93
    %v254 = vunpack.c.l.b16 %v94
    %v255 = vunpack.c.l.b16 %v95
    %v256 = vunpack.c.l.b16 %v96
    %v257 = vunpack.c.l.b16 %v97
    %v258 = vunpack.c.l.b16 %v98
    %v259 = vunpack.c.l.b16 %v99
    %v260 = vunpack.c.l.b16 %v100
    %v261 = vunpack.c.l.b16 %v101
    %v262 = vunpack.c.l.b16 %v102
    %v263 = vunpack.c.l.b16 %v103
    %v264 = vunpack.c.l.b16 %v104
    %v265 = vunpack.c.l.b16 %v105
    %v266 = vunpack.c.l.b16 %v106
    %v267 = vpack.c.b16 %v204, %v203
    %v268 = vpack.c.b16 %v206, %v205
    %v269 = vpack.c.b16 %v208, %v207
    %v270 = vpack.c.b16 %v210, %v209
    %v271 = vpack.c.b16 %v212, %v211
    %v272 = vpack.c.b16 %v214, %v213
    %v273 = vpack.c.b16 %v216, %v215
    %v274 = vpack.c.b16 %v218, %v217
    %v275 = vpack.c.b16 %v220, %v219
    %v276 = vpack.c.b16 %v222, %v221
    %v277 = vpack.c.b16 %v224, %v223
    %v278 = vpack.c.b16 %v226, %v225
    %v279 = vpack.c.b16 %v228, %v227
    %v280 = vpack.c.b16 %v230, %v229
    %v281 = vpack.c.b16 %v232, %v231
    %v282 = vpack.c.b16 %v234, %v233
    %v283 = vpack.c.b16 %v236, %v235
    %v284 = vpack.c.b16 %v238, %v237
    %v285 = vpack.c.b16 %v240, %v239
    %v286 = vpack.c.b16 %v242, %v241
    %v287 = vpack.c.b16 %v244, %v243
    %v288 = vpack.c.b16 %v246, %v245
    %v289 = vpack.c.b16 %v248, %v247
    %v290 = vpack.c.b16 %v250, %v249
    %v291 = vpack.c.b16 %v252, %v251
    %v292 = vpack.c.b16 %v254, %v253
    %v293 = vpack.c.b16 %v256, %v255
    %v294 = vpack.c.b16 %v258, %v257
    %v295 = vpack.c.b16 %v260, %v259
    %v296 = vpack.c.b16 %v262, %v261
    %v297 = vpack.c.b16 %v264, %v263
    %v298 = vpack.c.b16 %v266, %v265
    %v363 = vunpack.c.l.b16 %v107
    %v364 = vunpack.c.h.b16 %v107
    %v365 = vunpack.c.l.b16 %v108
    %v366 = vunpack.c.l.b16 %v109
    %v367 = vunpack.c.h.b16 %v109
    %v368 = vunpack.c.l.b16 %v110
    %v369 = vunpack.c.l.b16 %v111
    %v370 = vunpack.c.h.b16 %v111
    %v371 = vunpack.c.l.b16 %v112
    %v372 = vunpack.c.l.b16 %v113
    %v373 = vunpack.c.h.b16 %v113
    %v374 = vunpack.c.l.b16 %v114
    %v375 = vunpack.c.l.b16 %v115
    %v376 = vunpack.c.h.b16 %v115
    %v377 = vunpack.c.l.b16 %v116
    %v378 = vunpack.c.l.b16 %v117
    %v379 = vunpack.c.h.b16 %v117
    %v380 = vunpack.c.l.b16 %v118
    %v381 = vunpack.c.l.b16 %v119
    %v382 = vunpack.c.h.b16 %v119
    %v383 = vunpack.c.l.b16 %v120
    %v384 = vunpack.c.l.b16 %v121
    %v385 = vunpack.c.h.b16 %v121
    %v386 = vunpack.c.l.b16 %v122
    %v387 = vunpack.c.l.b16 %v123
    %v388 = vunpack.c.h.b16 %v123
    %v389 = vunpack.c.l.b16 %v124
    %v390 = vunpack.c.l.b16 %v125
    %v391 = vunpack.c.h.b16 %v125
    %v392 = vunpack.c.l.b16 %v126
    %v393 = vunpack.c.l.b16 %v127
    %v394 = vunpack.c.h.b16 %v127
    %v395 = vunpack.c.l.b16 %v128
    %v396 = vunpack.c.l.b16 %v129
    %v397 = vunpack.c.h.b16 %v129
    %v398 = vunpack.c.l.b16 %v130
    %v399 = vunpack.c.l.b16 %v131
    %v400 = vunpack.c.h.b16 %v131
    %v401 = vunpack.c.l.b16 %v132
    %v402 = vunpack.c.l.b16 %v133
    %v403 = vunpack.c.h.b16 %v133
    %v404 = vunpack.c.l.b16 %v134
    %v405 = vunpack.c.l.b16 %v135
    %v406 = vunpack.c.h.b16 %v135
    %v407 = vunpack.c.l.b16 %v136
    %v408 = vunpack.c.l.b16 %v137
    %v409 = vunpack.c.h.b16 %v137
    %v410 = vunpack.c.l.b16 %v138
    %v411 = vpack.c.b16 %v366, %v363
    %v412 = vpack.c.b16 %v367, %v364
    %v413 = vpack.c.b16 %v368, %v365
    %v414 = vpack.c.b16 %v372, %v369
    %v415 = vpack.c.b16 %v373, %v370
    %v416 = vpack.c.b16 %v374, %v371
    %v417 = vpack.c.b16 %v378, %v375
    %v418 = vpack.c.b16 %v379, %v376
    %v419 = vpack.c.b16 %v380, %v377
    %v420 = vpack.c.b16 %v384, %v381
    %v421 = vpack.c.b16 %v385, %v382
    %v422 = vpack.c.b16 %v386, %v383
    %v423 = vpack.c.b16 %v390, %v387
    %v424 = vpack.c.b16 %v391, %v388
    %v425 = vpack.c.b16 %v392, %v389
    %v426 = vpack.c.b16 %v396, %v393
    %v427 = vpack.c.b16 %v397, %v394
    %v428 = vpack.c.b16 %v398, %v395
    %v429 = vpack.c.b16 %v402, %v399
    %v430 = vpack.c.b16 %v403, %v400
    %v431 = vpack.c.b16 %v404, %v401
    %v432 = vpack.c.b16 %v408, %v405
    %v433 = vpack.c.b16 %v409, %v406
    %v434 = vpack.c.b16 %v410, %v407
    %459 = vmatpush.bf16.msra.mxu0 %v432
    %460 = vmatpush.bf16.msra.mxu0 %v429
    %461 = vmatpush.bf16.msra.mxu0 %v426
    %462 = vmatpush.bf16.msra.mxu0 %v423
    %463 = vmatpush.bf16.msra.mxu0 %v420
    %464 = vmatpush.bf16.msra.mxu0 %v417
    %465 = vmatpush.bf16.msra.mxu0 %v414
    %466 = vmatpush.bf16.msra.mxu0 %v411
    %467 = vmatmul.bf16.gmra.mxu0 %v267
    %v468 = vpop.f32.mrf.mxu0
    %v469 = vadd.f32 0.0, %v468
    %v470 = vpop.f32.mrf.mxu0
    %v471 = vadd.f32 0.0, %v470
    %472 = vmatmul.bf16.gmra.mxu0 %v268
    %v473 = vpop.f32.mrf.mxu0
    %v474 = vadd.f32 0.0, %v473
    %v475 = vpop.f32.mrf.mxu0
    %v476 = vadd.f32 0.0, %v475
    %477 = vmatmul.bf16.gmra.mxu0 %v269
    %v478 = vpop.f32.mrf.mxu0
    %v479 = vadd.f32 0.0, %v478
    %v480 = vpop.f32.mrf.mxu0
    %v481 = vadd.f32 0.0, %v480
    %482 = vmatmul.bf16.gmra.mxu0 %v270
    %v483 = vpop.f32.mrf.mxu0
    %v484 = vadd.f32 0.0, %v483
    %v485 = vpop.f32.mrf.mxu0
    %v486 = vadd.f32 0.0, %v485
    %487 = vmatmul.bf16.gmra.mxu0 %v271
    %v488 = vpop.f32.mrf.mxu0
    %v489 = vadd.f32 0.0, %v488
    %v490 = vpop.f32.mrf.mxu0
    %v491 = vadd.f32 0.0, %v490
    %492 = vmatmul.bf16.gmra.mxu0 %v272
    %v493 = vpop.f32.mrf.mxu0
    %v494 = vadd.f32 0.0, %v493
    %v495 = vpop.f32.mrf.mxu0
    %v496 = vadd.f32 0.0, %v495
    %497 = vmatmul.bf16.gmra.mxu0 %v273
    %v498 = vpop.f32.mrf.mxu0
    %v499 = vadd.f32 0.0, %v498
    %v500 = vpop.f32.mrf.mxu0
    %v501 = vadd.f32 0.0, %v500
    %502 = vmatmul.bf16.gmra.mxu0 %v274
    %v503 = vpop.f32.mrf.mxu0
    %v504 = vadd.f32 0.0, %v503
    %v505 = vpop.f32.mrf.mxu0
    %v506 = vadd.f32 0.0, %v505
    %507 = vmatmul.bf16.gmra.mxu0 %v275
    %v508 = vpop.f32.mrf.mxu0
    %v509 = vadd.f32 0.0, %v508
    %v510 = vpop.f32.mrf.mxu0
    %v511 = vadd.f32 0.0, %v510
    %512 = vmatmul.bf16.gmra.mxu0 %v276
    %v513 = vpop.f32.mrf.mxu0
    %v514 = vadd.f32 0.0, %v513
    %v515 = vpop.f32.mrf.mxu0
    %v516 = vadd.f32 0.0, %v515
    %517 = vmatmul.bf16.gmra.mxu0 %v277
    %v518 = vpop.f32.mrf.mxu0
    %v519 = vadd.f32 0.0, %v518
    %v520 = vpop.f32.mrf.mxu0
    %v521 = vadd.f32 0.0, %v520
    %522 = vmatmul.bf16.gmra.mxu0 %v278
    %v523 = vpop.f32.mrf.mxu0
    %v524 = vadd.f32 0.0, %v523
    %v525 = vpop.f32.mrf.mxu0
    %v526 = vadd.f32 0.0, %v525
    %527 = vmatmul.bf16.gmra.mxu0 %v279
    %v528 = vpop.f32.mrf.mxu0
    %v529 = vadd.f32 0.0, %v528
    %v530 = vpop.f32.mrf.mxu0
    %v531 = vadd.f32 0.0, %v530
    %532 = vmatmul.bf16.gmra.mxu0 %v280
    %v533 = vpop.f32.mrf.mxu0
    %v534 = vadd.f32 0.0, %v533
    %v535 = vpop.f32.mrf.mxu0
    %v536 = vadd.f32 0.0, %v535
    %537 = vmatmul.bf16.gmra.mxu0 %v281
    %v538 = vpop.f32.mrf.mxu0
    %v539 = vadd.f32 0.0, %v538
    %v540 = vpop.f32.mrf.mxu0
    %v541 = vadd.f32 0.0, %v540
    %542 = vmatmul.bf16.gmra.mxu0 %v282
    %v543 = vpop.f32.mrf.mxu0
    %v544 = vadd.f32 0.0, %v543
    %v545 = vpop.f32.mrf.mxu0
    %v546 = vadd.f32 0.0, %v545
    %547 = vmatmul.bf16.gmra.mxu0 %v283
    %v548 = vpop.f32.mrf.mxu0
    %v549 = vadd.f32 0.0, %v548
    %v550 = vpop.f32.mrf.mxu0
    %v551 = vadd.f32 0.0, %v550
    %552 = vmatmul.bf16.gmra.mxu0 %v284
    %v553 = vpop.f32.mrf.mxu0
    %v554 = vadd.f32 0.0, %v553
    %v555 = vpop.f32.mrf.mxu0
    %v556 = vadd.f32 0.0, %v555
    %557 = vmatmul.bf16.gmra.mxu0 %v285
    %v558 = vpop.f32.mrf.mxu0
    %v559 = vadd.f32 0.0, %v558
    %v560 = vpop.f32.mrf.mxu0
    %v561 = vadd.f32 0.0, %v560
    %562 = vmatmul.bf16.gmra.mxu0 %v286
    %v563 = vpop.f32.mrf.mxu0
    %v564 = vadd.f32 0.0, %v563
    %v565 = vpop.f32.mrf.mxu0
    %v566 = vadd.f32 0.0, %v565
    %567 = vmatmul.bf16.gmra.mxu0 %v287
    %v568 = vpop.f32.mrf.mxu0
    %v569 = vadd.f32 0.0, %v568
    %v570 = vpop.f32.mrf.mxu0
    %v571 = vadd.f32 0.0, %v570
    %572 = vmatmul.bf16.gmra.mxu0 %v288
    %v573 = vpop.f32.mrf.mxu0
    %v574 = vadd.f32 0.0, %v573
    %v575 = vpop.f32.mrf.mxu0
    %v576 = vadd.f32 0.0, %v575
    %577 = vmatmul.bf16.gmra.mxu0 %v289
    %v578 = vpop.f32.mrf.mxu0
    %v579 = vadd.f32 0.0, %v578
    %v580 = vpop.f32.mrf.mxu0
    %v581 = vadd.f32 0.0, %v580
    %582 = vmatmul.bf16.gmra.mxu0 %v290
    %v583 = vpop.f32.mrf.mxu0
    %v584 = vadd.f32 0.0, %v583
    %v585 = vpop.f32.mrf.mxu0
    %v586 = vadd.f32 0.0, %v585
    %587 = vmatmul.bf16.gmra.mxu0 %v291
    %v588 = vpop.f32.mrf.mxu0
    %v589 = vadd.f32 0.0, %v588
    %v590 = vpop.f32.mrf.mxu0
    %v591 = vadd.f32 0.0, %v590
    %592 = vmatmul.bf16.gmra.mxu0 %v292
    %v593 = vpop.f32.mrf.mxu0
    %v594 = vadd.f32 0.0, %v593
    %v595 = vpop.f32.mrf.mxu0
    %v596 = vadd.f32 0.0, %v595
    %597 = vmatmul.bf16.gmra.mxu0 %v293
    %v598 = vpop.f32.mrf.mxu0
    %v599 = vadd.f32 0.0, %v598
    %v600 = vpop.f32.mrf.mxu0
    %v601 = vadd.f32 0.0, %v600
    %602 = vmatmul.bf16.gmra.mxu0 %v294
    %v603 = vpop.f32.mrf.mxu0
    %v604 = vadd.f32 0.0, %v603
    %v605 = vpop.f32.mrf.mxu0
    %v606 = vadd.f32 0.0, %v605
    %607 = vmatmul.bf16.gmra.mxu0 %v295
    %v608 = vpop.f32.mrf.mxu0
    %v609 = vadd.f32 0.0, %v608
    %v610 = vpop.f32.mrf.mxu0
    %v611 = vadd.f32 0.0, %v610
    %612 = vmatmul.bf16.gmra.mxu0 %v296
    %v613 = vpop.f32.mrf.mxu0
    %v614 = vadd.f32 0.0, %v613
    %v615 = vpop.f32.mrf.mxu0
    %v616 = vadd.f32 0.0, %v615
    %617 = vmatmul.bf16.gmra.mxu0 %v297
    %v618 = vpop.f32.mrf.mxu0
    %v619 = vadd.f32 0.0, %v618
    %v620 = vpop.f32.mrf.mxu0
    %v621 = vadd.f32 0.0, %v620
    %622 = vmatmul.bf16.gmra.mxu0 %v298
    %v623 = vpop.f32.mrf.mxu0
    %v624 = vadd.f32 0.0, %v623
    %v625 = vpop.f32.mrf.mxu0
    %v626 = vadd.f32 0.0, %v625
    %627 = vdwg.mxu0
    %628 = vmatpush.bf16.msra.mxu0 %v433
    %629 = vmatpush.bf16.msra.mxu0 %v430
    %630 = vmatpush.bf16.msra.mxu0 %v427
    %631 = vmatpush.bf16.msra.mxu0 %v424
    %632 = vmatpush.bf16.msra.mxu0 %v421
    %633 = vmatpush.bf16.msra.mxu0 %v418
    %634 = vmatpush.bf16.msra.mxu0 %v415
    %635 = vmatpush.bf16.msra.mxu0 %v412
    %636 = vmatmul.bf16.gmra.mxu0 %v267
    %v637 = vpop.f32.mrf.mxu0
    %v638 = vadd.f32 0.0, %v637
    %v639 = vpop.f32.mrf.mxu0
    %v640 = vadd.f32 0.0, %v639
    %641 = vmatmul.bf16.gmra.mxu0 %v268
    %v642 = vpop.f32.mrf.mxu0
    %v643 = vadd.f32 0.0, %v642
    %v644 = vpop.f32.mrf.mxu0
    %v645 = vadd.f32 0.0, %v644
    %646 = vmatmul.bf16.gmra.mxu0 %v269
    %v647 = vpop.f32.mrf.mxu0
    %v648 = vadd.f32 0.0, %v647
    %v649 = vpop.f32.mrf.mxu0
    %v650 = vadd.f32 0.0, %v649
    %651 = vmatmul.bf16.gmra.mxu0 %v270
    %v652 = vpop.f32.mrf.mxu0
    %v653 = vadd.f32 0.0, %v652
    %v654 = vpop.f32.mrf.mxu0
    %v655 = vadd.f32 0.0, %v654
    %656 = vmatmul.bf16.gmra.mxu0 %v271
    %v657 = vpop.f32.mrf.mxu0
    %v658 = vadd.f32 0.0, %v657
    %v659 = vpop.f32.mrf.mxu0
    %v660 = vadd.f32 0.0, %v659
    %661 = vmatmul.bf16.gmra.mxu0 %v272
    %v662 = vpop.f32.mrf.mxu0
    %v663 = vadd.f32 0.0, %v662
    %v664 = vpop.f32.mrf.mxu0
    %v665 = vadd.f32 0.0, %v664
    %666 = vmatmul.bf16.gmra.mxu0 %v273
    %v667 = vpop.f32.mrf.mxu0
    %v668 = vadd.f32 0.0, %v667
    %v669 = vpop.f32.mrf.mxu0
    %v670 = vadd.f32 0.0, %v669
    %671 = vmatmul.bf16.gmra.mxu0 %v274
    %v672 = vpop.f32.mrf.mxu0
    %v673 = vadd.f32 0.0, %v672
    %v674 = vpop.f32.mrf.mxu0
    %v675 = vadd.f32 0.0, %v674
    %676 = vmatmul.bf16.gmra.mxu0 %v275
    %v677 = vpop.f32.mrf.mxu0
    %v678 = vadd.f32 0.0, %v677
    %v679 = vpop.f32.mrf.mxu0
    %v680 = vadd.f32 0.0, %v679
    %681 = vmatmul.bf16.gmra.mxu0 %v276
    %v682 = vpop.f32.mrf.mxu0
    %v683 = vadd.f32 0.0, %v682
    %v684 = vpop.f32.mrf.mxu0
    %v685 = vadd.f32 0.0, %v684
    %686 = vmatmul.bf16.gmra.mxu0 %v277
    %v687 = vpop.f32.mrf.mxu0
    %v688 = vadd.f32 0.0, %v687
    %v689 = vpop.f32.mrf.mxu0
    %v690 = vadd.f32 0.0, %v689
    %691 = vmatmul.bf16.gmra.mxu0 %v278
    %v692 = vpop.f32.mrf.mxu0
    %v693 = vadd.f32 0.0, %v692
    %v694 = vpop.f32.mrf.mxu0
    %v695 = vadd.f32 0.0, %v694
    %696 = vmatmul.bf16.gmra.mxu0 %v279
    %v697 = vpop.f32.mrf.mxu0
    %v698 = vadd.f32 0.0, %v697
    %v699 = vpop.f32.mrf.mxu0
    %v700 = vadd.f32 0.0, %v699
    %701 = vmatmul.bf16.gmra.mxu0 %v280
    %v702 = vpop.f32.mrf.mxu0
    %v703 = vadd.f32 0.0, %v702
    %v704 = vpop.f32.mrf.mxu0
    %v705 = vadd.f32 0.0, %v704
    %706 = vmatmul.bf16.gmra.mxu0 %v281
    %v707 = vpop.f32.mrf.mxu0
    %v708 = vadd.f32 0.0, %v707
    %v709 = vpop.f32.mrf.mxu0
    %v710 = vadd.f32 0.0, %v709
    %711 = vmatmul.bf16.gmra.mxu0 %v282
    %v712 = vpop.f32.mrf.mxu0
    %v713 = vadd.f32 0.0, %v712
    %v714 = vpop.f32.mrf.mxu0
    %v715 = vadd.f32 0.0, %v714
    %716 = vmatmul.bf16.gmra.mxu0 %v283
    %v717 = vpop.f32.mrf.mxu0
    %v718 = vadd.f32 0.0, %v717
    %v719 = vpop.f32.mrf.mxu0
    %v720 = vadd.f32 0.0, %v719
    %721 = vmatmul.bf16.gmra.mxu0 %v284
    %v722 = vpop.f32.mrf.mxu0
    %v723 = vadd.f32 0.0, %v722
    %v724 = vpop.f32.mrf.mxu0
    %v725 = vadd.f32 0.0, %v724
    %726 = vmatmul.bf16.gmra.mxu0 %v285
    %v727 = vpop.f32.mrf.mxu0
    %v728 = vadd.f32 0.0, %v727
    %v729 = vpop.f32.mrf.mxu0
    %v730 = vadd.f32 0.0, %v729
    %731 = vmatmul.bf16.gmra.mxu0 %v286
    %v732 = vpop.f32.mrf.mxu0
    %v733 = vadd.f32 0.0, %v732
    %v734 = vpop.f32.mrf.mxu0
    %v735 = vadd.f32 0.0, %v734
    %736 = vmatmul.bf16.gmra.mxu0 %v287
    %v737 = vpop.f32.mrf.mxu0
    %v738 = vadd.f32 0.0, %v737
    %v739 = vpop.f32.mrf.mxu0
    %v740 = vadd.f32 0.0, %v739
    %741 = vmatmul.bf16.gmra.mxu0 %v288
    %v742 = vpop.f32.mrf.mxu0
    %v743 = vadd.f32 0.0, %v742
    %v744 = vpop.f32.mrf.mxu0
    %v745 = vadd.f32 0.0, %v744
    %746 = vmatmul.bf16.gmra.mxu0 %v289
    %v747 = vpop.f32.mrf.mxu0
    %v748 = vadd.f32 0.0, %v747
    %v749 = vpop.f32.mrf.mxu0
    %v750 = vadd.f32 0.0, %v749
    %751 = vmatmul.bf16.gmra.mxu0 %v290
    %v752 = vpop.f32.mrf.mxu0
    %v753 = vadd.f32 0.0, %v752
    %v754 = vpop.f32.mrf.mxu0
    %v755 = vadd.f32 0.0, %v754
    %756 = vmatmul.bf16.gmra.mxu0 %v291
    %v757 = vpop.f32.mrf.mxu0
    %v758 = vadd.f32 0.0, %v757
    %v759 = vpop.f32.mrf.mxu0
    %v760 = vadd.f32 0.0, %v759
    %761 = vmatmul.bf16.gmra.mxu0 %v292
    %v762 = vpop.f32.mrf.mxu0
    %v763 = vadd.f32 0.0, %v762
    %v764 = vpop.f32.mrf.mxu0
    %v765 = vadd.f32 0.0, %v764
    %766 = vmatmul.bf16.gmra.mxu0 %v293
    %v767 = vpop.f32.mrf.mxu0
    %v768 = vadd.f32 0.0, %v767
    %v769 = vpop.f32.mrf.mxu0
    %v770 = vadd.f32 0.0, %v769
    %771 = vmatmul.bf16.gmra.mxu0 %v294
    %v772 = vpop.f32.mrf.mxu0
    %v773 = vadd.f32 0.0, %v772
    %v774 = vpop.f32.mrf.mxu0
    %v775 = vadd.f32 0.0, %v774
    %776 = vmatmul.bf16.gmra.mxu0 %v295
    %v777 = vpop.f32.mrf.mxu0
    %v778 = vadd.f32 0.0, %v777
    %v779 = vpop.f32.mrf.mxu0
    %v780 = vadd.f32 0.0, %v779
    %781 = vmatmul.bf16.gmra.mxu0 %v296
    %v782 = vpop.f32.mrf.mxu0
    %v783 = vadd.f32 0.0, %v782
    %v784 = vpop.f32.mrf.mxu0
    %v785 = vadd.f32 0.0, %v784
    %786 = vmatmul.bf16.gmra.mxu0 %v297
    %v787 = vpop.f32.mrf.mxu0
    %v788 = vadd.f32 0.0, %v787
    %v789 = vpop.f32.mrf.mxu0
    %v790 = vadd.f32 0.0, %v789
    %791 = vmatmul.bf16.gmra.mxu0 %v298
    %v792 = vpop.f32.mrf.mxu0
    %v793 = vadd.f32 0.0, %v792
    %v794 = vpop.f32.mrf.mxu0
    %v795 = vadd.f32 0.0, %v794
    %796 = vdwg.mxu0
    %797 = vmatpush.bf16.msra.mxu0 %v434
    %798 = vmatpush.bf16.msra.mxu0 %v431
    %799 = vmatpush.bf16.msra.mxu0 %v428
    %800 = vmatpush.bf16.msra.mxu0 %v425
    %801 = vmatpush.bf16.msra.mxu0 %v422
    %802 = vmatpush.bf16.msra.mxu0 %v419
    %803 = vmatpush.bf16.msra.mxu0 %v416
    %804 = vmatpush.bf16.msra.mxu0 %v413
    %805 = vmatmul.bf16.gmra.mxu0 %v267
    %v806 = vpop.f32.mrf.mxu0
    %v807 = vadd.f32 0.0, %v806
    %v808 = vpop.f32.mrf.mxu0
    %v809 = vadd.f32 0.0, %v808
    %810 = vmatmul.bf16.gmra.mxu0 %v268
    %v811 = vpop.f32.mrf.mxu0
    %v812 = vadd.f32 0.0, %v811
    %v813 = vpop.f32.mrf.mxu0
    %v814 = vadd.f32 0.0, %v813
    %815 = vmatmul.bf16.gmra.mxu0 %v269
    %v816 = vpop.f32.mrf.mxu0
    %v817 = vadd.f32 0.0, %v816
    %v818 = vpop.f32.mrf.mxu0
    %v819 = vadd.f32 0.0, %v818
    %820 = vmatmul.bf16.gmra.mxu0 %v270
    %v821 = vpop.f32.mrf.mxu0
    %v822 = vadd.f32 0.0, %v821
    %v823 = vpop.f32.mrf.mxu0
    %v824 = vadd.f32 0.0, %v823
    %825 = vmatmul.bf16.gmra.mxu0 %v271
    %v826 = vpop.f32.mrf.mxu0
    %v827 = vadd.f32 0.0, %v826
    %v828 = vpop.f32.mrf.mxu0
    %v829 = vadd.f32 0.0, %v828
    %830 = vmatmul.bf16.gmra.mxu0 %v272
    %v831 = vpop.f32.mrf.mxu0
    %v832 = vadd.f32 0.0, %v831
    %v833 = vpop.f32.mrf.mxu0
    %v834 = vadd.f32 0.0, %v833
    %835 = vmatmul.bf16.gmra.mxu0 %v273
    %v836 = vpop.f32.mrf.mxu0
    %v837 = vadd.f32 0.0, %v836
    %v838 = vpop.f32.mrf.mxu0
    %v839 = vadd.f32 0.0, %v838
    %840 = vmatmul.bf16.gmra.mxu0 %v274
    %v841 = vpop.f32.mrf.mxu0
    %v842 = vadd.f32 0.0, %v841
    %v843 = vpop.f32.mrf.mxu0
    %v844 = vadd.f32 0.0, %v843
    %845 = vmatmul.bf16.gmra.mxu0 %v275
    %v846 = vpop.f32.mrf.mxu0
    %v847 = vadd.f32 0.0, %v846
    %v848 = vpop.f32.mrf.mxu0
    %v849 = vadd.f32 0.0, %v848
    %850 = vmatmul.bf16.gmra.mxu0 %v276
    %v851 = vpop.f32.mrf.mxu0
    %v852 = vadd.f32 0.0, %v851
    %v853 = vpop.f32.mrf.mxu0
    %v854 = vadd.f32 0.0, %v853
    %855 = vmatmul.bf16.gmra.mxu0 %v277
    %v856 = vpop.f32.mrf.mxu0
    %v857 = vadd.f32 0.0, %v856
    %v858 = vpop.f32.mrf.mxu0
    %v859 = vadd.f32 0.0, %v858
    %860 = vmatmul.bf16.gmra.mxu0 %v278
    %v861 = vpop.f32.mrf.mxu0
    %v862 = vadd.f32 0.0, %v861
    %v863 = vpop.f32.mrf.mxu0
    %v864 = vadd.f32 0.0, %v863
    %865 = vmatmul.bf16.gmra.mxu0 %v279
    %v866 = vpop.f32.mrf.mxu0
    %v867 = vadd.f32 0.0, %v866
    %v868 = vpop.f32.mrf.mxu0
    %v869 = vadd.f32 0.0, %v868
    %870 = vmatmul.bf16.gmra.mxu0 %v280
    %v871 = vpop.f32.mrf.mxu0
    %v872 = vadd.f32 0.0, %v871
    %v873 = vpop.f32.mrf.mxu0
    %v874 = vadd.f32 0.0, %v873
    %875 = vmatmul.bf16.gmra.mxu0 %v281
    %v876 = vpop.f32.mrf.mxu0
    %v877 = vadd.f32 0.0, %v876
    %v878 = vpop.f32.mrf.mxu0
    %v879 = vadd.f32 0.0, %v878
    %880 = vmatmul.bf16.gmra.mxu0 %v282
    %v881 = vpop.f32.mrf.mxu0
    %v882 = vadd.f32 0.0, %v881
    %v883 = vpop.f32.mrf.mxu0
    %v884 = vadd.f32 0.0, %v883
    %885 = vmatmul.bf16.gmra.mxu0 %v283
    %v886 = vpop.f32.mrf.mxu0
    %v887 = vadd.f32 0.0, %v886
    %v888 = vpop.f32.mrf.mxu0
    %v889 = vadd.f32 0.0, %v888
    %890 = vmatmul.bf16.gmra.mxu0 %v284
    %v891 = vpop.f32.mrf.mxu0
    %v892 = vadd.f32 0.0, %v891
    %v893 = vpop.f32.mrf.mxu0
    %v894 = vadd.f32 0.0, %v893
    %895 = vmatmul.bf16.gmra.mxu0 %v285
    %v896 = vpop.f32.mrf.mxu0
    %v897 = vadd.f32 0.0, %v896
    %v898 = vpop.f32.mrf.mxu0
    %v899 = vadd.f32 0.0, %v898
    %900 = vmatmul.bf16.gmra.mxu0 %v286
    %v901 = vpop.f32.mrf.mxu0
    %v902 = vadd.f32 0.0, %v901
    %v903 = vpop.f32.mrf.mxu0
    %v904 = vadd.f32 0.0, %v903
    %905 = vmatmul.bf16.gmra.mxu0 %v287
    %v906 = vpop.f32.mrf.mxu0
    %v907 = vadd.f32 0.0, %v906
    %v908 = vpop.f32.mrf.mxu0
    %v909 = vadd.f32 0.0, %v908
    %910 = vmatmul.bf16.gmra.mxu0 %v288
    %v911 = vpop.f32.mrf.mxu0
    %v912 = vadd.f32 0.0, %v911
    %v913 = vpop.f32.mrf.mxu0
    %v914 = vadd.f32 0.0, %v913
    %915 = vmatmul.bf16.gmra.mxu0 %v289
    %v916 = vpop.f32.mrf.mxu0
    %v917 = vadd.f32 0.0, %v916
    %v918 = vpop.f32.mrf.mxu0
    %v919 = vadd.f32 0.0, %v918
    %920 = vmatmul.bf16.gmra.mxu0 %v290
    %v921 = vpop.f32.mrf.mxu0
    %v922 = vadd.f32 0.0, %v921
    %v923 = vpop.f32.mrf.mxu0
    %v924 = vadd.f32 0.0, %v923
    %925 = vmatmul.bf16.gmra.mxu0 %v291
    %v926 = vpop.f32.mrf.mxu0
    %v927 = vadd.f32 0.0, %v926
    %v928 = vpop.f32.mrf.mxu0
    %v929 = vadd.f32 0.0, %v928
    %930 = vmatmul.bf16.gmra.mxu0 %v292
    %v931 = vpop.f32.mrf.mxu0
    %v932 = vadd.f32 0.0, %v931
    %v933 = vpop.f32.mrf.mxu0
    %v934 = vadd.f32 0.0, %v933
    %935 = vmatmul.bf16.gmra.mxu0 %v293
    %v936 = vpop.f32.mrf.mxu0
    %v937 = vadd.f32 0.0, %v936
    %v938 = vpop.f32.mrf.mxu0
    %v939 = vadd.f32 0.0, %v938
    %940 = vmatmul.bf16.gmra.mxu0 %v294
    %v941 = vpop.f32.mrf.mxu0
    %v942 = vadd.f32 0.0, %v941
    %v943 = vpop.f32.mrf.mxu0
    %v944 = vadd.f32 0.0, %v943
    %945 = vmatmul.bf16.gmra.mxu0 %v295
    %v946 = vpop.f32.mrf.mxu0
    %v947 = vadd.f32 0.0, %v946
    %v948 = vpop.f32.mrf.mxu0
    %v949 = vadd.f32 0.0, %v948
    %950 = vmatmul.bf16.gmra.mxu0 %v296
    %v951 = vpop.f32.mrf.mxu0
    %v952 = vadd.f32 0.0, %v951
    %v953 = vpop.f32.mrf.mxu0
    %v954 = vadd.f32 0.0, %v953
    %955 = vmatmul.bf16.gmra.mxu0 %v297
    %v956 = vpop.f32.mrf.mxu0
    %v957 = vadd.f32 0.0, %v956
    %v958 = vpop.f32.mrf.mxu0
    %v959 = vadd.f32 0.0, %v958
    %960 = vmatmul.bf16.gmra.mxu0 %v298
    %v961 = vpop.f32.mrf.mxu0
    %v962 = vadd.f32 0.0, %v961
    %v963 = vpop.f32.mrf.mxu0
    %v964 = vadd.f32 0.0, %v963
    %965 = vdwg.mxu0
    %v966 = vpack.c.bf16 %v469, %v469
    %v967 = vpack.c.bf16 %v471, %v471
    %v968 = vpack.c.bf16 %v474, %v474
    %v969 = vpack.c.bf16 %v476, %v476
    %v970 = vpack.c.bf16 %v479, %v479
    %v971 = vpack.c.bf16 %v481, %v481
    %v972 = vpack.c.bf16 %v484, %v484
    %v973 = vpack.c.bf16 %v486, %v486
    %v974 = vpack.c.bf16 %v489, %v489
    %v975 = vpack.c.bf16 %v491, %v491
    %v976 = vpack.c.bf16 %v494, %v494
    %v977 = vpack.c.bf16 %v496, %v496
    %v978 = vpack.c.bf16 %v499, %v499
    %v979 = vpack.c.bf16 %v501, %v501
    %v980 = vpack.c.bf16 %v504, %v504
    %v981 = vpack.c.bf16 %v506, %v506
    %v982 = vpack.c.bf16 %v509, %v509
    %v983 = vpack.c.bf16 %v511, %v511
    %v984 = vpack.c.bf16 %v514, %v514
    %v985 = vpack.c.bf16 %v516, %v516
    %v986 = vpack.c.bf16 %v519, %v519
    %v987 = vpack.c.bf16 %v521, %v521
    %v988 = vpack.c.bf16 %v524, %v524
    %v989 = vpack.c.bf16 %v526, %v526
    %v990 = vpack.c.bf16 %v529, %v529
    %v991 = vpack.c.bf16 %v531, %v531
    %v992 = vpack.c.bf16 %v534, %v534
    %v993 = vpack.c.bf16 %v536, %v536
    %v994 = vpack.c.bf16 %v539, %v539
    %v995 = vpack.c.bf16 %v541, %v541
    %v996 = vpack.c.bf16 %v544, %v544
    %v997 = vpack.c.bf16 %v546, %v546
    %v998 = vpack.c.bf16 %v549, %v549
    %v999 = vpack.c.bf16 %v551, %v551
    %v1000 = vpack.c.bf16 %v554, %v554
    %v1001 = vpack.c.bf16 %v556, %v556
    %v1002 = vpack.c.bf16 %v559, %v559
    %v1003 = vpack.c.bf16 %v561, %v561
    %v1004 = vpack.c.bf16 %v564, %v564
    %v1005 = vpack.c.bf16 %v566, %v566
    %v1006 = vpack.c.bf16 %v569, %v569
    %v1007 = vpack.c.bf16 %v571, %v571
    %v1008 = vpack.c.bf16 %v574, %v574
    %v1009 = vpack.c.bf16 %v576, %v576
    %v1010 = vpack.c.bf16 %v579, %v579
    %v1011 = vpack.c.bf16 %v581, %v581
    %v1012 = vpack.c.bf16 %v584, %v584
    %v1013 = vpack.c.bf16 %v586, %v586
    %v1014 = vpack.c.bf16 %v589, %v589
    %v1015 = vpack.c.bf16 %v591, %v591
    %v1016 = vpack.c.bf16 %v594, %v594
    %v1017 = vpack.c.bf16 %v596, %v596
    %v1018 = vpack.c.bf16 %v599, %v599
    %v1019 = vpack.c.bf16 %v601, %v601
    %v1020 = vpack.c.bf16 %v604, %v604
    %v1021 = vpack.c.bf16 %v606, %v606
    %v1022 = vpack.c.bf16 %v609, %v609
    %v1023 = vpack.c.bf16 %v611, %v611
    %v1024 = vpack.c.bf16 %v614, %v614
    %v1025 = vpack.c.bf16 %v616, %v616
    %v1026 = vpack.c.bf16 %v619, %v619
    %v1027 = vpack.c.bf16 %v621, %v621
    %v1028 = vpack.c.bf16 %v624, %v624
    %v1029 = vpack.c.bf16 %v626, %v626
    %v1030 = vpack.c.bf16 %v638, %v638
    %v1031 = vpack.c.bf16 %v640, %v640
    %v1032 = vpack.c.bf16 %v643, %v643
    %v1033 = vpack.c.bf16 %v645, %v645
    %v1034 = vpack.c.bf16 %v648, %v648
    %v1035 = vpack.c.bf16 %v650, %v650
    %v1036 = vpack.c.bf16 %v653, %v653
    %v1037 = vpack.c.bf16 %v655, %v655
    %v1038 = vpack.c.bf16 %v658, %v658
    %v1039 = vpack.c.bf16 %v660, %v660
    %v1040 = vpack.c.bf16 %v663, %v663
    %v1041 = vpack.c.bf16 %v665, %v665
    %v1042 = vpack.c.bf16 %v668, %v668
    %v1043 = vpack.c.bf16 %v670, %v670
    %v1044 = vpack.c.bf16 %v673, %v673
    %v1045 = vpack.c.bf16 %v675, %v675
    %v1046 = vpack.c.bf16 %v678, %v678
    %v1047 = vpack.c.bf16 %v680, %v680
    %v1048 = vpack.c.bf16 %v683, %v683
    %v1049 = vpack.c.bf16 %v685, %v685
    %v1050 = vpack.c.bf16 %v688, %v688
    %v1051 = vpack.c.bf16 %v690, %v690
    %v1052 = vpack.c.bf16 %v693, %v693
    %v1053 = vpack.c.bf16 %v695, %v695
    %v1054 = vpack.c.bf16 %v698, %v698
    %v1055 = vpack.c.bf16 %v700, %v700
    %v1056 = vpack.c.bf16 %v703, %v703
    %v1057 = vpack.c.bf16 %v705, %v705
    %v1058 = vpack.c.bf16 %v708, %v708
    %v1059 = vpack.c.bf16 %v710, %v710
    %v1060 = vpack.c.bf16 %v713, %v713
    %v1061 = vpack.c.bf16 %v715, %v715
    %v1062 = vpack.c.bf16 %v718, %v718
    %v1063 = vpack.c.bf16 %v720, %v720
    %v1064 = vpack.c.bf16 %v723, %v723
    %v1065 = vpack.c.bf16 %v725, %v725
    %v1066 = vpack.c.bf16 %v728, %v728
    %v1067 = vpack.c.bf16 %v730, %v730
    %v1068 = vpack.c.bf16 %v733, %v733
    %v1069 = vpack.c.bf16 %v735, %v735
    %v1070 = vpack.c.bf16 %v738, %v738
    %v1071 = vpack.c.bf16 %v740, %v740
    %v1072 = vpack.c.bf16 %v743, %v743
    %v1073 = vpack.c.bf16 %v745, %v745
    %v1074 = vpack.c.bf16 %v748, %v748
    %v1075 = vpack.c.bf16 %v750, %v750
    %v1076 = vpack.c.bf16 %v753, %v753
    %v1077 = vpack.c.bf16 %v755, %v755
    %v1078 = vpack.c.bf16 %v758, %v758
    %v1079 = vpack.c.bf16 %v760, %v760
    %v1080 = vpack.c.bf16 %v763, %v763
    %v1081 = vpack.c.bf16 %v765, %v765
    %v1082 = vpack.c.bf16 %v768, %v768
    %v1083 = vpack.c.bf16 %v770, %v770
    %v1084 = vpack.c.bf16 %v773, %v773
    %v1085 = vpack.c.bf16 %v775, %v775
    %v1086 = vpack.c.bf16 %v778, %v778
    %v1087 = vpack.c.bf16 %v780, %v780
    %v1088 = vpack.c.bf16 %v783, %v783
    %v1089 = vpack.c.bf16 %v785, %v785
    %v1090 = vpack.c.bf16 %v788, %v788
    %v1091 = vpack.c.bf16 %v790, %v790
    %v1092 = vpack.c.bf16 %v793, %v793
    %v1093 = vpack.c.bf16 %v795, %v795
    %v1094 = vpack.c.bf16 %v807, %v807
    %v1095 = vpack.c.bf16 %v809, %v809
    %v1096 = vpack.c.bf16 %v812, %v812
    %v1097 = vpack.c.bf16 %v814, %v814
    %v1098 = vpack.c.bf16 %v817, %v817
    %v1099 = vpack.c.bf16 %v819, %v819
    %v1100 = vpack.c.bf16 %v822, %v822
    %v1101 = vpack.c.bf16 %v824, %v824
    %v1102 = vpack.c.bf16 %v827, %v827
    %v1103 = vpack.c.bf16 %v829, %v829
    %v1104 = vpack.c.bf16 %v832, %v832
    %v1105 = vpack.c.bf16 %v834, %v834
    %v1106 = vpack.c.bf16 %v837, %v837
    %v1107 = vpack.c.bf16 %v839, %v839
    %v1108 = vpack.c.bf16 %v842, %v842
    %v1109 = vpack.c.bf16 %v844, %v844
    %v1110 = vpack.c.bf16 %v847, %v847
    %v1111 = vpack.c.bf16 %v849, %v849
    %v1112 = vpack.c.bf16 %v852, %v852
    %v1113 = vpack.c.bf16 %v854, %v854
    %v1114 = vpack.c.bf16 %v857, %v857
    %v1115 = vpack.c.bf16 %v859, %v859
    %v1116 = vpack.c.bf16 %v862, %v862
    %v1117 = vpack.c.bf16 %v864, %v864
    %v1118 = vpack.c.bf16 %v867, %v867
    %v1119 = vpack.c.bf16 %v869, %v869
    %v1120 = vpack.c.bf16 %v872, %v872
    %v1121 = vpack.c.bf16 %v874, %v874
    %v1122 = vpack.c.bf16 %v877, %v877
    %v1123 = vpack.c.bf16 %v879, %v879
    %v1124 = vpack.c.bf16 %v882, %v882
    %v1125 = vpack.c.bf16 %v884, %v884
    %v1126 = vpack.c.bf16 %v887, %v887
    %v1127 = vpack.c.bf16 %v889, %v889
    %v1128 = vpack.c.bf16 %v892, %v892
    %v1129 = vpack.c.bf16 %v894, %v894
    %v1130 = vpack.c.bf16 %v897, %v897
    %v1131 = vpack.c.bf16 %v899, %v899
    %v1132 = vpack.c.bf16 %v902, %v902
    %v1133 = vpack.c.bf16 %v904, %v904
    %v1134 = vpack.c.bf16 %v907, %v907
    %v1135 = vpack.c.bf16 %v909, %v909
    %v1136 = vpack.c.bf16 %v912, %v912
    %v1137 = vpack.c.bf16 %v914, %v914
    %v1138 = vpack.c.bf16 %v917, %v917
    %v1139 = vpack.c.bf16 %v919, %v919
    %v1140 = vpack.c.bf16 %v922, %v922
    %v1141 = vpack.c.bf16 %v924, %v924
    %v1142 = vpack.c.bf16 %v927, %v927
    %v1143 = vpack.c.bf16 %v929, %v929
    %v1144 = vpack.c.bf16 %v932, %v932
    %v1145 = vpack.c.bf16 %v934, %v934
    %v1146 = vpack.c.bf16 %v937, %v937
    %v1147 = vpack.c.bf16 %v939, %v939
    %v1148 = vpack.c.bf16 %v942, %v942
    %v1149 = vpack.c.bf16 %v944, %v944
    %v1150 = vpack.c.bf16 %v947, %v947
    %v1151 = vpack.c.bf16 %v949, %v949
    %v1152 = vpack.c.bf16 %v952, %v952
    %v1153 = vpack.c.bf16 %v954, %v954
    %v1154 = vpack.c.bf16 %v957, %v957
    %v1155 = vpack.c.bf16 %v959, %v959
    %v1156 = vpack.c.bf16 %v962, %v962
    %v1157 = vpack.c.bf16 %v964, %v964
    %v1174 = vunpack.c.l.b16 %v1030
    %v1175 = vunpack.c.l.b16 %v1031
    %v1176 = vunpack.c.l.b16 %v1032
    %v1177 = vunpack.c.l.b16 %v1033
    %v1178 = vunpack.c.l.b16 %v1034
    %v1179 = vunpack.c.l.b16 %v1035
    %v1180 = vunpack.c.l.b16 %v1036
    %v1181 = vunpack.c.l.b16 %v1037
    %v1182 = vunpack.c.l.b16 %v1038
    %v1183 = vunpack.c.l.b16 %v1039
    %v1184 = vunpack.c.l.b16 %v1040
    %v1185 = vunpack.c.l.b16 %v1041
    %v1186 = vunpack.c.l.b16 %v1042
    %v1187 = vunpack.c.l.b16 %v1043
    %v1188 = vunpack.c.l.b16 %v1044
    %v1189 = vunpack.c.l.b16 %v1045
    %v1190 = vpack.c.b16 %v1175, %v1174
    %v1191 = vpack.c.b16 %v1177, %v1176
    %v1192 = vpack.c.b16 %v1179, %v1178
    %v1193 = vpack.c.b16 %v1181, %v1180
    %v1194 = vpack.c.b16 %v1183, %v1182
    %v1195 = vpack.c.b16 %v1185, %v1184
    %v1196 = vpack.c.b16 %v1187, %v1186
    %v1197 = vpack.c.b16 %v1189, %v1188
    %v1222 = vunpack.c.l.b16 %v966
    %v1223 = vunpack.c.l.b16 %v967
    %v1224 = vunpack.c.l.b16 %v968
    %v1225 = vunpack.c.l.b16 %v969
    %v1226 = vunpack.c.l.b16 %v970
    %v1227 = vunpack.c.l.b16 %v971
    %v1228 = vunpack.c.l.b16 %v972
    %v1229 = vunpack.c.l.b16 %v973
    %v1230 = vunpack.c.l.b16 %v974
    %v1231 = vunpack.c.l.b16 %v975
    %v1232 = vunpack.c.l.b16 %v976
    %v1233 = vunpack.c.l.b16 %v977
    %v1234 = vunpack.c.l.b16 %v978
    %v1235 = vunpack.c.l.b16 %v979
    %v1236 = vunpack.c.l.b16 %v980
    %v1237 = vunpack.c.l.b16 %v981
    %v1238 = vpack.c.b16 %v1223, %v1222
    %v1239 = vpack.c.b16 %v1225, %v1224
    %v1240 = vpack.c.b16 %v1227, %v1226
    %v1241 = vpack.c.b16 %v1229, %v1228
    %v1242 = vpack.c.b16 %v1231, %v1230
    %v1243 = vpack.c.b16 %v1233, %v1232
    %v1244 = vpack.c.b16 %v1235, %v1234
    %v1245 = vpack.c.b16 %v1237, %v1236
    %1254 = vmatpush.bf16.xpose.msra.mxu0 %v1245
    %1255 = vmatpush.bf16.xpose.msra.mxu0 %v1244
    %1256 = vmatpush.bf16.xpose.msra.mxu0 %v1243
    %1257 = vmatpush.bf16.xpose.msra.mxu0 %v1242
    %1258 = vmatpush.bf16.xpose.msra.mxu0 %v1241
    %1259 = vmatpush.bf16.xpose.msra.mxu0 %v1240
    %1260 = vmatpush.bf16.xpose.msra.mxu0 %v1239
    %1261 = vmatpush.bf16.xpose.msra.mxu0 %v1238
    %1262 = vmatmul.bf16.gmra.mxu0 %v1190
    %v1263 = vpop.f32.mrf.mxu0
    %v1264 = vadd.f32 0.0, %v1263
    %v1265 = vpop.f32.mrf.mxu0
    %v1266 = vadd.f32 0.0, %v1265
    %1267 = vmatmul.bf16.gmra.mxu0 %v1191
    %v1268 = vpop.f32.mrf.mxu0
    %v1269 = vadd.f32 0.0, %v1268
    %v1270 = vpop.f32.mrf.mxu0
    %v1271 = vadd.f32 0.0, %v1270
    %1272 = vmatmul.bf16.gmra.mxu0 %v1192
    %v1273 = vpop.f32.mrf.mxu0
    %v1274 = vadd.f32 0.0, %v1273
    %v1275 = vpop.f32.mrf.mxu0
    %v1276 = vadd.f32 0.0, %v1275
    %1277 = vmatmul.bf16.gmra.mxu0 %v1193
    %v1278 = vpop.f32.mrf.mxu0
    %v1279 = vadd.f32 0.0, %v1278
    %v1280 = vpop.f32.mrf.mxu0
    %v1281 = vadd.f32 0.0, %v1280
    %1282 = vmatmul.bf16.gmra.mxu0 %v1194
    %v1283 = vpop.f32.mrf.mxu0
    %v1284 = vadd.f32 0.0, %v1283
    %v1285 = vpop.f32.mrf.mxu0
    %v1286 = vadd.f32 0.0, %v1285
    %1287 = vmatmul.bf16.gmra.mxu0 %v1195
    %v1288 = vpop.f32.mrf.mxu0
    %v1289 = vadd.f32 0.0, %v1288
    %v1290 = vpop.f32.mrf.mxu0
    %v1291 = vadd.f32 0.0, %v1290
    %1292 = vmatmul.bf16.gmra.mxu0 %v1196
    %v1293 = vpop.f32.mrf.mxu0
    %v1294 = vadd.f32 0.0, %v1293
    %v1295 = vpop.f32.mrf.mxu0
    %v1296 = vadd.f32 0.0, %v1295
    %1297 = vmatmul.bf16.gmra.mxu0 %v1197
    %v1298 = vpop.f32.mrf.mxu0
    %v1299 = vadd.f32 0.0, %v1298
    %v1300 = vpop.f32.mrf.mxu0
    %v1301 = vadd.f32 0.0, %v1300
    %1302 = vdwg.mxu0
    %v1319 = vunpack.c.l.b16 %v1046
    %v1320 = vunpack.c.l.b16 %v1047
    %v1321 = vunpack.c.l.b16 %v1048
    %v1322 = vunpack.c.l.b16 %v1049
    %v1323 = vunpack.c.l.b16 %v1050
    %v1324 = vunpack.c.l.b16 %v1051
    %v1325 = vunpack.c.l.b16 %v1052
    %v1326 = vunpack.c.l.b16 %v1053
    %v1327 = vunpack.c.l.b16 %v1054
    %v1328 = vunpack.c.l.b16 %v1055
    %v1329 = vunpack.c.l.b16 %v1056
    %v1330 = vunpack.c.l.b16 %v1057
    %v1331 = vunpack.c.l.b16 %v1058
    %v1332 = vunpack.c.l.b16 %v1059
    %v1333 = vunpack.c.l.b16 %v1060
    %v1334 = vunpack.c.l.b16 %v1061
    %v1335 = vpack.c.b16 %v1320, %v1319
    %v1336 = vpack.c.b16 %v1322, %v1321
    %v1337 = vpack.c.b16 %v1324, %v1323
    %v1338 = vpack.c.b16 %v1326, %v1325
    %v1339 = vpack.c.b16 %v1328, %v1327
    %v1340 = vpack.c.b16 %v1330, %v1329
    %v1341 = vpack.c.b16 %v1332, %v1331
    %v1342 = vpack.c.b16 %v1334, %v1333
    %v1367 = vunpack.c.l.b16 %v982
    %v1368 = vunpack.c.l.b16 %v983
    %v1369 = vunpack.c.l.b16 %v984
    %v1370 = vunpack.c.l.b16 %v985
    %v1371 = vunpack.c.l.b16 %v986
    %v1372 = vunpack.c.l.b16 %v987
    %v1373 = vunpack.c.l.b16 %v988
    %v1374 = vunpack.c.l.b16 %v989
    %v1375 = vunpack.c.l.b16 %v990
    %v1376 = vunpack.c.l.b16 %v991
    %v1377 = vunpack.c.l.b16 %v992
    %v1378 = vunpack.c.l.b16 %v993
    %v1379 = vunpack.c.l.b16 %v994
    %v1380 = vunpack.c.l.b16 %v995
    %v1381 = vunpack.c.l.b16 %v996
    %v1382 = vunpack.c.l.b16 %v997
    %v1383 = vpack.c.b16 %v1368, %v1367
    %v1384 = vpack.c.b16 %v1370, %v1369
    %v1385 = vpack.c.b16 %v1372, %v1371
    %v1386 = vpack.c.b16 %v1374, %v1373
    %v1387 = vpack.c.b16 %v1376, %v1375
    %v1388 = vpack.c.b16 %v1378, %v1377
    %v1389 = vpack.c.b16 %v1380, %v1379
    %v1390 = vpack.c.b16 %v1382, %v1381
    %1399 = vmatpush.bf16.xpose.msra.mxu0 %v1390
    %1400 = vmatpush.bf16.xpose.msra.mxu0 %v1389
    %1401 = vmatpush.bf16.xpose.msra.mxu0 %v1388
    %1402 = vmatpush.bf16.xpose.msra.mxu0 %v1387
    %1403 = vmatpush.bf16.xpose.msra.mxu0 %v1386
    %1404 = vmatpush.bf16.xpose.msra.mxu0 %v1385
    %1405 = vmatpush.bf16.xpose.msra.mxu0 %v1384
    %1406 = vmatpush.bf16.xpose.msra.mxu0 %v1383
    %1407 = vmatmul.bf16.gmra.mxu0 %v1335
    %v1408 = vpop.f32.mrf.mxu0
    %v1409 = vadd.f32 0.0, %v1408
    %v1410 = vpop.f32.mrf.mxu0
    %v1411 = vadd.f32 0.0, %v1410
    %1412 = vmatmul.bf16.gmra.mxu0 %v1336
    %v1413 = vpop.f32.mrf.mxu0
    %v1414 = vadd.f32 0.0, %v1413
    %v1415 = vpop.f32.mrf.mxu0
    %v1416 = vadd.f32 0.0, %v1415
    %1417 = vmatmul.bf16.gmra.mxu0 %v1337
    %v1418 = vpop.f32.mrf.mxu0
    %v1419 = vadd.f32 0.0, %v1418
    %v1420 = vpop.f32.mrf.mxu0
    %v1421 = vadd.f32 0.0, %v1420
    %1422 = vmatmul.bf16.gmra.mxu0 %v1338
    %v1423 = vpop.f32.mrf.mxu0
    %v1424 = vadd.f32 0.0, %v1423
    %v1425 = vpop.f32.mrf.mxu0
    %v1426 = vadd.f32 0.0, %v1425
    %1427 = vmatmul.bf16.gmra.mxu0 %v1339
    %v1428 = vpop.f32.mrf.mxu0
    %v1429 = vadd.f32 0.0, %v1428
    %v1430 = vpop.f32.mrf.mxu0
    %v1431 = vadd.f32 0.0, %v1430
    %1432 = vmatmul.bf16.gmra.mxu0 %v1340
    %v1433 = vpop.f32.mrf.mxu0
    %v1434 = vadd.f32 0.0, %v1433
    %v1435 = vpop.f32.mrf.mxu0
    %v1436 = vadd.f32 0.0, %v1435
    %1437 = vmatmul.bf16.gmra.mxu0 %v1341
    %v1438 = vpop.f32.mrf.mxu0
    %v1439 = vadd.f32 0.0, %v1438
    %v1440 = vpop.f32.mrf.mxu0
    %v1441 = vadd.f32 0.0, %v1440
    %1442 = vmatmul.bf16.gmra.mxu0 %v1342
    %v1443 = vpop.f32.mrf.mxu0
    %v1444 = vadd.f32 0.0, %v1443
    %v1445 = vpop.f32.mrf.mxu0
    %v1446 = vadd.f32 0.0, %v1445
    %1447 = vdwg.mxu0
    %v1464 = vunpack.c.l.b16 %v1062
    %v1465 = vunpack.c.l.b16 %v1063
    %v1466 = vunpack.c.l.b16 %v1064
    %v1467 = vunpack.c.l.b16 %v1065
    %v1468 = vunpack.c.l.b16 %v1066
    %v1469 = vunpack.c.l.b16 %v1067
    %v1470 = vunpack.c.l.b16 %v1068
    %v1471 = vunpack.c.l.b16 %v1069
    %v1472 = vunpack.c.l.b16 %v1070
    %v1473 = vunpack.c.l.b16 %v1071
    %v1474 = vunpack.c.l.b16 %v1072
    %v1475 = vunpack.c.l.b16 %v1073
    %v1476 = vunpack.c.l.b16 %v1074
    %v1477 = vunpack.c.l.b16 %v1075
    %v1478 = vunpack.c.l.b16 %v1076
    %v1479 = vunpack.c.l.b16 %v1077
    %v1480 = vpack.c.b16 %v1465, %v1464
    %v1481 = vpack.c.b16 %v1467, %v1466
    %v1482 = vpack.c.b16 %v1469, %v1468
    %v1483 = vpack.c.b16 %v1471, %v1470
    %v1484 = vpack.c.b16 %v1473, %v1472
    %v1485 = vpack.c.b16 %v1475, %v1474
    %v1486 = vpack.c.b16 %v1477, %v1476
    %v1487 = vpack.c.b16 %v1479, %v1478
    %v1512 = vunpack.c.l.b16 %v998
    %v1513 = vunpack.c.l.b16 %v999
    %v1514 = vunpack.c.l.b16 %v1000
    %v1515 = vunpack.c.l.b16 %v1001
    %v1516 = vunpack.c.l.b16 %v1002
    %v1517 = vunpack.c.l.b16 %v1003
    %v1518 = vunpack.c.l.b16 %v1004
    %v1519 = vunpack.c.l.b16 %v1005
    %v1520 = vunpack.c.l.b16 %v1006
    %v1521 = vunpack.c.l.b16 %v1007
    %v1522 = vunpack.c.l.b16 %v1008
    %v1523 = vunpack.c.l.b16 %v1009
    %v1524 = vunpack.c.l.b16 %v1010
    %v1525 = vunpack.c.l.b16 %v1011
    %v1526 = vunpack.c.l.b16 %v1012
    %v1527 = vunpack.c.l.b16 %v1013
    %v1528 = vpack.c.b16 %v1513, %v1512
    %v1529 = vpack.c.b16 %v1515, %v1514
    %v1530 = vpack.c.b16 %v1517, %v1516
    %v1531 = vpack.c.b16 %v1519, %v1518
    %v1532 = vpack.c.b16 %v1521, %v1520
    %v1533 = vpack.c.b16 %v1523, %v1522
    %v1534 = vpack.c.b16 %v1525, %v1524
    %v1535 = vpack.c.b16 %v1527, %v1526
    %1544 = vmatpush.bf16.xpose.msra.mxu0 %v1535
    %1545 = vmatpush.bf16.xpose.msra.mxu0 %v1534
    %1546 = vmatpush.bf16.xpose.msra.mxu0 %v1533
    %1547 = vmatpush.bf16.xpose.msra.mxu0 %v1532
    %1548 = vmatpush.bf16.xpose.msra.mxu0 %v1531
    %1549 = vmatpush.bf16.xpose.msra.mxu0 %v1530
    %1550 = vmatpush.bf16.xpose.msra.mxu0 %v1529
    %1551 = vmatpush.bf16.xpose.msra.mxu0 %v1528
    %1552 = vmatmul.bf16.gmra.mxu0 %v1480
    %v1553 = vpop.f32.mrf.mxu0
    %v1554 = vadd.f32 0.0, %v1553
    %v1555 = vpop.f32.mrf.mxu0
    %v1556 = vadd.f32 0.0, %v1555
    %1557 = vmatmul.bf16.gmra.mxu0 %v1481
    %v1558 = vpop.f32.mrf.mxu0
    %v1559 = vadd.f32 0.0, %v1558
    %v1560 = vpop.f32.mrf.mxu0
    %v1561 = vadd.f32 0.0, %v1560
    %1562 = vmatmul.bf16.gmra.mxu0 %v1482
    %v1563 = vpop.f32.mrf.mxu0
    %v1564 = vadd.f32 0.0, %v1563
    %v1565 = vpop.f32.mrf.mxu0
    %v1566 = vadd.f32 0.0, %v1565
    %1567 = vmatmul.bf16.gmra.mxu0 %v1483
    %v1568 = vpop.f32.mrf.mxu0
    %v1569 = vadd.f32 0.0, %v1568
    %v1570 = vpop.f32.mrf.mxu0
    %v1571 = vadd.f32 0.0, %v1570
    %1572 = vmatmul.bf16.gmra.mxu0 %v1484
    %v1573 = vpop.f32.mrf.mxu0
    %v1574 = vadd.f32 0.0, %v1573
    %v1575 = vpop.f32.mrf.mxu0
    %v1576 = vadd.f32 0.0, %v1575
    %1577 = vmatmul.bf16.gmra.mxu0 %v1485
    %v1578 = vpop.f32.mrf.mxu0
    %v1579 = vadd.f32 0.0, %v1578
    %v1580 = vpop.f32.mrf.mxu0
    %v1581 = vadd.f32 0.0, %v1580
    %1582 = vmatmul.bf16.gmra.mxu0 %v1486
    %v1583 = vpop.f32.mrf.mxu0
    %v1584 = vadd.f32 0.0, %v1583
    %v1585 = vpop.f32.mrf.mxu0
    %v1586 = vadd.f32 0.0, %v1585
    %1587 = vmatmul.bf16.gmra.mxu0 %v1487
    %v1588 = vpop.f32.mrf.mxu0
    %v1589 = vadd.f32 0.0, %v1588
    %v1590 = vpop.f32.mrf.mxu0
    %v1591 = vadd.f32 0.0, %v1590
    %1592 = vdwg.mxu0
    %v1609 = vunpack.c.l.b16 %v1078
    %v1610 = vunpack.c.l.b16 %v1079
    %v1611 = vunpack.c.l.b16 %v1080
    %v1612 = vunpack.c.l.b16 %v1081
    %v1613 = vunpack.c.l.b16 %v1082
    %v1614 = vunpack.c.l.b16 %v1083
    %v1615 = vunpack.c.l.b16 %v1084
    %v1616 = vunpack.c.l.b16 %v1085
    %v1617 = vunpack.c.l.b16 %v1086
    %v1618 = vunpack.c.l.b16 %v1087
    %v1619 = vunpack.c.l.b16 %v1088
    %v1620 = vunpack.c.l.b16 %v1089
    %v1621 = vunpack.c.l.b16 %v1090
    %v1622 = vunpack.c.l.b16 %v1091
    %v1623 = vunpack.c.l.b16 %v1092
    %v1624 = vunpack.c.l.b16 %v1093
    %v1625 = vpack.c.b16 %v1610, %v1609
    %v1626 = vpack.c.b16 %v1612, %v1611
    %v1627 = vpack.c.b16 %v1614, %v1613
    %v1628 = vpack.c.b16 %v1616, %v1615
    %v1629 = vpack.c.b16 %v1618, %v1617
    %v1630 = vpack.c.b16 %v1620, %v1619
    %v1631 = vpack.c.b16 %v1622, %v1621
    %v1632 = vpack.c.b16 %v1624, %v1623
    %v1657 = vunpack.c.l.b16 %v1014
    %v1658 = vunpack.c.l.b16 %v1015
    %v1659 = vunpack.c.l.b16 %v1016
    %v1660 = vunpack.c.l.b16 %v1017
    %v1661 = vunpack.c.l.b16 %v1018
    %v1662 = vunpack.c.l.b16 %v1019
    %v1663 = vunpack.c.l.b16 %v1020
    %v1664 = vunpack.c.l.b16 %v1021
    %v1665 = vunpack.c.l.b16 %v1022
    %v1666 = vunpack.c.l.b16 %v1023
    %v1667 = vunpack.c.l.b16 %v1024
    %v1668 = vunpack.c.l.b16 %v1025
    %v1669 = vunpack.c.l.b16 %v1026
    %v1670 = vunpack.c.l.b16 %v1027
    %v1671 = vunpack.c.l.b16 %v1028
    %v1672 = vunpack.c.l.b16 %v1029
    %v1673 = vpack.c.b16 %v1658, %v1657
    %v1674 = vpack.c.b16 %v1660, %v1659
    %v1675 = vpack.c.b16 %v1662, %v1661
    %v1676 = vpack.c.b16 %v1664, %v1663
    %v1677 = vpack.c.b16 %v1666, %v1665
    %v1678 = vpack.c.b16 %v1668, %v1667
    %v1679 = vpack.c.b16 %v1670, %v1669
    %v1680 = vpack.c.b16 %v1672, %v1671
    %1689 = vmatpush.bf16.xpose.msra.mxu0 %v1680
    %1690 = vmatpush.bf16.xpose.msra.mxu0 %v1679
    %1691 = vmatpush.bf16.xpose.msra.mxu0 %v1678
    %1692 = vmatpush.bf16.xpose.msra.mxu0 %v1677
    %1693 = vmatpush.bf16.xpose.msra.mxu0 %v1676
    %1694 = vmatpush.bf16.xpose.msra.mxu0 %v1675
    %1695 = vmatpush.bf16.xpose.msra.mxu0 %v1674
    %1696 = vmatpush.bf16.xpose.msra.mxu0 %v1673
    %1697 = vmatmul.bf16.gmra.mxu0 %v1625
    %v1698 = vpop.f32.mrf.mxu0
    %v1699 = vadd.f32 0.0, %v1698
    %v1700 = vpop.f32.mrf.mxu0
    %v1701 = vadd.f32 0.0, %v1700
    %1702 = vmatmul.bf16.gmra.mxu0 %v1626
    %v1703 = vpop.f32.mrf.mxu0
    %v1704 = vadd.f32 0.0, %v1703
    %v1705 = vpop.f32.mrf.mxu0
    %v1706 = vadd.f32 0.0, %v1705
    %1707 = vmatmul.bf16.gmra.mxu0 %v1627
    %v1708 = vpop.f32.mrf.mxu0
    %v1709 = vadd.f32 0.0, %v1708
    %v1710 = vpop.f32.mrf.mxu0
    %v1711 = vadd.f32 0.0, %v1710
    %1712 = vmatmul.bf16.gmra.mxu0 %v1628
    %v1713 = vpop.f32.mrf.mxu0
    %v1714 = vadd.f32 0.0, %v1713
    %v1715 = vpop.f32.mrf.mxu0
    %v1716 = vadd.f32 0.0, %v1715
    %1717 = vmatmul.bf16.gmra.mxu0 %v1629
    %v1718 = vpop.f32.mrf.mxu0
    %v1719 = vadd.f32 0.0, %v1718
    %v1720 = vpop.f32.mrf.mxu0
    %v1721 = vadd.f32 0.0, %v1720
    %1722 = vmatmul.bf16.gmra.mxu0 %v1630
    %v1723 = vpop.f32.mrf.mxu0
    %v1724 = vadd.f32 0.0, %v1723
    %v1725 = vpop.f32.mrf.mxu0
    %v1726 = vadd.f32 0.0, %v1725
    %1727 = vmatmul.bf16.gmra.mxu0 %v1631
    %v1728 = vpop.f32.mrf.mxu0
    %v1729 = vadd.f32 0.0, %v1728
    %v1730 = vpop.f32.mrf.mxu0
    %v1731 = vadd.f32 0.0, %v1730
    %1732 = vmatmul.bf16.gmra.mxu0 %v1632
    %v1733 = vpop.f32.mrf.mxu0
    %v1734 = vadd.f32 0.0, %v1733
    %v1735 = vpop.f32.mrf.mxu0
    %v1736 = vadd.f32 0.0, %v1735
    %1737 = vdwg.mxu0
    %v1738 = vlaneseq
    %v1739 = vshrl.u32 %v1738, 7
    %v1740 = vadd.s32 %v1739, 8
    %v1741 = vadd.s32 %v1739, 16
    %v1742 = vadd.s32 %v1739, 24
    %v1743 = vadd.s32 %v1739, 32
    %v1744 = vadd.s32 %v1739, 40
    %v1745 = vadd.s32 %v1739, 48
    %v1746 = vadd.s32 %v1739, 56
    %v1747 = vadd.s32 %v1739, 64
    %v1748 = vadd.s32 %v1739, 72
    %v1749 = vadd.s32 %v1739, 80
    %v1750 = vadd.s32 %v1739, 88
    %v1751 = vadd.s32 %v1739, 96
    %v1752 = vadd.s32 %v1739, 104
    %v1753 = vadd.s32 %v1739, 112
    %v1754 = vadd.s32 %v1739, 120
    %v1755 = vlaneseq
    %v1756 = vand.u32 %v1755, 127
    %vm1757 = vcmp.le.s32.totalorder %v1756, %v1739
    %vm1758 = vcmp.le.s32.totalorder %v1756, %v1740
    %vm1759 = vcmp.le.s32.totalorder %v1756, %v1741
    %vm1760 = vcmp.le.s32.totalorder %v1756, %v1742
    %vm1761 = vcmp.le.s32.totalorder %v1756, %v1743
    %vm1762 = vcmp.le.s32.totalorder %v1756, %v1744
    %vm1763 = vcmp.le.s32.totalorder %v1756, %v1745
    %vm1764 = vcmp.le.s32.totalorder %v1756, %v1746
    %vm1765 = vcmp.le.s32.totalorder %v1756, %v1747
    %vm1766 = vcmp.le.s32.totalorder %v1756, %v1748
    %vm1767 = vcmp.le.s32.totalorder %v1756, %v1749
    %vm1768 = vcmp.le.s32.totalorder %v1756, %v1750
    %vm1769 = vcmp.le.s32.totalorder %v1756, %v1751
    %vm1770 = vcmp.le.s32.totalorder %v1756, %v1752
    %vm1771 = vcmp.le.s32.totalorder %v1756, %v1753
    %vm1772 = vcmp.le.s32.totalorder %v1756, %v1754
    %v1773 = vsel %vm1757, 1, 0
    %v1774 = vsel %vm1758, 1, 0
    %v1775 = vsel %vm1759, 1, 0
    %v1776 = vsel %vm1760, 1, 0
    %v1777 = vsel %vm1761, 1, 0
    %v1778 = vsel %vm1762, 1, 0
    %v1779 = vsel %vm1763, 1, 0
    %v1780 = vsel %vm1764, 1, 0
    %v1781 = vsel %vm1765, 1, 0
    %v1782 = vsel %vm1766, 1, 0
    %v1783 = vsel %vm1767, 1, 0
    %v1784 = vsel %vm1768, 1, 0
    %v1785 = vsel %vm1769, 1, 0
    %v1786 = vsel %vm1770, 1, 0
    %v1787 = vsel %vm1771, 1, 0
    %v1788 = vsel %vm1772, 1, 0
    %vm1789 = vcmp.eq.s32.totalorder %v1773, 1
    %vm1790 = vcmp.eq.s32.totalorder %v1774, 1
    %vm1791 = vcmp.eq.s32.totalorder %v1775, 1
    %vm1792 = vcmp.eq.s32.totalorder %v1776, 1
    %vm1793 = vcmp.eq.s32.totalorder %v1777, 1
    %vm1794 = vcmp.eq.s32.totalorder %v1778, 1
    %vm1795 = vcmp.eq.s32.totalorder %v1779, 1
    %vm1796 = vcmp.eq.s32.totalorder %v1780, 1
    %vm1797 = vcmp.eq.s32.totalorder %v1781, 1
    %vm1798 = vcmp.eq.s32.totalorder %v1782, 1
    %vm1799 = vcmp.eq.s32.totalorder %v1783, 1
    %vm1800 = vcmp.eq.s32.totalorder %v1784, 1
    %vm1801 = vcmp.eq.s32.totalorder %v1785, 1
    %vm1802 = vcmp.eq.s32.totalorder %v1786, 1
    %vm1803 = vcmp.eq.s32.totalorder %v1787, 1
    %vm1804 = vcmp.eq.s32.totalorder %v1788, 1
    %v1805 = vsel %vm1789, %v1264, -inf
    %v1806 = vsel %vm1790, %v1266, -inf
    %v1807 = vsel %vm1791, %v1269, -inf
    %v1808 = vsel %vm1792, %v1271, -inf
    %v1809 = vsel %vm1793, %v1274, -inf
    %v1810 = vsel %vm1794, %v1276, -inf
    %v1811 = vsel %vm1795, %v1279, -inf
    %v1812 = vsel %vm1796, %v1281, -inf
    %v1813 = vsel %vm1797, %v1284, -inf
    %v1814 = vsel %vm1798, %v1286, -inf
    %v1815 = vsel %vm1799, %v1289, -inf
    %v1816 = vsel %vm1800, %v1291, -inf
    %v1817 = vsel %vm1801, %v1294, -inf
    %v1818 = vsel %vm1802, %v1296, -inf
    %v1819 = vsel %vm1803, %v1299, -inf
    %v1820 = vsel %vm1804, %v1301, -inf
    %v1821 = vsel %vm1789, %v1409, -inf
    %v1822 = vsel %vm1790, %v1411, -inf
    %v1823 = vsel %vm1791, %v1414, -inf
    %v1824 = vsel %vm1792, %v1416, -inf
    %v1825 = vsel %vm1793, %v1419, -inf
    %v1826 = vsel %vm1794, %v1421, -inf
    %v1827 = vsel %vm1795, %v1424, -inf
    %v1828 = vsel %vm1796, %v1426, -inf
    %v1829 = vsel %vm1797, %v1429, -inf
    %v1830 = vsel %vm1798, %v1431, -inf
    %v1831 = vsel %vm1799, %v1434, -inf
    %v1832 = vsel %vm1800, %v1436, -inf
    %v1833 = vsel %vm1801, %v1439, -inf
    %v1834 = vsel %vm1802, %v1441, -inf
    %v1835 = vsel %vm1803, %v1444, -inf
    %v1836 = vsel %vm1804, %v1446, -inf
    %v1837 = vsel %vm1789, %v1554, -inf
    %v1838 = vsel %vm1790, %v1556, -inf
    %v1839 = vsel %vm1791, %v1559, -inf
    %v1840 = vsel %vm1792, %v1561, -inf
    %v1841 = vsel %vm1793, %v1564, -inf
    %v1842 = vsel %vm1794, %v1566, -inf
    %v1843 = vsel %vm1795, %v1569, -inf
    %v1844 = vsel %vm1796, %v1571, -inf
    %v1845 = vsel %vm1797, %v1574, -inf
    %v1846 = vsel %vm1798, %v1576, -inf
    %v1847 = vsel %vm1799, %v1579, -inf
    %v1848 = vsel %vm1800, %v1581, -inf
    %v1849 = vsel %vm1801, %v1584, -inf
    %v1850 = vsel %vm1802, %v1586, -inf
    %v1851 = vsel %vm1803, %v1589, -inf
    %v1852 = vsel %vm1804, %v1591, -inf
    %v1853 = vsel %vm1789, %v1699, -inf
    %v1854 = vsel %vm1790, %v1701, -inf
    %v1855 = vsel %vm1791, %v1704, -inf
    %v1856 = vsel %vm1792, %v1706, -inf
    %v1857 = vsel %vm1793, %v1709, -inf
    %v1858 = vsel %vm1794, %v1711, -inf
    %v1859 = vsel %vm1795, %v1714, -inf
    %v1860 = vsel %vm1796, %v1716, -inf
    %v1861 = vsel %vm1797, %v1719, -inf
    %v1862 = vsel %vm1798, %v1721, -inf
    %v1863 = vsel %vm1799, %v1724, -inf
    %v1864 = vsel %vm1800, %v1726, -inf
    %v1865 = vsel %vm1801, %v1729, -inf
    %v1866 = vsel %vm1802, %v1731, -inf
    %v1867 = vsel %vm1803, %v1734, -inf
    %v1868 = vsel %vm1804, %v1736, -inf
    %1869 = vmax.xlane.f32.xlu0 %v1805
    %v1870 = vpop.xlane.xlu0 %1869
    %1871 = vmax.xlane.f32.xlu0 %v1806
    %v1872 = vpop.xlane.xlu0 %1871
    %1873 = vmax.xlane.f32.xlu0 %v1807
    %v1874 = vpop.xlane.xlu0 %1873
    %1875 = vmax.xlane.f32.xlu0 %v1808
    %v1876 = vpop.xlane.xlu0 %1875
    %1877 = vmax.xlane.f32.xlu0 %v1809
    %v1878 = vpop.xlane.xlu0 %1877
    %1879 = vmax.xlane.f32.xlu0 %v1810
    %v1880 = vpop.xlane.xlu0 %1879
    %1881 = vmax.xlane.f32.xlu0 %v1811
    %v1882 = vpop.xlane.xlu0 %1881
    %1883 = vmax.xlane.f32.xlu0 %v1812
    %v1884 = vpop.xlane.xlu0 %1883
    %1885 = vmax.xlane.f32.xlu0 %v1813
    %v1886 = vpop.xlane.xlu0 %1885
    %1887 = vmax.xlane.f32.xlu0 %v1814
    %v1888 = vpop.xlane.xlu0 %1887
    %1889 = vmax.xlane.f32.xlu0 %v1815
    %v1890 = vpop.xlane.xlu0 %1889
    %1891 = vmax.xlane.f32.xlu0 %v1816
    %v1892 = vpop.xlane.xlu0 %1891
    %1893 = vmax.xlane.f32.xlu0 %v1817
    %v1894 = vpop.xlane.xlu0 %1893
    %1895 = vmax.xlane.f32.xlu0 %v1818
    %v1896 = vpop.xlane.xlu0 %1895
    %1897 = vmax.xlane.f32.xlu0 %v1819
    %v1898 = vpop.xlane.xlu0 %1897
    %1899 = vmax.xlane.f32.xlu0 %v1820
    %v1900 = vpop.xlane.xlu0 %1899
    %1901 = vmax.xlane.f32.xlu0 %v1821
    %v1902 = vpop.xlane.xlu0 %1901
    %1903 = vmax.xlane.f32.xlu0 %v1822
    %v1904 = vpop.xlane.xlu0 %1903
    %1905 = vmax.xlane.f32.xlu0 %v1823
    %v1906 = vpop.xlane.xlu0 %1905
    %1907 = vmax.xlane.f32.xlu0 %v1824
    %v1908 = vpop.xlane.xlu0 %1907
    %1909 = vmax.xlane.f32.xlu0 %v1825
    %v1910 = vpop.xlane.xlu0 %1909
    %1911 = vmax.xlane.f32.xlu0 %v1826
    %v1912 = vpop.xlane.xlu0 %1911
    %1913 = vmax.xlane.f32.xlu0 %v1827
    %v1914 = vpop.xlane.xlu0 %1913
    %1915 = vmax.xlane.f32.xlu0 %v1828
    %v1916 = vpop.xlane.xlu0 %1915
    %1917 = vmax.xlane.f32.xlu0 %v1829
    %v1918 = vpop.xlane.xlu0 %1917
    %1919 = vmax.xlane.f32.xlu0 %v1830
    %v1920 = vpop.xlane.xlu0 %1919
    %1921 = vmax.xlane.f32.xlu0 %v1831
    %v1922 = vpop.xlane.xlu0 %1921
    %1923 = vmax.xlane.f32.xlu0 %v1832
    %v1924 = vpop.xlane.xlu0 %1923
    %1925 = vmax.xlane.f32.xlu0 %v1833
    %v1926 = vpop.xlane.xlu0 %1925
    %1927 = vmax.xlane.f32.xlu0 %v1834
    %v1928 = vpop.xlane.xlu0 %1927
    %1929 = vmax.xlane.f32.xlu0 %v1835
    %v1930 = vpop.xlane.xlu0 %1929
    %1931 = vmax.xlane.f32.xlu0 %v1836
    %v1932 = vpop.xlane.xlu0 %1931
    %1933 = vmax.xlane.f32.xlu0 %v1837
    %v1934 = vpop.xlane.xlu0 %1933
    %1935 = vmax.xlane.f32.xlu0 %v1838
    %v1936 = vpop.xlane.xlu0 %1935
    %1937 = vmax.xlane.f32.xlu0 %v1839
    %v1938 = vpop.xlane.xlu0 %1937
    %1939 = vmax.xlane.f32.xlu0 %v1840
    %v1940 = vpop.xlane.xlu0 %1939
    %1941 = vmax.xlane.f32.xlu0 %v1841
    %v1942 = vpop.xlane.xlu0 %1941
    %1943 = vmax.xlane.f32.xlu0 %v1842
    %v1944 = vpop.xlane.xlu0 %1943
    %1945 = vmax.xlane.f32.xlu0 %v1843
    %v1946 = vpop.xlane.xlu0 %1945
    %1947 = vmax.xlane.f32.xlu0 %v1844
    %v1948 = vpop.xlane.xlu0 %1947
    %1949 = vmax.xlane.f32.xlu0 %v1845
    %v1950 = vpop.xlane.xlu0 %1949
    %1951 = vmax.xlane.f32.xlu0 %v1846
    %v1952 = vpop.xlane.xlu0 %1951
    %1953 = vmax.xlane.f32.xlu0 %v1847
    %v1954 = vpop.xlane.xlu0 %1953
    %1955 = vmax.xlane.f32.xlu0 %v1848
    %v1956 = vpop.xlane.xlu0 %1955
    %1957 = vmax.xlane.f32.xlu0 %v1849
    %v1958 = vpop.xlane.xlu0 %1957
    %1959 = vmax.xlane.f32.xlu0 %v1850
    %v1960 = vpop.xlane.xlu0 %1959
    %1961 = vmax.xlane.f32.xlu0 %v1851
    %v1962 = vpop.xlane.xlu0 %1961
    %1963 = vmax.xlane.f32.xlu0 %v1852
    %v1964 = vpop.xlane.xlu0 %1963
    %1965 = vmax.xlane.f32.xlu0 %v1853
    %v1966 = vpop.xlane.xlu0 %1965
    %1967 = vmax.xlane.f32.xlu0 %v1854
    %v1968 = vpop.xlane.xlu0 %1967
    %1969 = vmax.xlane.f32.xlu0 %v1855
    %v1970 = vpop.xlane.xlu0 %1969
    %1971 = vmax.xlane.f32.xlu0 %v1856
    %v1972 = vpop.xlane.xlu0 %1971
    %1973 = vmax.xlane.f32.xlu0 %v1857
    %v1974 = vpop.xlane.xlu0 %1973
    %1975 = vmax.xlane.f32.xlu0 %v1858
    %v1976 = vpop.xlane.xlu0 %1975
    %1977 = vmax.xlane.f32.xlu0 %v1859
    %v1978 = vpop.xlane.xlu0 %1977
    %1979 = vmax.xlane.f32.xlu0 %v1860
    %v1980 = vpop.xlane.xlu0 %1979
    %1981 = vmax.xlane.f32.xlu0 %v1861
    %v1982 = vpop.xlane.xlu0 %1981
    %1983 = vmax.xlane.f32.xlu0 %v1862
    %v1984 = vpop.xlane.xlu0 %1983
    %1985 = vmax.xlane.f32.xlu0 %v1863
    %v1986 = vpop.xlane.xlu0 %1985
    %1987 = vmax.xlane.f32.xlu0 %v1864
    %v1988 = vpop.xlane.xlu0 %1987
    %1989 = vmax.xlane.f32.xlu0 %v1865
    %v1990 = vpop.xlane.xlu0 %1989
    %1991 = vmax.xlane.f32.xlu0 %v1866
    %v1992 = vpop.xlane.xlu0 %1991
    %1993 = vmax.xlane.f32.xlu0 %v1867
    %v1994 = vpop.xlane.xlu0 %1993
    %1995 = vmax.xlane.f32.xlu0 %v1868
    %v1996 = vpop.xlane.xlu0 %1995
    %v1997 = vsub.f32 %v1805, %v1870
    %v1998 = vsub.f32 %v1806, %v1872
    %v1999 = vsub.f32 %v1807, %v1874
    %v2000 = vsub.f32 %v1808, %v1876
    %v2001 = vsub.f32 %v1809, %v1878
    %v2002 = vsub.f32 %v1810, %v1880
    %v2003 = vsub.f32 %v1811, %v1882
    %v2004 = vsub.f32 %v1812, %v1884
    %v2005 = vsub.f32 %v1813, %v1886
    %v2006 = vsub.f32 %v1814, %v1888
    %v2007 = vsub.f32 %v1815, %v1890
    %v2008 = vsub.f32 %v1816, %v1892
    %v2009 = vsub.f32 %v1817, %v1894
    %v2010 = vsub.f32 %v1818, %v1896
    %v2011 = vsub.f32 %v1819, %v1898
    %v2012 = vsub.f32 %v1820, %v1900
    %v2013 = vsub.f32 %v1821, %v1902
    %v2014 = vsub.f32 %v1822, %v1904
    %v2015 = vsub.f32 %v1823, %v1906
    %v2016 = vsub.f32 %v1824, %v1908
    %v2017 = vsub.f32 %v1825, %v1910
    %v2018 = vsub.f32 %v1826, %v1912
    %v2019 = vsub.f32 %v1827, %v1914
    %v2020 = vsub.f32 %v1828, %v1916
    %v2021 = vsub.f32 %v1829, %v1918
    %v2022 = vsub.f32 %v1830, %v1920
    %v2023 = vsub.f32 %v1831, %v1922
    %v2024 = vsub.f32 %v1832, %v1924
    %v2025 = vsub.f32 %v1833, %v1926
    %v2026 = vsub.f32 %v1834, %v1928
    %v2027 = vsub.f32 %v1835, %v1930
    %v2028 = vsub.f32 %v1836, %v1932
    %v2029 = vsub.f32 %v1837, %v1934
    %v2030 = vsub.f32 %v1838, %v1936
    %v2031 = vsub.f32 %v1839, %v1938
    %v2032 = vsub.f32 %v1840, %v1940
    %v2033 = vsub.f32 %v1841, %v1942
    %v2034 = vsub.f32 %v1842, %v1944
    %v2035 = vsub.f32 %v1843, %v1946
    %v2036 = vsub.f32 %v1844, %v1948
    %v2037 = vsub.f32 %v1845, %v1950
    %v2038 = vsub.f32 %v1846, %v1952
    %v2039 = vsub.f32 %v1847, %v1954
    %v2040 = vsub.f32 %v1848, %v1956
    %v2041 = vsub.f32 %v1849, %v1958
    %v2042 = vsub.f32 %v1850, %v1960
    %v2043 = vsub.f32 %v1851, %v1962
    %v2044 = vsub.f32 %v1852, %v1964
    %v2045 = vsub.f32 %v1853, %v1966
    %v2046 = vsub.f32 %v1854, %v1968
    %v2047 = vsub.f32 %v1855, %v1970
    %v2048 = vsub.f32 %v1856, %v1972
    %v2049 = vsub.f32 %v1857, %v1974
    %v2050 = vsub.f32 %v1858, %v1976
    %v2051 = vsub.f32 %v1859, %v1978
    %v2052 = vsub.f32 %v1860, %v1980
    %v2053 = vsub.f32 %v1861, %v1982
    %v2054 = vsub.f32 %v1862, %v1984
    %v2055 = vsub.f32 %v1863, %v1986
    %v2056 = vsub.f32 %v1864, %v1988
    %v2057 = vsub.f32 %v1865, %v1990
    %v2058 = vsub.f32 %v1866, %v1992
    %v2059 = vsub.f32 %v1867, %v1994
    %v2060 = vsub.f32 %v1868, %v1996
    %v2061 = vmul.f32 %v1997, 1.442695
    %v2062 = vpow.pop %v2061
    %v2063 = vmul.f32 %v1998, 1.442695
    %v2064 = vpow.pop %v2063
    %v2065 = vmul.f32 %v1999, 1.442695
    %v2066 = vpow.pop %v2065
    %v2067 = vmul.f32 %v2000, 1.442695
    %v2068 = vpow.pop %v2067
    %v2069 = vmul.f32 %v2001, 1.442695
    %v2070 = vpow.pop %v2069
    %v2071 = vmul.f32 %v2002, 1.442695
    %v2072 = vpow.pop %v2071
    %v2073 = vmul.f32 %v2003, 1.442695
    %v2074 = vpow.pop %v2073
    %v2075 = vmul.f32 %v2004, 1.442695
    %v2076 = vpow.pop %v2075
    %v2077 = vmul.f32 %v2005, 1.442695
    %v2078 = vpow.pop %v2077
    %v2079 = vmul.f32 %v2006, 1.442695
    %v2080 = vpow.pop %v2079
    %v2081 = vmul.f32 %v2007, 1.442695
    %v2082 = vpow.pop %v2081
    %v2083 = vmul.f32 %v2008, 1.442695
    %v2084 = vpow.pop %v2083
    %v2085 = vmul.f32 %v2009, 1.442695
    %v2086 = vpow.pop %v2085
    %v2087 = vmul.f32 %v2010, 1.442695
    %v2088 = vpow.pop %v2087
    %v2089 = vmul.f32 %v2011, 1.442695
    %v2090 = vpow.pop %v2089
    %v2091 = vmul.f32 %v2012, 1.442695
    %v2092 = vpow.pop %v2091
    %v2093 = vmul.f32 %v2013, 1.442695
    %v2094 = vpow.pop %v2093
    %v2095 = vmul.f32 %v2014, 1.442695
    %v2096 = vpow.pop %v2095
    %v2097 = vmul.f32 %v2015, 1.442695
    %v2098 = vpow.pop %v2097
    %v2099 = vmul.f32 %v2016, 1.442695
    %v2100 = vpow.pop %v2099
    %v2101 = vmul.f32 %v2017, 1.442695
    %v2102 = vpow.pop %v2101
    %v2103 = vmul.f32 %v2018, 1.442695
    %v2104 = vpow.pop %v2103
    %v2105 = vmul.f32 %v2019, 1.442695
    %v2106 = vpow.pop %v2105
    %v2107 = vmul.f32 %v2020, 1.442695
    %v2108 = vpow.pop %v2107
    %v2109 = vmul.f32 %v2021, 1.442695
    %v2110 = vpow.pop %v2109
    %v2111 = vmul.f32 %v2022, 1.442695
    %v2112 = vpow.pop %v2111
    %v2113 = vmul.f32 %v2023, 1.442695
    %v2114 = vpow.pop %v2113
    %v2115 = vmul.f32 %v2024, 1.442695
    %v2116 = vpow.pop %v2115
    %v2117 = vmul.f32 %v2025, 1.442695
    %v2118 = vpow.pop %v2117
    %v2119 = vmul.f32 %v2026, 1.442695
    %v2120 = vpow.pop %v2119
    %v2121 = vmul.f32 %v2027, 1.442695
    %v2122 = vpow.pop %v2121
    %v2123 = vmul.f32 %v2028, 1.442695
    %v2124 = vpow.pop %v2123
    %v2125 = vmul.f32 %v2029, 1.442695
    %v2126 = vpow.pop %v2125
    %v2127 = vmul.f32 %v2030, 1.442695
    %v2128 = vpow.pop %v2127
    %v2129 = vmul.f32 %v2031, 1.442695
    %v2130 = vpow.pop %v2129
    %v2131 = vmul.f32 %v2032, 1.442695
    %v2132 = vpow.pop %v2131
    %v2133 = vmul.f32 %v2033, 1.442695
    %v2134 = vpow.pop %v2133
    %v2135 = vmul.f32 %v2034, 1.442695
    %v2136 = vpow.pop %v2135
    %v2137 = vmul.f32 %v2035, 1.442695
    %v2138 = vpow.pop %v2137
    %v2139 = vmul.f32 %v2036, 1.442695
    %v2140 = vpow.pop %v2139
    %v2141 = vmul.f32 %v2037, 1.442695
    %v2142 = vpow.pop %v2141
    %v2143 = vmul.f32 %v2038, 1.442695
    %v2144 = vpow.pop %v2143
    %v2145 = vmul.f32 %v2039, 1.442695
    %v2146 = vpow.pop %v2145
    %v2147 = vmul.f32 %v2040, 1.442695
    %v2148 = vpow.pop %v2147
    %v2149 = vmul.f32 %v2041, 1.442695
    %v2150 = vpow.pop %v2149
    %v2151 = vmul.f32 %v2042, 1.442695
    %v2152 = vpow.pop %v2151
    %v2153 = vmul.f32 %v2043, 1.442695
    %v2154 = vpow.pop %v2153
    %v2155 = vmul.f32 %v2044, 1.442695
    %v2156 = vpow.pop %v2155
    %v2157 = vmul.f32 %v2045, 1.442695
    %v2158 = vpow.pop %v2157
    %v2159 = vmul.f32 %v2046, 1.442695
    %v2160 = vpow.pop %v2159
    %v2161 = vmul.f32 %v2047, 1.442695
    %v2162 = vpow.pop %v2161
    %v2163 = vmul.f32 %v2048, 1.442695
    %v2164 = vpow.pop %v2163
    %v2165 = vmul.f32 %v2049, 1.442695
    %v2166 = vpow.pop %v2165
    %v2167 = vmul.f32 %v2050, 1.442695
    %v2168 = vpow.pop %v2167
    %v2169 = vmul.f32 %v2051, 1.442695
    %v2170 = vpow.pop %v2169
    %v2171 = vmul.f32 %v2052, 1.442695
    %v2172 = vpow.pop %v2171
    %v2173 = vmul.f32 %v2053, 1.442695
    %v2174 = vpow.pop %v2173
    %v2175 = vmul.f32 %v2054, 1.442695
    %v2176 = vpow.pop %v2175
    %v2177 = vmul.f32 %v2055, 1.442695
    %v2178 = vpow.pop %v2177
    %v2179 = vmul.f32 %v2056, 1.442695
    %v2180 = vpow.pop %v2179
    %v2181 = vmul.f32 %v2057, 1.442695
    %v2182 = vpow.pop %v2181
    %v2183 = vmul.f32 %v2058, 1.442695
    %v2184 = vpow.pop %v2183
    %v2185 = vmul.f32 %v2059, 1.442695
    %v2186 = vpow.pop %v2185
    %v2187 = vmul.f32 %v2060, 1.442695
    %v2188 = vpow.pop %v2187
    %2189 = vadd.xlane.f32.xlu0 %v2062
    %v2190 = vpop.xlane.xlu0 %2189
    %2191 = vadd.xlane.f32.xlu0 %v2064
    %v2192 = vpop.xlane.xlu0 %2191
    %2193 = vadd.xlane.f32.xlu0 %v2066
    %v2194 = vpop.xlane.xlu0 %2193
    %2195 = vadd.xlane.f32.xlu0 %v2068
    %v2196 = vpop.xlane.xlu0 %2195
    %2197 = vadd.xlane.f32.xlu0 %v2070
    %v2198 = vpop.xlane.xlu0 %2197
    %2199 = vadd.xlane.f32.xlu0 %v2072
    %v2200 = vpop.xlane.xlu0 %2199
    %2201 = vadd.xlane.f32.xlu0 %v2074
    %v2202 = vpop.xlane.xlu0 %2201
    %2203 = vadd.xlane.f32.xlu0 %v2076
    %v2204 = vpop.xlane.xlu0 %2203
    %2205 = vadd.xlane.f32.xlu0 %v2078
    %v2206 = vpop.xlane.xlu0 %2205
    %2207 = vadd.xlane.f32.xlu0 %v2080
    %v2208 = vpop.xlane.xlu0 %2207
    %2209 = vadd.xlane.f32.xlu0 %v2082
    %v2210 = vpop.xlane.xlu0 %2209
    %2211 = vadd.xlane.f32.xlu0 %v2084
    %v2212 = vpop.xlane.xlu0 %2211
    %2213 = vadd.xlane.f32.xlu0 %v2086
    %v2214 = vpop.xlane.xlu0 %2213
    %2215 = vadd.xlane.f32.xlu0 %v2088
    %v2216 = vpop.xlane.xlu0 %2215
    %2217 = vadd.xlane.f32.xlu0 %v2090
    %v2218 = vpop.xlane.xlu0 %2217
    %2219 = vadd.xlane.f32.xlu0 %v2092
    %v2220 = vpop.xlane.xlu0 %2219
    %2221 = vadd.xlane.f32.xlu0 %v2094
    %v2222 = vpop.xlane.xlu0 %2221
    %2223 = vadd.xlane.f32.xlu0 %v2096
    %v2224 = vpop.xlane.xlu0 %2223
    %2225 = vadd.xlane.f32.xlu0 %v2098
    %v2226 = vpop.xlane.xlu0 %2225
    %2227 = vadd.xlane.f32.xlu0 %v2100
    %v2228 = vpop.xlane.xlu0 %2227
    %2229 = vadd.xlane.f32.xlu0 %v2102
    %v2230 = vpop.xlane.xlu0 %2229
    %2231 = vadd.xlane.f32.xlu0 %v2104
    %v2232 = vpop.xlane.xlu0 %2231
    %2233 = vadd.xlane.f32.xlu0 %v2106
    %v2234 = vpop.xlane.xlu0 %2233
    %2235 = vadd.xlane.f32.xlu0 %v2108
    %v2236 = vpop.xlane.xlu0 %2235
    %2237 = vadd.xlane.f32.xlu0 %v2110
    %v2238 = vpop.xlane.xlu0 %2237
    %2239 = vadd.xlane.f32.xlu0 %v2112
    %v2240 = vpop.xlane.xlu0 %2239
    %2241 = vadd.xlane.f32.xlu0 %v2114
    %v2242 = vpop.xlane.xlu0 %2241
    %2243 = vadd.xlane.f32.xlu0 %v2116
    %v2244 = vpop.xlane.xlu0 %2243
    %2245 = vadd.xlane.f32.xlu0 %v2118
    %v2246 = vpop.xlane.xlu0 %2245
    %2247 = vadd.xlane.f32.xlu0 %v2120
    %v2248 = vpop.xlane.xlu0 %2247
    %2249 = vadd.xlane.f32.xlu0 %v2122
    %v2250 = vpop.xlane.xlu0 %2249
    %2251 = vadd.xlane.f32.xlu0 %v2124
    %v2252 = vpop.xlane.xlu0 %2251
    %2253 = vadd.xlane.f32.xlu0 %v2126
    %v2254 = vpop.xlane.xlu0 %2253
    %2255 = vadd.xlane.f32.xlu0 %v2128
    %v2256 = vpop.xlane.xlu0 %2255
    %2257 = vadd.xlane.f32.xlu0 %v2130
    %v2258 = vpop.xlane.xlu0 %2257
    %2259 = vadd.xlane.f32.xlu0 %v2132
    %v2260 = vpop.xlane.xlu0 %2259
    %2261 = vadd.xlane.f32.xlu0 %v2134
    %v2262 = vpop.xlane.xlu0 %2261
    %2263 = vadd.xlane.f32.xlu0 %v2136
    %v2264 = vpop.xlane.xlu0 %2263
    %2265 = vadd.xlane.f32.xlu0 %v2138
    %v2266 = vpop.xlane.xlu0 %2265
    %2267 = vadd.xlane.f32.xlu0 %v2140
    %v2268 = vpop.xlane.xlu0 %2267
    %2269 = vadd.xlane.f32.xlu0 %v2142
    %v2270 = vpop.xlane.xlu0 %2269
    %2271 = vadd.xlane.f32.xlu0 %v2144
    %v2272 = vpop.xlane.xlu0 %2271
    %2273 = vadd.xlane.f32.xlu0 %v2146
    %v2274 = vpop.xlane.xlu0 %2273
    %2275 = vadd.xlane.f32.xlu0 %v2148
    %v2276 = vpop.xlane.xlu0 %2275
    %2277 = vadd.xlane.f32.xlu0 %v2150
    %v2278 = vpop.xlane.xlu0 %2277
    %2279 = vadd.xlane.f32.xlu0 %v2152
    %v2280 = vpop.xlane.xlu0 %2279
    %2281 = vadd.xlane.f32.xlu0 %v2154
    %v2282 = vpop.xlane.xlu0 %2281
    %2283 = vadd.xlane.f32.xlu0 %v2156
    %v2284 = vpop.xlane.xlu0 %2283
    %2285 = vadd.xlane.f32.xlu0 %v2158
    %v2286 = vpop.xlane.xlu0 %2285
    %2287 = vadd.xlane.f32.xlu0 %v2160
    %v2288 = vpop.xlane.xlu0 %2287
    %2289 = vadd.xlane.f32.xlu0 %v2162
    %v2290 = vpop.xlane.xlu0 %2289
    %2291 = vadd.xlane.f32.xlu0 %v2164
    %v2292 = vpop.xlane.xlu0 %2291
    %2293 = vadd.xlane.f32.xlu0 %v2166
    %v2294 = vpop.xlane.xlu0 %2293
    %2295 = vadd.xlane.f32.xlu0 %v2168
    %v2296 = vpop.xlane.xlu0 %2295
    %2297 = vadd.xlane.f32.xlu0 %v2170
    %v2298 = vpop.xlane.xlu0 %2297
    %2299 = vadd.xlane.f32.xlu0 %v2172
    %v2300 = vpop.xlane.xlu0 %2299
    %2301 = vadd.xlane.f32.xlu0 %v2174
    %v2302 = vpop.xlane.xlu0 %2301
    %2303 = vadd.xlane.f32.xlu0 %v2176
    %v2304 = vpop.xlane.xlu0 %2303
    %2305 = vadd.xlane.f32.xlu0 %v2178
    %v2306 = vpop.xlane.xlu0 %2305
    %2307 = vadd.xlane.f32.xlu0 %v2180
    %v2308 = vpop.xlane.xlu0 %2307
    %2309 = vadd.xlane.f32.xlu0 %v2182
    %v2310 = vpop.xlane.xlu0 %2309
    %2311 = vadd.xlane.f32.xlu0 %v2184
    %v2312 = vpop.xlane.xlu0 %2311
    %2313 = vadd.xlane.f32.xlu0 %v2186
    %v2314 = vpop.xlane.xlu0 %2313
    %2315 = vadd.xlane.f32.xlu0 %v2188
    %v2316 = vpop.xlane.xlu0 %2315
    %v2317 = vrcp.pop %v2190
    %v2318 = vrcp.pop %v2192
    %v2319 = vrcp.pop %v2194
    %v2320 = vrcp.pop %v2196
    %v2321 = vrcp.pop %v2198
    %v2322 = vrcp.pop %v2200
    %v2323 = vrcp.pop %v2202
    %v2324 = vrcp.pop %v2204
    %v2325 = vrcp.pop %v2206
    %v2326 = vrcp.pop %v2208
    %v2327 = vrcp.pop %v2210
    %v2328 = vrcp.pop %v2212
    %v2329 = vrcp.pop %v2214
    %v2330 = vrcp.pop %v2216
    %v2331 = vrcp.pop %v2218
    %v2332 = vrcp.pop %v2220
    %v2333 = vrcp.pop %v2222
    %v2334 = vrcp.pop %v2224
    %v2335 = vrcp.pop %v2226
    %v2336 = vrcp.pop %v2228
    %v2337 = vrcp.pop %v2230
    %v2338 = vrcp.pop %v2232
    %v2339 = vrcp.pop %v2234
    %v2340 = vrcp.pop %v2236
    %v2341 = vrcp.pop %v2238
    %v2342 = vrcp.pop %v2240
    %v2343 = vrcp.pop %v2242
    %v2344 = vrcp.pop %v2244
    %v2345 = vrcp.pop %v2246
    %v2346 = vrcp.pop %v2248
    %v2347 = vrcp.pop %v2250
    %v2348 = vrcp.pop %v2252
    %v2349 = vrcp.pop %v2254
    %v2350 = vrcp.pop %v2256
    %v2351 = vrcp.pop %v2258
    %v2352 = vrcp.pop %v2260
    %v2353 = vrcp.pop %v2262
    %v2354 = vrcp.pop %v2264
    %v2355 = vrcp.pop %v2266
    %v2356 = vrcp.pop %v2268
    %v2357 = vrcp.pop %v2270
    %v2358 = vrcp.pop %v2272
    %v2359 = vrcp.pop %v2274
    %v2360 = vrcp.pop %v2276
    %v2361 = vrcp.pop %v2278
    %v2362 = vrcp.pop %v2280
    %v2363 = vrcp.pop %v2282
    %v2364 = vrcp.pop %v2284
    %v2365 = vrcp.pop %v2286
    %v2366 = vrcp.pop %v2288
    %v2367 = vrcp.pop %v2290
    %v2368 = vrcp.pop %v2292
    %v2369 = vrcp.pop %v2294
    %v2370 = vrcp.pop %v2296
    %v2371 = vrcp.pop %v2298
    %v2372 = vrcp.pop %v2300
    %v2373 = vrcp.pop %v2302
    %v2374 = vrcp.pop %v2304
    %v2375 = vrcp.pop %v2306
    %v2376 = vrcp.pop %v2308
    %v2377 = vrcp.pop %v2310
    %v2378 = vrcp.pop %v2312
    %v2379 = vrcp.pop %v2314
    %v2380 = vrcp.pop %v2316
    %v2381 = vmul.f32 %v2062, %v2317
    %v2382 = vmul.f32 %v2064, %v2318
    %v2383 = vmul.f32 %v2066, %v2319
    %v2384 = vmul.f32 %v2068, %v2320
    %v2385 = vmul.f32 %v2070, %v2321
    %v2386 = vmul.f32 %v2072, %v2322
    %v2387 = vmul.f32 %v2074, %v2323
    %v2388 = vmul.f32 %v2076, %v2324
    %v2389 = vmul.f32 %v2078, %v2325
    %v2390 = vmul.f32 %v2080, %v2326
    %v2391 = vmul.f32 %v2082, %v2327
    %v2392 = vmul.f32 %v2084, %v2328
    %v2393 = vmul.f32 %v2086, %v2329
    %v2394 = vmul.f32 %v2088, %v2330
    %v2395 = vmul.f32 %v2090, %v2331
    %v2396 = vmul.f32 %v2092, %v2332
    %v2397 = vmul.f32 %v2094, %v2333
    %v2398 = vmul.f32 %v2096, %v2334
    %v2399 = vmul.f32 %v2098, %v2335
    %v2400 = vmul.f32 %v2100, %v2336
    %v2401 = vmul.f32 %v2102, %v2337
    %v2402 = vmul.f32 %v2104, %v2338
    %v2403 = vmul.f32 %v2106, %v2339
    %v2404 = vmul.f32 %v2108, %v2340
    %v2405 = vmul.f32 %v2110, %v2341
    %v2406 = vmul.f32 %v2112, %v2342
    %v2407 = vmul.f32 %v2114, %v2343
    %v2408 = vmul.f32 %v2116, %v2344
    %v2409 = vmul.f32 %v2118, %v2345
    %v2410 = vmul.f32 %v2120, %v2346
    %v2411 = vmul.f32 %v2122, %v2347
    %v2412 = vmul.f32 %v2124, %v2348
    %v2413 = vmul.f32 %v2126, %v2349
    %v2414 = vmul.f32 %v2128, %v2350
    %v2415 = vmul.f32 %v2130, %v2351
    %v2416 = vmul.f32 %v2132, %v2352
    %v2417 = vmul.f32 %v2134, %v2353
    %v2418 = vmul.f32 %v2136, %v2354
    %v2419 = vmul.f32 %v2138, %v2355
    %v2420 = vmul.f32 %v2140, %v2356
    %v2421 = vmul.f32 %v2142, %v2357
    %v2422 = vmul.f32 %v2144, %v2358
    %v2423 = vmul.f32 %v2146, %v2359
    %v2424 = vmul.f32 %v2148, %v2360
    %v2425 = vmul.f32 %v2150, %v2361
    %v2426 = vmul.f32 %v2152, %v2362
    %v2427 = vmul.f32 %v2154, %v2363
    %v2428 = vmul.f32 %v2156, %v2364
    %v2429 = vmul.f32 %v2158, %v2365
    %v2430 = vmul.f32 %v2160, %v2366
    %v2431 = vmul.f32 %v2162, %v2367
    %v2432 = vmul.f32 %v2164, %v2368
    %v2433 = vmul.f32 %v2166, %v2369
    %v2434 = vmul.f32 %v2168, %v2370
    %v2435 = vmul.f32 %v2170, %v2371
    %v2436 = vmul.f32 %v2172, %v2372
    %v2437 = vmul.f32 %v2174, %v2373
    %v2438 = vmul.f32 %v2176, %v2374
    %v2439 = vmul.f32 %v2178, %v2375
    %v2440 = vmul.f32 %v2180, %v2376
    %v2441 = vmul.f32 %v2182, %v2377
    %v2442 = vmul.f32 %v2184, %v2378
    %v2443 = vmul.f32 %v2186, %v2379
    %v2444 = vmul.f32 %v2188, %v2380
    %v2445 = vpack.c.bf16 %v2381, %v2381
    %v2446 = vpack.c.bf16 %v2382, %v2382
    %v2447 = vpack.c.bf16 %v2383, %v2383
    %v2448 = vpack.c.bf16 %v2384, %v2384
    %v2449 = vpack.c.bf16 %v2385, %v2385
    %v2450 = vpack.c.bf16 %v2386, %v2386
    %v2451 = vpack.c.bf16 %v2387, %v2387
    %v2452 = vpack.c.bf16 %v2388, %v2388
    %v2453 = vpack.c.bf16 %v2389, %v2389
    %v2454 = vpack.c.bf16 %v2390, %v2390
    %v2455 = vpack.c.bf16 %v2391, %v2391
    %v2456 = vpack.c.bf16 %v2392, %v2392
    %v2457 = vpack.c.bf16 %v2393, %v2393
    %v2458 = vpack.c.bf16 %v2394, %v2394
    %v2459 = vpack.c.bf16 %v2395, %v2395
    %v2460 = vpack.c.bf16 %v2396, %v2396
    %v2461 = vpack.c.bf16 %v2397, %v2397
    %v2462 = vpack.c.bf16 %v2398, %v2398
    %v2463 = vpack.c.bf16 %v2399, %v2399
    %v2464 = vpack.c.bf16 %v2400, %v2400
    %v2465 = vpack.c.bf16 %v2401, %v2401
    %v2466 = vpack.c.bf16 %v2402, %v2402
    %v2467 = vpack.c.bf16 %v2403, %v2403
    %v2468 = vpack.c.bf16 %v2404, %v2404
    %v2469 = vpack.c.bf16 %v2405, %v2405
    %v2470 = vpack.c.bf16 %v2406, %v2406
    %v2471 = vpack.c.bf16 %v2407, %v2407
    %v2472 = vpack.c.bf16 %v2408, %v2408
    %v2473 = vpack.c.bf16 %v2409, %v2409
    %v2474 = vpack.c.bf16 %v2410, %v2410
    %v2475 = vpack.c.bf16 %v2411, %v2411
    %v2476 = vpack.c.bf16 %v2412, %v2412
    %v2477 = vpack.c.bf16 %v2413, %v2413
    %v2478 = vpack.c.bf16 %v2414, %v2414
    %v2479 = vpack.c.bf16 %v2415, %v2415
    %v2480 = vpack.c.bf16 %v2416, %v2416
    %v2481 = vpack.c.bf16 %v2417, %v2417
    %v2482 = vpack.c.bf16 %v2418, %v2418
    %v2483 = vpack.c.bf16 %v2419, %v2419
    %v2484 = vpack.c.bf16 %v2420, %v2420
    %v2485 = vpack.c.bf16 %v2421, %v2421
    %v2486 = vpack.c.bf16 %v2422, %v2422
    %v2487 = vpack.c.bf16 %v2423, %v2423
    %v2488 = vpack.c.bf16 %v2424, %v2424
    %v2489 = vpack.c.bf16 %v2425, %v2425
    %v2490 = vpack.c.bf16 %v2426, %v2426
    %v2491 = vpack.c.bf16 %v2427, %v2427
    %v2492 = vpack.c.bf16 %v2428, %v2428
    %v2493 = vpack.c.bf16 %v2429, %v2429
    %v2494 = vpack.c.bf16 %v2430, %v2430
    %v2495 = vpack.c.bf16 %v2431, %v2431
    %v2496 = vpack.c.bf16 %v2432, %v2432
    %v2497 = vpack.c.bf16 %v2433, %v2433
    %v2498 = vpack.c.bf16 %v2434, %v2434
    %v2499 = vpack.c.bf16 %v2435, %v2435
    %v2500 = vpack.c.bf16 %v2436, %v2436
    %v2501 = vpack.c.bf16 %v2437, %v2437
    %v2502 = vpack.c.bf16 %v2438, %v2438
    %v2503 = vpack.c.bf16 %v2439, %v2439
    %v2504 = vpack.c.bf16 %v2440, %v2440
    %v2505 = vpack.c.bf16 %v2441, %v2441
    %v2506 = vpack.c.bf16 %v2442, %v2442
    %v2507 = vpack.c.bf16 %v2443, %v2443
    %v2508 = vpack.c.bf16 %v2444, %v2444
    %v2525 = vunpack.c.l.b16 %v2445
    %v2526 = vunpack.c.l.b16 %v2446
    %v2527 = vunpack.c.l.b16 %v2447
    %v2528 = vunpack.c.l.b16 %v2448
    %v2529 = vunpack.c.l.b16 %v2449
    %v2530 = vunpack.c.l.b16 %v2450
    %v2531 = vunpack.c.l.b16 %v2451
    %v2532 = vunpack.c.l.b16 %v2452
    %v2533 = vunpack.c.l.b16 %v2453
    %v2534 = vunpack.c.l.b16 %v2454
    %v2535 = vunpack.c.l.b16 %v2455
    %v2536 = vunpack.c.l.b16 %v2456
    %v2537 = vunpack.c.l.b16 %v2457
    %v2538 = vunpack.c.l.b16 %v2458
    %v2539 = vunpack.c.l.b16 %v2459
    %v2540 = vunpack.c.l.b16 %v2460
    %v2541 = vpack.c.b16 %v2526, %v2525
    %v2542 = vpack.c.b16 %v2528, %v2527
    %v2543 = vpack.c.b16 %v2530, %v2529
    %v2544 = vpack.c.b16 %v2532, %v2531
    %v2545 = vpack.c.b16 %v2534, %v2533
    %v2546 = vpack.c.b16 %v2536, %v2535
    %v2547 = vpack.c.b16 %v2538, %v2537
    %v2548 = vpack.c.b16 %v2540, %v2539
    %v2573 = vunpack.c.l.b16 %v1094
    %v2574 = vunpack.c.l.b16 %v1095
    %v2575 = vunpack.c.l.b16 %v1096
    %v2576 = vunpack.c.l.b16 %v1097
    %v2577 = vunpack.c.l.b16 %v1098
    %v2578 = vunpack.c.l.b16 %v1099
    %v2579 = vunpack.c.l.b16 %v1100
    %v2580 = vunpack.c.l.b16 %v1101
    %v2581 = vunpack.c.l.b16 %v1102
    %v2582 = vunpack.c.l.b16 %v1103
    %v2583 = vunpack.c.l.b16 %v1104
    %v2584 = vunpack.c.l.b16 %v1105
    %v2585 = vunpack.c.l.b16 %v1106
    %v2586 = vunpack.c.l.b16 %v1107
    %v2587 = vunpack.c.l.b16 %v1108
    %v2588 = vunpack.c.l.b16 %v1109
    %v2589 = vpack.c.b16 %v2574, %v2573
    %v2590 = vpack.c.b16 %v2576, %v2575
    %v2591 = vpack.c.b16 %v2578, %v2577
    %v2592 = vpack.c.b16 %v2580, %v2579
    %v2593 = vpack.c.b16 %v2582, %v2581
    %v2594 = vpack.c.b16 %v2584, %v2583
    %v2595 = vpack.c.b16 %v2586, %v2585
    %v2596 = vpack.c.b16 %v2588, %v2587
    %2605 = vmatpush.bf16.msra.mxu0 %v2596
    %2606 = vmatpush.bf16.msra.mxu0 %v2595
    %2607 = vmatpush.bf16.msra.mxu0 %v2594
    %2608 = vmatpush.bf16.msra.mxu0 %v2593
    %2609 = vmatpush.bf16.msra.mxu0 %v2592
    %2610 = vmatpush.bf16.msra.mxu0 %v2591
    %2611 = vmatpush.bf16.msra.mxu0 %v2590
    %2612 = vmatpush.bf16.msra.mxu0 %v2589
    %2613 = vmatmul.bf16.gmra.mxu0 %v2541
    %v2614 = vpop.f32.mrf.mxu0
    %v2615 = vadd.f32 0.0, %v2614
    %v2616 = vpop.f32.mrf.mxu0
    %v2617 = vadd.f32 0.0, %v2616
    %2618 = vmatmul.bf16.gmra.mxu0 %v2542
    %v2619 = vpop.f32.mrf.mxu0
    %v2620 = vadd.f32 0.0, %v2619
    %v2621 = vpop.f32.mrf.mxu0
    %v2622 = vadd.f32 0.0, %v2621
    %2623 = vmatmul.bf16.gmra.mxu0 %v2543
    %v2624 = vpop.f32.mrf.mxu0
    %v2625 = vadd.f32 0.0, %v2624
    %v2626 = vpop.f32.mrf.mxu0
    %v2627 = vadd.f32 0.0, %v2626
    %2628 = vmatmul.bf16.gmra.mxu0 %v2544
    %v2629 = vpop.f32.mrf.mxu0
    %v2630 = vadd.f32 0.0, %v2629
    %v2631 = vpop.f32.mrf.mxu0
    %v2632 = vadd.f32 0.0, %v2631
    %2633 = vmatmul.bf16.gmra.mxu0 %v2545
    %v2634 = vpop.f32.mrf.mxu0
    %v2635 = vadd.f32 0.0, %v2634
    %v2636 = vpop.f32.mrf.mxu0
    %v2637 = vadd.f32 0.0, %v2636
    %2638 = vmatmul.bf16.gmra.mxu0 %v2546
    %v2639 = vpop.f32.mrf.mxu0
    %v2640 = vadd.f32 0.0, %v2639
    %v2641 = vpop.f32.mrf.mxu0
    %v2642 = vadd.f32 0.0, %v2641
    %2643 = vmatmul.bf16.gmra.mxu0 %v2547
    %v2644 = vpop.f32.mrf.mxu0
    %v2645 = vadd.f32 0.0, %v2644
    %v2646 = vpop.f32.mrf.mxu0
    %v2647 = vadd.f32 0.0, %v2646
    %2648 = vmatmul.bf16.gmra.mxu0 %v2548
    %v2649 = vpop.f32.mrf.mxu0
    %v2650 = vadd.f32 0.0, %v2649
    %v2651 = vpop.f32.mrf.mxu0
    %v2652 = vadd.f32 0.0, %v2651
    %2653 = vdwg.mxu0
    %v2670 = vunpack.c.l.b16 %v2461
    %v2671 = vunpack.c.l.b16 %v2462
    %v2672 = vunpack.c.l.b16 %v2463
    %v2673 = vunpack.c.l.b16 %v2464
    %v2674 = vunpack.c.l.b16 %v2465
    %v2675 = vunpack.c.l.b16 %v2466
    %v2676 = vunpack.c.l.b16 %v2467
    %v2677 = vunpack.c.l.b16 %v2468
    %v2678 = vunpack.c.l.b16 %v2469
    %v2679 = vunpack.c.l.b16 %v2470
    %v2680 = vunpack.c.l.b16 %v2471
    %v2681 = vunpack.c.l.b16 %v2472
    %v2682 = vunpack.c.l.b16 %v2473
    %v2683 = vunpack.c.l.b16 %v2474
    %v2684 = vunpack.c.l.b16 %v2475
    %v2685 = vunpack.c.l.b16 %v2476
    %v2686 = vpack.c.b16 %v2671, %v2670
    %v2687 = vpack.c.b16 %v2673, %v2672
    %v2688 = vpack.c.b16 %v2675, %v2674
    %v2689 = vpack.c.b16 %v2677, %v2676
    %v2690 = vpack.c.b16 %v2679, %v2678
    %v2691 = vpack.c.b16 %v2681, %v2680
    %v2692 = vpack.c.b16 %v2683, %v2682
    %v2693 = vpack.c.b16 %v2685, %v2684
    %v2718 = vunpack.c.l.b16 %v1110
    %v2719 = vunpack.c.l.b16 %v1111
    %v2720 = vunpack.c.l.b16 %v1112
    %v2721 = vunpack.c.l.b16 %v1113
    %v2722 = vunpack.c.l.b16 %v1114
    %v2723 = vunpack.c.l.b16 %v1115
    %v2724 = vunpack.c.l.b16 %v1116
    %v2725 = vunpack.c.l.b16 %v1117
    %v2726 = vunpack.c.l.b16 %v1118
    %v2727 = vunpack.c.l.b16 %v1119
    %v2728 = vunpack.c.l.b16 %v1120
    %v2729 = vunpack.c.l.b16 %v1121
    %v2730 = vunpack.c.l.b16 %v1122
    %v2731 = vunpack.c.l.b16 %v1123
    %v2732 = vunpack.c.l.b16 %v1124
    %v2733 = vunpack.c.l.b16 %v1125
    %v2734 = vpack.c.b16 %v2719, %v2718
    %v2735 = vpack.c.b16 %v2721, %v2720
    %v2736 = vpack.c.b16 %v2723, %v2722
    %v2737 = vpack.c.b16 %v2725, %v2724
    %v2738 = vpack.c.b16 %v2727, %v2726
    %v2739 = vpack.c.b16 %v2729, %v2728
    %v2740 = vpack.c.b16 %v2731, %v2730
    %v2741 = vpack.c.b16 %v2733, %v2732
    %2750 = vmatpush.bf16.msra.mxu0 %v2741
    %2751 = vmatpush.bf16.msra.mxu0 %v2740
    %2752 = vmatpush.bf16.msra.mxu0 %v2739
    %2753 = vmatpush.bf16.msra.mxu0 %v2738
    %2754 = vmatpush.bf16.msra.mxu0 %v2737
    %2755 = vmatpush.bf16.msra.mxu0 %v2736
    %2756 = vmatpush.bf16.msra.mxu0 %v2735
    %2757 = vmatpush.bf16.msra.mxu0 %v2734
    %2758 = vmatmul.bf16.gmra.mxu0 %v2686
    %v2759 = vpop.f32.mrf.mxu0
    %v2760 = vadd.f32 0.0, %v2759
    %v2761 = vpop.f32.mrf.mxu0
    %v2762 = vadd.f32 0.0, %v2761
    %2763 = vmatmul.bf16.gmra.mxu0 %v2687
    %v2764 = vpop.f32.mrf.mxu0
    %v2765 = vadd.f32 0.0, %v2764
    %v2766 = vpop.f32.mrf.mxu0
    %v2767 = vadd.f32 0.0, %v2766
    %2768 = vmatmul.bf16.gmra.mxu0 %v2688
    %v2769 = vpop.f32.mrf.mxu0
    %v2770 = vadd.f32 0.0, %v2769
    %v2771 = vpop.f32.mrf.mxu0
    %v2772 = vadd.f32 0.0, %v2771
    %2773 = vmatmul.bf16.gmra.mxu0 %v2689
    %v2774 = vpop.f32.mrf.mxu0
    %v2775 = vadd.f32 0.0, %v2774
    %v2776 = vpop.f32.mrf.mxu0
    %v2777 = vadd.f32 0.0, %v2776
    %2778 = vmatmul.bf16.gmra.mxu0 %v2690
    %v2779 = vpop.f32.mrf.mxu0
    %v2780 = vadd.f32 0.0, %v2779
    %v2781 = vpop.f32.mrf.mxu0
    %v2782 = vadd.f32 0.0, %v2781
    %2783 = vmatmul.bf16.gmra.mxu0 %v2691
    %v2784 = vpop.f32.mrf.mxu0
    %v2785 = vadd.f32 0.0, %v2784
    %v2786 = vpop.f32.mrf.mxu0
    %v2787 = vadd.f32 0.0, %v2786
    %2788 = vmatmul.bf16.gmra.mxu0 %v2692
    %v2789 = vpop.f32.mrf.mxu0
    %v2790 = vadd.f32 0.0, %v2789
    %v2791 = vpop.f32.mrf.mxu0
    %v2792 = vadd.f32 0.0, %v2791
    %2793 = vmatmul.bf16.gmra.mxu0 %v2693
    %v2794 = vpop.f32.mrf.mxu0
    %v2795 = vadd.f32 0.0, %v2794
    %v2796 = vpop.f32.mrf.mxu0
    %v2797 = vadd.f32 0.0, %v2796
    %2798 = vdwg.mxu0
    %v2815 = vunpack.c.l.b16 %v2477
    %v2816 = vunpack.c.l.b16 %v2478
    %v2817 = vunpack.c.l.b16 %v2479
    %v2818 = vunpack.c.l.b16 %v2480
    %v2819 = vunpack.c.l.b16 %v2481
    %v2820 = vunpack.c.l.b16 %v2482
    %v2821 = vunpack.c.l.b16 %v2483
    %v2822 = vunpack.c.l.b16 %v2484
    %v2823 = vunpack.c.l.b16 %v2485
    %v2824 = vunpack.c.l.b16 %v2486
    %v2825 = vunpack.c.l.b16 %v2487
    %v2826 = vunpack.c.l.b16 %v2488
    %v2827 = vunpack.c.l.b16 %v2489
    %v2828 = vunpack.c.l.b16 %v2490
    %v2829 = vunpack.c.l.b16 %v2491
    %v2830 = vunpack.c.l.b16 %v2492
    %v2831 = vpack.c.b16 %v2816, %v2815
    %v2832 = vpack.c.b16 %v2818, %v2817
    %v2833 = vpack.c.b16 %v2820, %v2819
    %v2834 = vpack.c.b16 %v2822, %v2821
    %v2835 = vpack.c.b16 %v2824, %v2823
    %v2836 = vpack.c.b16 %v2826, %v2825
    %v2837 = vpack.c.b16 %v2828, %v2827
    %v2838 = vpack.c.b16 %v2830, %v2829
    %v2863 = vunpack.c.l.b16 %v1126
    %v2864 = vunpack.c.l.b16 %v1127
    %v2865 = vunpack.c.l.b16 %v1128
    %v2866 = vunpack.c.l.b16 %v1129
    %v2867 = vunpack.c.l.b16 %v1130
    %v2868 = vunpack.c.l.b16 %v1131
    %v2869 = vunpack.c.l.b16 %v1132
    %v2870 = vunpack.c.l.b16 %v1133
    %v2871 = vunpack.c.l.b16 %v1134
    %v2872 = vunpack.c.l.b16 %v1135
    %v2873 = vunpack.c.l.b16 %v1136
    %v2874 = vunpack.c.l.b16 %v1137
    %v2875 = vunpack.c.l.b16 %v1138
    %v2876 = vunpack.c.l.b16 %v1139
    %v2877 = vunpack.c.l.b16 %v1140
    %v2878 = vunpack.c.l.b16 %v1141
    %v2879 = vpack.c.b16 %v2864, %v2863
    %v2880 = vpack.c.b16 %v2866, %v2865
    %v2881 = vpack.c.b16 %v2868, %v2867
    %v2882 = vpack.c.b16 %v2870, %v2869
    %v2883 = vpack.c.b16 %v2872, %v2871
    %v2884 = vpack.c.b16 %v2874, %v2873
    %v2885 = vpack.c.b16 %v2876, %v2875
    %v2886 = vpack.c.b16 %v2878, %v2877
    %2895 = vmatpush.bf16.msra.mxu0 %v2886
    %2896 = vmatpush.bf16.msra.mxu0 %v2885
    %2897 = vmatpush.bf16.msra.mxu0 %v2884
    %2898 = vmatpush.bf16.msra.mxu0 %v2883
    %2899 = vmatpush.bf16.msra.mxu0 %v2882
    %2900 = vmatpush.bf16.msra.mxu0 %v2881
    %2901 = vmatpush.bf16.msra.mxu0 %v2880
    %2902 = vmatpush.bf16.msra.mxu0 %v2879
    %2903 = vmatmul.bf16.gmra.mxu0 %v2831
    %v2904 = vpop.f32.mrf.mxu0
    %v2905 = vadd.f32 0.0, %v2904
    %v2906 = vpop.f32.mrf.mxu0
    %v2907 = vadd.f32 0.0, %v2906
    %2908 = vmatmul.bf16.gmra.mxu0 %v2832
    %v2909 = vpop.f32.mrf.mxu0
    %v2910 = vadd.f32 0.0, %v2909
    %v2911 = vpop.f32.mrf.mxu0
    %v2912 = vadd.f32 0.0, %v2911
    %2913 = vmatmul.bf16.gmra.mxu0 %v2833
    %v2914 = vpop.f32.mrf.mxu0
    %v2915 = vadd.f32 0.0, %v2914
    %v2916 = vpop.f32.mrf.mxu0
    %v2917 = vadd.f32 0.0, %v2916
    %2918 = vmatmul.bf16.gmra.mxu0 %v2834
    %v2919 = vpop.f32.mrf.mxu0
    %v2920 = vadd.f32 0.0, %v2919
    %v2921 = vpop.f32.mrf.mxu0
    %v2922 = vadd.f32 0.0, %v2921
    %2923 = vmatmul.bf16.gmra.mxu0 %v2835
    %v2924 = vpop.f32.mrf.mxu0
    %v2925 = vadd.f32 0.0, %v2924
    %v2926 = vpop.f32.mrf.mxu0
    %v2927 = vadd.f32 0.0, %v2926
    %2928 = vmatmul.bf16.gmra.mxu0 %v2836
    %v2929 = vpop.f32.mrf.mxu0
    %v2930 = vadd.f32 0.0, %v2929
    %v2931 = vpop.f32.mrf.mxu0
    %v2932 = vadd.f32 0.0, %v2931
    %2933 = vmatmul.bf16.gmra.mxu0 %v2837
    %v2934 = vpop.f32.mrf.mxu0
    %v2935 = vadd.f32 0.0, %v2934
    %v2936 = vpop.f32.mrf.mxu0
    %v2937 = vadd.f32 0.0, %v2936
    %2938 = vmatmul.bf16.gmra.mxu0 %v2838
    %v2939 = vpop.f32.mrf.mxu0
    %v2940 = vadd.f32 0.0, %v2939
    %v2941 = vpop.f32.mrf.mxu0
    %v2942 = vadd.f32 0.0, %v2941
    %2943 = vdwg.mxu0
    %v2960 = vunpack.c.l.b16 %v2493
    %v2961 = vunpack.c.l.b16 %v2494
    %v2962 = vunpack.c.l.b16 %v2495
    %v2963 = vunpack.c.l.b16 %v2496
    %v2964 = vunpack.c.l.b16 %v2497
    %v2965 = vunpack.c.l.b16 %v2498
    %v2966 = vunpack.c.l.b16 %v2499
    %v2967 = vunpack.c.l.b16 %v2500
    %v2968 = vunpack.c.l.b16 %v2501
    %v2969 = vunpack.c.l.b16 %v2502
    %v2970 = vunpack.c.l.b16 %v2503
    %v2971 = vunpack.c.l.b16 %v2504
    %v2972 = vunpack.c.l.b16 %v2505
    %v2973 = vunpack.c.l.b16 %v2506
    %v2974 = vunpack.c.l.b16 %v2507
    %v2975 = vunpack.c.l.b16 %v2508
    %v2976 = vpack.c.b16 %v2961, %v2960
    %v2977 = vpack.c.b16 %v2963, %v2962
    %v2978 = vpack.c.b16 %v2965, %v2964
    %v2979 = vpack.c.b16 %v2967, %v2966
    %v2980 = vpack.c.b16 %v2969, %v2968
    %v2981 = vpack.c.b16 %v2971, %v2970
    %v2982 = vpack.c.b16 %v2973, %v2972
    %v2983 = vpack.c.b16 %v2975, %v2974
    %v3008 = vunpack.c.l.b16 %v1142
    %v3009 = vunpack.c.l.b16 %v1143
    %v3010 = vunpack.c.l.b16 %v1144
    %v3011 = vunpack.c.l.b16 %v1145
    %v3012 = vunpack.c.l.b16 %v1146
    %v3013 = vunpack.c.l.b16 %v1147
    %v3014 = vunpack.c.l.b16 %v1148
    %v3015 = vunpack.c.l.b16 %v1149
    %v3016 = vunpack.c.l.b16 %v1150
    %v3017 = vunpack.c.l.b16 %v1151
    %v3018 = vunpack.c.l.b16 %v1152
    %v3019 = vunpack.c.l.b16 %v1153
    %v3020 = vunpack.c.l.b16 %v1154
    %v3021 = vunpack.c.l.b16 %v1155
    %v3022 = vunpack.c.l.b16 %v1156
    %v3023 = vunpack.c.l.b16 %v1157
    %v3024 = vpack.c.b16 %v3009, %v3008
    %v3025 = vpack.c.b16 %v3011, %v3010
    %v3026 = vpack.c.b16 %v3013, %v3012
    %v3027 = vpack.c.b16 %v3015, %v3014
    %v3028 = vpack.c.b16 %v3017, %v3016
    %v3029 = vpack.c.b16 %v3019, %v3018
    %v3030 = vpack.c.b16 %v3021, %v3020
    %v3031 = vpack.c.b16 %v3023, %v3022
    %3040 = vmatpush.bf16.msra.mxu0 %v3031
    %3041 = vmatpush.bf16.msra.mxu0 %v3030
    %3042 = vmatpush.bf16.msra.mxu0 %v3029
    %3043 = vmatpush.bf16.msra.mxu0 %v3028
    %3044 = vmatpush.bf16.msra.mxu0 %v3027
    %3045 = vmatpush.bf16.msra.mxu0 %v3026
    %3046 = vmatpush.bf16.msra.mxu0 %v3025
    %3047 = vmatpush.bf16.msra.mxu0 %v3024
    %3048 = vmatmul.bf16.gmra.mxu0 %v2976
    %v3049 = vpop.f32.mrf.mxu0
    %v3050 = vadd.f32 0.0, %v3049
    %v3051 = vpop.f32.mrf.mxu0
    %v3052 = vadd.f32 0.0, %v3051
    %3053 = vmatmul.bf16.gmra.mxu0 %v2977
    %v3054 = vpop.f32.mrf.mxu0
    %v3055 = vadd.f32 0.0, %v3054
    %v3056 = vpop.f32.mrf.mxu0
    %v3057 = vadd.f32 0.0, %v3056
    %3058 = vmatmul.bf16.gmra.mxu0 %v2978
    %v3059 = vpop.f32.mrf.mxu0
    %v3060 = vadd.f32 0.0, %v3059
    %v3061 = vpop.f32.mrf.mxu0
    %v3062 = vadd.f32 0.0, %v3061
    %3063 = vmatmul.bf16.gmra.mxu0 %v2979
    %v3064 = vpop.f32.mrf.mxu0
    %v3065 = vadd.f32 0.0, %v3064
    %v3066 = vpop.f32.mrf.mxu0
    %v3067 = vadd.f32 0.0, %v3066
    %3068 = vmatmul.bf16.gmra.mxu0 %v2980
    %v3069 = vpop.f32.mrf.mxu0
    %v3070 = vadd.f32 0.0, %v3069
    %v3071 = vpop.f32.mrf.mxu0
    %v3072 = vadd.f32 0.0, %v3071
    %3073 = vmatmul.bf16.gmra.mxu0 %v2981
    %v3074 = vpop.f32.mrf.mxu0
    %v3075 = vadd.f32 0.0, %v3074
    %v3076 = vpop.f32.mrf.mxu0
    %v3077 = vadd.f32 0.0, %v3076
    %3078 = vmatmul.bf16.gmra.mxu0 %v2982
    %v3079 = vpop.f32.mrf.mxu0
    %v3080 = vadd.f32 0.0, %v3079
    %v3081 = vpop.f32.mrf.mxu0
    %v3082 = vadd.f32 0.0, %v3081
    %3083 = vmatmul.bf16.gmra.mxu0 %v2983
    %v3084 = vpop.f32.mrf.mxu0
    %v3085 = vadd.f32 0.0, %v3084
    %v3086 = vpop.f32.mrf.mxu0
    %v3087 = vadd.f32 0.0, %v3086
    %3088 = vdwg.mxu0
    %vm3089 = vcmask 523264
    %3090 = vst.msk [vmem:[%s2] sm:$0xff] %vm3089, %v2615
    %3091 = vst.msk [vmem:[%s2 + $0x8] sm:$0xff] %vm3089, %v2617
    %3092 = vst.msk [vmem:[%s2 + $0x10] sm:$0xff] %vm3089, %v2620
    %3093 = vst.msk [vmem:[%s2 + $0x18] sm:$0xff] %vm3089, %v2622
    %3094 = vst.msk [vmem:[%s2 + $0x20] sm:$0xff] %vm3089, %v2625
    %3095 = vst.msk [vmem:[%s2 + $0x28] sm:$0xff] %vm3089, %v2627
    %3096 = vst.msk [vmem:[%s2 + $0x30] sm:$0xff] %vm3089, %v2630
    %3097 = vst.msk [vmem:[%s2 + $0x38] sm:$0xff] %vm3089, %v2632
    %3098 = vst.msk [vmem:[%s2 + $0x40] sm:$0xff] %vm3089, %v2635
    %3099 = vst.msk [vmem:[%s2 + $0x48] sm:$0xff] %vm3089, %v2637
    %3100 = vst.msk [vmem:[%s2 + $0x50] sm:$0xff] %vm3089, %v2640
    %3101 = vst.msk [vmem:[%s2 + $0x58] sm:$0xff] %vm3089, %v2642
    %3102 = vst.msk [vmem:[%s2 + $0x60] sm:$0xff] %vm3089, %v2645
    %3103 = vst.msk [vmem:[%s2 + $0x68] sm:$0xff] %vm3089, %v2647
    %3104 = vst.msk [vmem:[%s2 + $0x70] sm:$0xff] %vm3089, %v2650
    %3105 = vst.msk [vmem:[%s2 + $0x78] sm:$0xff] %vm3089, %v2652
    %3106 = vst.msk [vmem:[%s2 + $0x80] sm:$0xff] %vm3089, %v2760
    %3107 = vst.msk [vmem:[%s2 + $0x88] sm:$0xff] %vm3089, %v2762
    %3108 = vst.msk [vmem:[%s2 + $0x90] sm:$0xff] %vm3089, %v2765
    %3109 = vst.msk [vmem:[%s2 + $0x98] sm:$0xff] %vm3089, %v2767
    %3110 = vst.msk [vmem:[%s2 + $0xa0] sm:$0xff] %vm3089, %v2770
    %3111 = vst.msk [vmem:[%s2 + $0xa8] sm:$0xff] %vm3089, %v2772
    %3112 = vst.msk [vmem:[%s2 + $0xb0] sm:$0xff] %vm3089, %v2775
    %3113 = vst.msk [vmem:[%s2 + $0xb8] sm:$0xff] %vm3089, %v2777
    %3114 = vst.msk [vmem:[%s2 + $0xc0] sm:$0xff] %vm3089, %v2780
    %3115 = vst.msk [vmem:[%s2 + $0xc8] sm:$0xff] %vm3089, %v2782
    %3116 = vst.msk [vmem:[%s2 + $0xd0] sm:$0xff] %vm3089, %v2785
    %3117 = vst.msk [vmem:[%s2 + $0xd8] sm:$0xff] %vm3089, %v2787
    %3118 = vst.msk [vmem:[%s2 + $0xe0] sm:$0xff] %vm3089, %v2790
    %3119 = vst.msk [vmem:[%s2 + $0xe8] sm:$0xff] %vm3089, %v2792
    %3120 = vst.msk [vmem:[%s2 + $0xf0] sm:$0xff] %vm3089, %v2795
    %3121 = vst.msk [vmem:[%s2 + $0xf8] sm:$0xff] %vm3089, %v2797
    %3122 = vst.msk [vmem:[%s2 + $0x100] sm:$0xff] %vm3089, %v2905
    %3123 = vst.msk [vmem:[%s2 + $0x108] sm:$0xff] %vm3089, %v2907
    %3124 = vst.msk [vmem:[%s2 + $0x110] sm:$0xff] %vm3089, %v2910
    %3125 = vst.msk [vmem:[%s2 + $0x118] sm:$0xff] %vm3089, %v2912
    %3126 = vst.msk [vmem:[%s2 + $0x120] sm:$0xff] %vm3089, %v2915
    %3127 = vst.msk [vmem:[%s2 + $0x128] sm:$0xff] %vm3089, %v2917
    %3128 = vst.msk [vmem:[%s2 + $0x130] sm:$0xff] %vm3089, %v2920
    %3129 = vst.msk [vmem:[%s2 + $0x138] sm:$0xff] %vm3089, %v2922
    %3130 = vst.msk [vmem:[%s2 + $0x140] sm:$0xff] %vm3089, %v2925
    %3131 = vst.msk [vmem:[%s2 + $0x148] sm:$0xff] %vm3089, %v2927
    %3132 = vst.msk [vmem:[%s2 + $0x150] sm:$0xff] %vm3089, %v2930
    %3133 = vst.msk [vmem:[%s2 + $0x158] sm:$0xff] %vm3089, %v2932
    %3134 = vst.msk [vmem:[%s2 + $0x160] sm:$0xff] %vm3089, %v2935
    %3135 = vst.msk [vmem:[%s2 + $0x168] sm:$0xff] %vm3089, %v2937
    %3136 = vst.msk [vmem:[%s2 + $0x170] sm:$0xff] %vm3089, %v2940
    %3137 = vst.msk [vmem:[%s2 + $0x178] sm:$0xff] %vm3089, %v2942
    %3138 = vst.msk [vmem:[%s2 + $0x180] sm:$0xff] %vm3089, %v3050
    %3139 = vst.msk [vmem:[%s2 + $0x188] sm:$0xff] %vm3089, %v3052
    %3140 = vst.msk [vmem:[%s2 + $0x190] sm:$0xff] %vm3089, %v3055
    %3141 = vst.msk [vmem:[%s2 + $0x198] sm:$0xff] %vm3089, %v3057
    %3142 = vst.msk [vmem:[%s2 + $0x1a0] sm:$0xff] %vm3089, %v3060
    %3143 = vst.msk [vmem:[%s2 + $0x1a8] sm:$0xff] %vm3089, %v3062
    %3144 = vst.msk [vmem:[%s2 + $0x1b0] sm:$0xff] %vm3089, %v3065
    %3145 = vst.msk [vmem:[%s2 + $0x1b8] sm:$0xff] %vm3089, %v3067
    %3146 = vst.msk [vmem:[%s2 + $0x1c0] sm:$0xff] %vm3089, %v3070
    %3147 = vst.msk [vmem:[%s2 + $0x1c8] sm:$0xff] %vm3089, %v3072
    %3148 = vst.msk [vmem:[%s2 + $0x1d0] sm:$0xff] %vm3089, %v3075
    %3149 = vst.msk [vmem:[%s2 + $0x1d8] sm:$0xff] %vm3089, %v3077
    %3150 = vst.msk [vmem:[%s2 + $0x1e0] sm:$0xff] %vm3089, %v3080
    %3151 = vst.msk [vmem:[%s2 + $0x1e8] sm:$0xff] %vm3089, %v3082
    %3152 = vst.msk [vmem:[%s2 + $0x1f0] sm:$0xff] %vm3089, %v3085
    %3153 = vst.msk [vmem:[%s2 + $0x1f8] sm:$0xff] %vm3089, %v3087
    // Predicated region
    $region18: #{tpu_custom_call.1} parent=1 // pred_check
      _
    $region19: #{tpu_custom_call.1} parent=1 // pred_check_branch
      %3155 = sbr.rel (0) target = $region21
    $region20: #{tpu_custom_call.1} parent=1 // pred_region
      _
    $region21: #{tpu_custom_call.1} parent=1 // pred_fallthru
      _
    // Predicated region
    $region22: #{tpu_custom_call.1} parent=1 // pred_check
      _
    $region23: #{tpu_custom_call.1} parent=1 // pred_check_branch
      %3157 = sbr.rel (0) target = $region25
    $region24: #{tpu_custom_call.1} parent=1 // pred_region
      _
    $region25: #{tpu_custom_call.1} parent=1 // pred_fallthru
      _
    %3158 = vsyncpa [#allocation3], 1
    %3159 = vsyncpa [#allocation5], 1

// kernel: tpu_custom_call.1
$region0: #{tpu_custom_call.1}
  #allocation0 [shape = 'u32[]', space=smem, size = 0x4, offset = 0x4, fixed_abs, tag = 'smem constant byte address 0x4 - core index']
  #allocation1 [shape = 'u32[72,128]{1,0:T(1,128)}', space=vmem, size = 0x9000, scoped, tag = 'internal scratch']
  %s0 = inlined_call_operand.hbm [shape: bf16[4,128,128], index: 0, kind: input, shape index: {}]
  %s1 = inlined_call_operand.hbm [shape: bf16[128,384], index: 1, kind: input, shape index: {}]
  %s2 = inlined_call_operand.vmem [shape: f32[4,128,64], index: 2, kind: output, shape index: {}]
  %s3 = sld [smem:[#allocation0]]
  $region26: #{tpu_custom_call.1} parent=0
    _
  %s5 = ssub.s32 1, %s3
  %s6 = scalar_select 0, %s5, %s3
  $region1: #{tpu_custom_call.1} parent=0
    #allocation2 [shape = 'u8[131072]{0}', space=vmem, size = 0x20000, scoped, tag = 'input window, operand 0, single buffered']
    #allocation3 [shape = 's32[1]{0}', space=sflag, size = 0x4, scoped, tag = 'scoped memory for tpu_custom_call.1']
    #allocation4 [shape = 'u8[98304]{0}', space=vmem, size = 0x18000, scoped, tag = 'input window, operand 1, single buffered']
    #allocation5 [shape = 's32[1]{0}', space=sflag, size = 0x4, scoped, tag = 'scoped memory for tpu_custom_call.1']
    %7 = vsyncpa [#allocation3], 0
    %8 = vsyncpa [#allocation5], 0
    // Predicated region
    $region2: #{tpu_custom_call.1} parent=1 // pred_check
      _
    $region3: #{tpu_custom_call.1} parent=1 // pred_check_branch
      %10 = sbr.rel (0) target = $region5
    $region4: #{tpu_custom_call.1} parent=1 // pred_region
      %12 = vsyncadd [#allocation3], 0
      %s13 = sshll.u32 %s0, 4
      %s14 = int_to_ptr.hbm [resolvable:$true] %s13
      %s15 = sshll.u32 [#allocation2], 4
      %s16 = int_to_ptr.vmem [resolvable:$true] %s15
      %21 = dma.hbm_to_vmem [thread:$0]  %s14, 4096, %s16, [#allocation3], 64, 64, 4
    $region5: #{tpu_custom_call.1} parent=1 // pred_fallthru
      _
    // Predicated region
    $region6: #{tpu_custom_call.1} parent=1 // pred_check
      _
    $region7: #{tpu_custom_call.1} parent=1 // pred_check_branch
      %23 = sbr.rel (0) target = $region9
    $region8: #{tpu_custom_call.1} parent=1 // pred_region
      %25 = vsyncadd [#allocation5], 0
      %s26 = sshll.u32 %s1, 4
      %s27 = int_to_ptr.hbm [resolvable:$true] %s26
      %s28 = sshll.u32 [#allocation4], 4
      %s29 = int_to_ptr.vmem [resolvable:$true] %s28
      %34 = dma.hbm_to_vmem [thread:$0]  %s27, 3072, %s29, [#allocation5], 192, 192, 12
    $region9: #{tpu_custom_call.1} parent=1 // pred_fallthru
      _
    // Predicated region
    $region10: #{tpu_custom_call.1} parent=1 // pred_check
      _
    $region11: #{tpu_custom_call.1} parent=1 // pred_check_branch
      %36 = sbr.rel (0) target = $region13
    $region12: #{tpu_custom_call.1} parent=1 // pred_region
      %38 = dma.done [#allocation3], 4096
    $region13: #{tpu_custom_call.1} parent=1 // pred_fallthru
      _
    // Predicated region
    $region14: #{tpu_custom_call.1} parent=1 // pred_check
      _
    $region15: #{tpu_custom_call.1} parent=1 // pred_check_branch
      %40 = sbr.rel (0) target = $region17
    $region16: #{tpu_custom_call.1} parent=1 // pred_region
      %42 = dma.done [#allocation5], 3072
    $region17: #{tpu_custom_call.1} parent=1 // pred_fallthru
      _
    %v43 = vld [vmem:[#allocation2] sm:$0xf]
    %v44 = vld [vmem:[#allocation2 + $0x4] sm:$0xf]
    %v45 = vld [vmem:[#allocation2 + $0x8] sm:$0xf]
    %v46 = vld [vmem:[#allocation2 + $0xc] sm:$0xf]
    %v47 = vld [vmem:[#allocation2 + $0x10] sm:$0xf]
    %v48 = vld [vmem:[#allocation2 + $0x14] sm:$0xf]
    %v49 = vld [vmem:[#allocation2 + $0x18] sm:$0xf]
    %v50 = vld [vmem:[#allocation2 + $0x1c] sm:$0xf]
    %v51 = vld [vmem:[#allocation2 + $0x20] sm:$0xf]
    %v52 = vld [vmem:[#allocation2 + $0x24] sm:$0xf]
    %v53 = vld [vmem:[#allocation2 + $0x28] sm:$0xf]
    %v54 = vld [vmem:[#allocation2 + $0x2c] sm:$0xf]
    %v55 = vld [vmem:[#allocation2 + $0x30] sm:$0xf]
    %v56 = vld [vmem:[#allocation2 + $0x34] sm:$0xf]
    %v57 = vld [vmem:[#allocation2 + $0x38] sm:$0xf]
    %v58 = vld [vmem:[#allocation2 + $0x3c] sm:$0xf]
    %v59 = vld [vmem:[#allocation2 + $0x40] sm:$0xf]
    %v60 = vld [vmem:[#allocation2 + $0x44] sm:$0xf]
    %v61 = vld [vmem:[#allocation2 + $0x48] sm:$0xf]
    %v62 = vld [vmem:[#allocation2 + $0x4c] sm:$0xf]
    %v63 = vld [vmem:[#allocation2 + $0x50] sm:$0xf]
    %v64 = vld [vmem:[#allocation2 + $0x54] sm:$0xf]
    %v65 = vld [vmem:[#allocation2 + $0x58] sm:$0xf]
    %v66 = vld [vmem:[#allocation2 + $0x5c] sm:$0xf]
    %v67 = vld [vmem:[#allocation2 + $0x60] sm:$0xf]
    %v68 = vld [vmem:[#allocation2 + $0x64] sm:$0xf]
    %v69 = vld [vmem:[#allocation2 + $0x68] sm:$0xf]
    %v70 = vld [vmem:[#allocation2 + $0x6c] sm:$0xf]
    %v71 = vld [vmem:[#allocation2 + $0x70] sm:$0xf]
    %v72 = vld [vmem:[#allocation2 + $0x74] sm:$0xf]
    %v73 = vld [vmem:[#allocation2 + $0x78] sm:$0xf]
    %v74 = vld [vmem:[#allocation2 + $0x7c] sm:$0xf]
    %v75 = vld [vmem:[#allocation2 + $0x80] sm:$0xf]
    %v76 = vld [vmem:[#allocation2 + $0x84] sm:$0xf]
    %v77 = vld [vmem:[#allocation2 + $0x88] sm:$0xf]
    %v78 = vld [vmem:[#allocation2 + $0x8c] sm:$0xf]
    %v79 = vld [vmem:[#allocation2 + $0x90] sm:$0xf]
    %v80 = vld [vmem:[#allocation2 + $0x94] sm:$0xf]
    %v81 = vld [vmem:[#allocation2 + $0x98] sm:$0xf]
    %v82 = vld [vmem:[#allocation2 + $0x9c] sm:$0xf]
    %v83 = vld [vmem:[#allocation2 + $0xa0] sm:$0xf]
    %v84 = vld [vmem:[#allocation2 + $0xa4] sm:$0xf]
    %v85 = vld [vmem:[#allocation2 + $0xa8] sm:$0xf]
    %v86 = vld [vmem:[#allocation2 + $0xac] sm:$0xf]
    %v87 = vld [vmem:[#allocation2 + $0xb0] sm:$0xf]
    %v88 = vld [vmem:[#allocation2 + $0xb4] sm:$0xf]
    %v89 = vld [vmem:[#allocation2 + $0xb8] sm:$0xf]
    %v90 = vld [vmem:[#allocation2 + $0xbc] sm:$0xf]
    %v91 = vld [vmem:[#allocation2 + $0xc0] sm:$0xf]
    %v92 = vld [vmem:[#allocation2 + $0xc4] sm:$0xf]
    %v93 = vld [vmem:[#allocation2 + $0xc8] sm:$0xf]
    %v94 = vld [vmem:[#allocation2 + $0xcc] sm:$0xf]
    %v95 = vld [vmem:[#allocation2 + $0xd0] sm:$0xf]
    %v96 = vld [vmem:[#allocation2 + $0xd4] sm:$0xf]
    %v97 = vld [vmem:[#allocation2 + $0xd8] sm:$0xf]
    %v98 = vld [vmem:[#allocation2 + $0xdc] sm:$0xf]
    %v99 = vld [vmem:[#allocation2 + $0xe0] sm:$0xf]
    %v100 = vld [vmem:[#allocation2 + $0xe4] sm:$0xf]
    %v101 = vld [vmem:[#allocation2 + $0xe8] sm:$0xf]
    %v102 = vld [vmem:[#allocation2 + $0xec] sm:$0xf]
    %v103 = vld [vmem:[#allocation2 + $0xf0] sm:$0xf]
    %v104 = vld [vmem:[#allocation2 + $0xf4] sm:$0xf]
    %v105 = vld [vmem:[#allocation2 + $0xf8] sm:$0xf]
    %v106 = vld [vmem:[#allocation2 + $0xfc] sm:$0xf]
    %v107 = vld [vmem:[#allocation4] sm:$0xff]
    %v108 = vld [vmem:[#allocation4 + $0x8] sm:$0xf]
    %v109 = vld [vmem:[#allocation4 + $0xc] sm:$0xff]
    %v110 = vld [vmem:[#allocation4 + $0x14] sm:$0xf]
    %v111 = vld [vmem:[#allocation4 + $0x18] sm:$0xff]
    %v112 = vld [vmem:[#allocation4 + $0x20] sm:$0xf]
    %v113 = vld [vmem:[#allocation4 + $0x24] sm:$0xff]
    %v114 = vld [vmem:[#allocation4 + $0x2c] sm:$0xf]
    %v115 = vld [vmem:[#allocation4 + $0x30] sm:$0xff]
    %v116 = vld [vmem:[#allocation4 + $0x38] sm:$0xf]
    %v117 = vld [vmem:[#allocation4 + $0x3c] sm:$0xff]
    %v118 = vld [vmem:[#allocation4 + $0x44] sm:$0xf]
    %v119 = vld [vmem:[#allocation4 + $0x48] sm:$0xff]
    %v120 = vld [vmem:[#allocation4 + $0x50] sm:$0xf]
    %v121 = vld [vmem:[#allocation4 + $0x54] sm:$0xff]
    %v122 = vld [vmem:[#allocation4 + $0x5c] sm:$0xf]
    %v123 = vld [vmem:[#allocation4 + $0x60] sm:$0xff]
    %v124 = vld [vmem:[#allocation4 + $0x68] sm:$0xf]
    %v125 = vld [vmem:[#allocation4 + $0x6c] sm:$0xff]
    %v126 = vld [vmem:[#allocation4 + $0x74] sm:$0xf]
    %v127 = vld [vmem:[#allocation4 + $0x78] sm:$0xff]
    %v128 = vld [vmem:[#allocation4 + $0x80] sm:$0xf]
    %v129 = vld [vmem:[#allocation4 + $0x84] sm:$0xff]
    %v130 = vld [vmem:[#allocation4 + $0x8c] sm:$0xf]
    %v131 = vld [vmem:[#allocation4 + $0x90] sm:$0xff]
    %v132 = vld [vmem:[#allocation4 + $0x98] sm:$0xf]
    %v133 = vld [vmem:[#allocation4 + $0x9c] sm:$0xff]
    %v134 = vld [vmem:[#allocation4 + $0xa4] sm:$0xf]
    %v135 = vld [vmem:[#allocation4 + $0xa8] sm:$0xff]
    %v136 = vld [vmem:[#allocation4 + $0xb0] sm:$0xf]
    %v137 = vld [vmem:[#allocation4 + $0xb4] sm:$0xff]
    %v138 = vld [vmem:[#allocation4 + $0xbc] sm:$0xf]
    %v203 = vunpack.c.l.b16 %v43
    %v204 = vunpack.c.l.b16 %v44
    %v205 = vunpack.c.l.b16 %v45
    %v206 = vunpack.c.l.b16 %v46
    %v207 = vunpack.c.l.b16 %v47
    %v208 = vunpack.c.l.b16 %v48
    %v209 = vunpack.c.l.b16 %v49
    %v210 = vunpack.c.l.b16 %v50
    %v211 = vunpack.c.l.b16 %v51
    %v212 = vunpack.c.l.b16 %v52
    %v213 = vunpack.c.l.b16 %v53
    %v214 = vunpack.c.l.b16 %v54
    %v215 = vunpack.c.l.b16 %v55
    %v216 = vunpack.c.l.b16 %v56
    %v217 = vunpack.c.l.b16 %v57
    %v218 = vunpack.c.l.b16 %v58
    %v219 = vunpack.c.l.b16 %v59
    %v220 = vunpack.c.l.b16 %v60
    %v221 = vunpack.c.l.b16 %v61
    %v222 = vunpack.c.l.b16 %v62
    %v223 = vunpack.c.l.b16 %v63
    %v224 = vunpack.c.l.b16 %v64
    %v225 = vunpack.c.l.b16 %v65
    %v226 = vunpack.c.l.b16 %v66
    %v227 = vunpack.c.l.b16 %v67
    %v228 = vunpack.c.l.b16 %v68
    %v229 = vunpack.c.l.b16 %v69
    %v230 = vunpack.c.l.b16 %v70
    %v231 = vunpack.c.l.b16 %v71
    %v232 = vunpack.c.l.b16 %v72
    %v233 = vunpack.c.l.b16 %v73
    %v234 = vunpack.c.l.b16 %v74
    %v235 = vunpack.c.l.b16 %v75
    %v236 = vunpack.c.l.b16 %v76
    %v237 = vunpack.c.l.b16 %v77
    %v238 = vunpack.c.l.b16 %v78
    %v239 = vunpack.c.l.b16 %v79
    %v240 = vunpack.c.l.b16 %v80
    %v241 = vunpack.c.l.b16 %v81
    %v242 = vunpack.c.l.b16 %v82
    %v243 = vunpack.c.l.b16 %v83
    %v244 = vunpack.c.l.b16 %v84
    %v245 = vunpack.c.l.b16 %v85
    %v246 = vunpack.c.l.b16 %v86
    %v247 = vunpack.c.l.b16 %v87
    %v248 = vunpack.c.l.b16 %v88
    %v249 = vunpack.c.l.b16 %v89
    %v250 = vunpack.c.l.b16 %v90
    %v251 = vunpack.c.l.b16 %v91
    %v252 = vunpack.c.l.b16 %v92
    %v253 = vunpack.c.l.b16 %v93
    %v254 = vunpack.c.l.b16 %v94
    %v255 = vunpack.c.l.b16 %v95
    %v256 = vunpack.c.l.b16 %v96
    %v257 = vunpack.c.l.b16 %v97
    %v258 = vunpack.c.l.b16 %v98
    %v259 = vunpack.c.l.b16 %v99
    %v260 = vunpack.c.l.b16 %v100
    %v261 = vunpack.c.l.b16 %v101
    %v262 = vunpack.c.l.b16 %v102
    %v263 = vunpack.c.l.b16 %v103
    %v264 = vunpack.c.l.b16 %v104
    %v265 = vunpack.c.l.b16 %v105
    %v266 = vunpack.c.l.b16 %v106
    %v267 = vpack.c.b16 %v204, %v203
    %v268 = vpack.c.b16 %v206, %v205
    %v269 = vpack.c.b16 %v208, %v207
    %v270 = vpack.c.b16 %v210, %v209
    %v271 = vpack.c.b16 %v212, %v211
    %v272 = vpack.c.b16 %v214, %v213
    %v273 = vpack.c.b16 %v216, %v215
    %v274 = vpack.c.b16 %v218, %v217
    %v275 = vpack.c.b16 %v220, %v219
    %v276 = vpack.c.b16 %v222, %v221
    %v277 = vpack.c.b16 %v224, %v223
    %v278 = vpack.c.b16 %v226, %v225
    %v279 = vpack.c.b16 %v228, %v227
    %v280 = vpack.c.b16 %v230, %v229
    %v281 = vpack.c.b16 %v232, %v231
    %v282 = vpack.c.b16 %v234, %v233
    %v283 = vpack.c.b16 %v236, %v235
    %v284 = vpack.c.b16 %v238, %v237
    %v285 = vpack.c.b16 %v240, %v239
    %v286 = vpack.c.b16 %v242, %v241
    %v287 = vpack.c.b16 %v244, %v243
    %v288 = vpack.c.b16 %v246, %v245
    %v289 = vpack.c.b16 %v248, %v247
    %v290 = vpack.c.b16 %v250, %v249
    %v291 = vpack.c.b16 %v252, %v251
    %v292 = vpack.c.b16 %v254, %v253
    %v293 = vpack.c.b16 %v256, %v255
    %v294 = vpack.c.b16 %v258, %v257
    %v295 = vpack.c.b16 %v260, %v259
    %v296 = vpack.c.b16 %v262, %v261
    %v297 = vpack.c.b16 %v264, %v263
    %v298 = vpack.c.b16 %v266, %v265
    %v363 = vunpack.c.l.b16 %v107
    %v364 = vunpack.c.h.b16 %v107
    %v365 = vunpack.c.l.b16 %v108
    %v366 = vunpack.c.l.b16 %v109
    %v367 = vunpack.c.h.b16 %v109
    %v368 = vunpack.c.l.b16 %v110
    %v369 = vunpack.c.l.b16 %v111
    %v370 = vunpack.c.h.b16 %v111
    %v371 = vunpack.c.l.b16 %v112
    %v372 = vunpack.c.l.b16 %v113
    %v373 = vunpack.c.h.b16 %v113
    %v374 = vunpack.c.l.b16 %v114
    %v375 = vunpack.c.l.b16 %v115
    %v376 = vunpack.c.h.b16 %v115
    %v377 = vunpack.c.l.b16 %v116
    %v378 = vunpack.c.l.b16 %v117
    %v379 = vunpack.c.h.b16 %v117
    %v380 = vunpack.c.l.b16 %v118
    %v381 = vunpack.c.l.b16 %v119
    %v382 = vunpack.c.h.b16 %v119
    %v383 = vunpack.c.l.b16 %v120
    %v384 = vunpack.c.l.b16 %v121
    %v385 = vunpack.c.h.b16 %v121
    %v386 = vunpack.c.l.b16 %v122
    %v387 = vunpack.c.l.b16 %v123
    %v388 = vunpack.c.h.b16 %v123
    %v389 = vunpack.c.l.b16 %v124
    %v390 = vunpack.c.l.b16 %v125
    %v391 = vunpack.c.h.b16 %v125
    %v392 = vunpack.c.l.b16 %v126
    %v393 = vunpack.c.l.b16 %v127
    %v394 = vunpack.c.h.b16 %v127
    %v395 = vunpack.c.l.b16 %v128
    %v396 = vunpack.c.l.b16 %v129
    %v397 = vunpack.c.h.b16 %v129
    %v398 = vunpack.c.l.b16 %v130
    %v399 = vunpack.c.l.b16 %v131
    %v400 = vunpack.c.h.b16 %v131
    %v401 = vunpack.c.l.b16 %v132
    %v402 = vunpack.c.l.b16 %v133
    %v403 = vunpack.c.h.b16 %v133
    %v404 = vunpack.c.l.b16 %v134
    %v405 = vunpack.c.l.b16 %v135
    %v406 = vunpack.c.h.b16 %v135
    %v407 = vunpack.c.l.b16 %v136
    %v408 = vunpack.c.l.b16 %v137
    %v409 = vunpack.c.h.b16 %v137
    %v410 = vunpack.c.l.b16 %v138
    %v411 = vpack.c.b16 %v366, %v363
    %v412 = vpack.c.b16 %v367, %v364
    %v413 = vpack.c.b16 %v368, %v365
    %v414 = vpack.c.b16 %v372, %v369
    %v415 = vpack.c.b16 %v373, %v370
    %v416 = vpack.c.b16 %v374, %v371
    %v417 = vpack.c.b16 %v378, %v375
    %v418 = vpack.c.b16 %v379, %v376
    %v419 = vpack.c.b16 %v380, %v377
    %v420 = vpack.c.b16 %v384, %v381
    %v421 = vpack.c.b16 %v385, %v382
    %v422 = vpack.c.b16 %v386, %v383
    %v423 = vpack.c.b16 %v390, %v387
    %v424 = vpack.c.b16 %v391, %v388
    %v425 = vpack.c.b16 %v392, %v389
    %v426 = vpack.c.b16 %v396, %v393
    %v427 = vpack.c.b16 %v397, %v394
    %v428 = vpack.c.b16 %v398, %v395
    %v429 = vpack.c.b16 %v402, %v399
    %v430 = vpack.c.b16 %v403, %v400
    %v431 = vpack.c.b16 %v404, %v401
    %v432 = vpack.c.b16 %v408, %v405
    %v433 = vpack.c.b16 %v409, %v406
    %v434 = vpack.c.b16 %v410, %v407
    %459 = vmatpush.bf16.msra.mxu0 %v432
    %460 = vmatpush.bf16.msra.mxu0 %v429
    %461 = vmatpush.bf16.msra.mxu0 %v426
    %462 = vmatpush.bf16.msra.mxu0 %v423
    %463 = vmatpush.bf16.msra.mxu0 %v420
    %464 = vmatpush.bf16.msra.mxu0 %v417
    %465 = vmatpush.bf16.msra.mxu0 %v414
    %466 = vmatpush.bf16.msra.mxu0 %v411
    %467 = vmatmul.bf16.gmra.mxu0 %v267
    %v468 = vpop.f32.mrf.mxu0
    %v469 = vadd.f32 0.0, %v468
    %v470 = vpop.f32.mrf.mxu0
    %v471 = vadd.f32 0.0, %v470
    %472 = vmatmul.bf16.gmra.mxu0 %v268
    %v473 = vpop.f32.mrf.mxu0
    %v474 = vadd.f32 0.0, %v473
    %v475 = vpop.f32.mrf.mxu0
    %v476 = vadd.f32 0.0, %v475
    %477 = vmatmul.bf16.gmra.mxu0 %v269
    %v478 = vpop.f32.mrf.mxu0
    %v479 = vadd.f32 0.0, %v478
    %v480 = vpop.f32.mrf.mxu0
    %v481 = vadd.f32 0.0, %v480
    %482 = vmatmul.bf16.gmra.mxu0 %v270
    %v483 = vpop.f32.mrf.mxu0
    %v484 = vadd.f32 0.0, %v483
    %v485 = vpop.f32.mrf.mxu0
    %v486 = vadd.f32 0.0, %v485
    %487 = vmatmul.bf16.gmra.mxu0 %v271
    %v488 = vpop.f32.mrf.mxu0
    %v489 = vadd.f32 0.0, %v488
    %v490 = vpop.f32.mrf.mxu0
    %v491 = vadd.f32 0.0, %v490
    %492 = vmatmul.bf16.gmra.mxu0 %v272
    %v493 = vpop.f32.mrf.mxu0
    %v494 = vadd.f32 0.0, %v493
    %v495 = vpop.f32.mrf.mxu0
    %v496 = vadd.f32 0.0, %v495
    %497 = vmatmul.bf16.gmra.mxu0 %v273
    %v498 = vpop.f32.mrf.mxu0
    %v499 = vadd.f32 0.0, %v498
    %v500 = vpop.f32.mrf.mxu0
    %v501 = vadd.f32 0.0, %v500
    %502 = vmatmul.bf16.gmra.mxu0 %v274
    %v503 = vpop.f32.mrf.mxu0
    %v504 = vadd.f32 0.0, %v503
    %v505 = vpop.f32.mrf.mxu0
    %v506 = vadd.f32 0.0, %v505
    %507 = vmatmul.bf16.gmra.mxu0 %v275
    %v508 = vpop.f32.mrf.mxu0
    %v509 = vadd.f32 0.0, %v508
    %v510 = vpop.f32.mrf.mxu0
    %v511 = vadd.f32 0.0, %v510
    %512 = vmatmul.bf16.gmra.mxu0 %v276
    %v513 = vpop.f32.mrf.mxu0
    %v514 = vadd.f32 0.0, %v513
    %v515 = vpop.f32.mrf.mxu0
    %v516 = vadd.f32 0.0, %v515
    %517 = vmatmul.bf16.gmra.mxu0 %v277
    %v518 = vpop.f32.mrf.mxu0
    %v519 = vadd.f32 0.0, %v518
    %v520 = vpop.f32.mrf.mxu0
    %v521 = vadd.f32 0.0, %v520
    %522 = vmatmul.bf16.gmra.mxu0 %v278
    %v523 = vpop.f32.mrf.mxu0
    %v524 = vadd.f32 0.0, %v523
    %v525 = vpop.f32.mrf.mxu0
    %v526 = vadd.f32 0.0, %v525
    %527 = vmatmul.bf16.gmra.mxu0 %v279
    %v528 = vpop.f32.mrf.mxu0
    %v529 = vadd.f32 0.0, %v528
    %v530 = vpop.f32.mrf.mxu0
    %v531 = vadd.f32 0.0, %v530
    %532 = vmatmul.bf16.gmra.mxu0 %v280
    %v533 = vpop.f32.mrf.mxu0
    %v534 = vadd.f32 0.0, %v533
    %v535 = vpop.f32.mrf.mxu0
    %v536 = vadd.f32 0.0, %v535
    %537 = vmatmul.bf16.gmra.mxu0 %v281
    %v538 = vpop.f32.mrf.mxu0
    %v539 = vadd.f32 0.0, %v538
    %v540 = vpop.f32.mrf.mxu0
    %v541 = vadd.f32 0.0, %v540
    %542 = vmatmul.bf16.gmra.mxu0 %v282
    %v543 = vpop.f32.mrf.mxu0
    %v544 = vadd.f32 0.0, %v543
    %v545 = vpop.f32.mrf.mxu0
    %v546 = vadd.f32 0.0, %v545
    %547 = vmatmul.bf16.gmra.mxu0 %v283
    %v548 = vpop.f32.mrf.mxu0
    %v549 = vadd.f32 0.0, %v548
    %v550 = vpop.f32.mrf.mxu0
    %v551 = vadd.f32 0.0, %v550
    %552 = vmatmul.bf16.gmra.mxu0 %v284
    %v553 = vpop.f32.mrf.mxu0
    %v554 = vadd.f32 0.0, %v553
    %v555 = vpop.f32.mrf.mxu0
    %v556 = vadd.f32 0.0, %v555
    %557 = vmatmul.bf16.gmra.mxu0 %v285
    %v558 = vpop.f32.mrf.mxu0
    %v559 = vadd.f32 0.0, %v558
    %v560 = vpop.f32.mrf.mxu0
    %v561 = vadd.f32 0.0, %v560
    %562 = vmatmul.bf16.gmra.mxu0 %v286
    %v563 = vpop.f32.mrf.mxu0
    %v564 = vadd.f32 0.0, %v563
    %v565 = vpop.f32.mrf.mxu0
    %v566 = vadd.f32 0.0, %v565
    %567 = vmatmul.bf16.gmra.mxu0 %v287
    %v568 = vpop.f32.mrf.mxu0
    %v569 = vadd.f32 0.0, %v568
    %v570 = vpop.f32.mrf.mxu0
    %v571 = vadd.f32 0.0, %v570
    %572 = vmatmul.bf16.gmra.mxu0 %v288
    %v573 = vpop.f32.mrf.mxu0
    %v574 = vadd.f32 0.0, %v573
    %v575 = vpop.f32.mrf.mxu0
    %v576 = vadd.f32 0.0, %v575
    %577 = vmatmul.bf16.gmra.mxu0 %v289
    %v578 = vpop.f32.mrf.mxu0
    %v579 = vadd.f32 0.0, %v578
    %v580 = vpop.f32.mrf.mxu0
    %v581 = vadd.f32 0.0, %v580
    %582 = vmatmul.bf16.gmra.mxu0 %v290
    %v583 = vpop.f32.mrf.mxu0
    %v584 = vadd.f32 0.0, %v583
    %v585 = vpop.f32.mrf.mxu0
    %v586 = vadd.f32 0.0, %v585
    %587 = vmatmul.bf16.gmra.mxu0 %v291
    %v588 = vpop.f32.mrf.mxu0
    %v589 = vadd.f32 0.0, %v588
    %v590 = vpop.f32.mrf.mxu0
    %v591 = vadd.f32 0.0, %v590
    %592 = vmatmul.bf16.gmra.mxu0 %v292
    %v593 = vpop.f32.mrf.mxu0
    %v594 = vadd.f32 0.0, %v593
    %v595 = vpop.f32.mrf.mxu0
    %v596 = vadd.f32 0.0, %v595
    %597 = vmatmul.bf16.gmra.mxu0 %v293
    %v598 = vpop.f32.mrf.mxu0
    %v599 = vadd.f32 0.0, %v598
    %v600 = vpop.f32.mrf.mxu0
    %v601 = vadd.f32 0.0, %v600
    %602 = vmatmul.bf16.gmra.mxu0 %v294
    %v603 = vpop.f32.mrf.mxu0
    %v604 = vadd.f32 0.0, %v603
    %v605 = vpop.f32.mrf.mxu0
    %v606 = vadd.f32 0.0, %v605
    %607 = vmatmul.bf16.gmra.mxu0 %v295
    %v608 = vpop.f32.mrf.mxu0
    %v609 = vadd.f32 0.0, %v608
    %v610 = vpop.f32.mrf.mxu0
    %v611 = vadd.f32 0.0, %v610
    %612 = vmatmul.bf16.gmra.mxu0 %v296
    %v613 = vpop.f32.mrf.mxu0
    %v614 = vadd.f32 0.0, %v613
    %v615 = vpop.f32.mrf.mxu0
    %v616 = vadd.f32 0.0, %v615
    %617 = vmatmul.bf16.gmra.mxu0 %v297
    %v618 = vpop.f32.mrf.mxu0
    %v619 = vadd.f32 0.0, %v618
    %v620 = vpop.f32.mrf.mxu0
    %v621 = vadd.f32 0.0, %v620
    %622 = vmatmul.bf16.gmra.mxu0 %v298
    %v623 = vpop.f32.mrf.mxu0
    %v624 = vadd.f32 0.0, %v623
    %v625 = vpop.f32.mrf.mxu0
    %v626 = vadd.f32 0.0, %v625
    %627 = vdwg.mxu0
    %628 = vmatpush.bf16.msra.mxu0 %v433
    %629 = vmatpush.bf16.msra.mxu0 %v430
    %630 = vmatpush.bf16.msra.mxu0 %v427
    %631 = vmatpush.bf16.msra.mxu0 %v424
    %632 = vmatpush.bf16.msra.mxu0 %v421
    %633 = vmatpush.bf16.msra.mxu0 %v418
    %634 = vmatpush.bf16.msra.mxu0 %v415
    %635 = vmatpush.bf16.msra.mxu0 %v412
    %636 = vmatmul.bf16.gmra.mxu0 %v267
    %v637 = vpop.f32.mrf.mxu0
    %v638 = vadd.f32 0.0, %v637
    %v639 = vpop.f32.mrf.mxu0
    %v640 = vadd.f32 0.0, %v639
    %641 = vmatmul.bf16.gmra.mxu0 %v268
    %v642 = vpop.f32.mrf.mxu0
    %v643 = vadd.f32 0.0, %v642
    %v644 = vpop.f32.mrf.mxu0
    %v645 = vadd.f32 0.0, %v644
    %646 = vmatmul.bf16.gmra.mxu0 %v269
    %v647 = vpop.f32.mrf.mxu0
    %v648 = vadd.f32 0.0, %v647
    %v649 = vpop.f32.mrf.mxu0
    %v650 = vadd.f32 0.0, %v649
    %651 = vmatmul.bf16.gmra.mxu0 %v270
    %v652 = vpop.f32.mrf.mxu0
    %v653 = vadd.f32 0.0, %v652
    %v654 = vpop.f32.mrf.mxu0
    %v655 = vadd.f32 0.0, %v654
    %656 = vmatmul.bf16.gmra.mxu0 %v271
    %v657 = vpop.f32.mrf.mxu0
    %v658 = vadd.f32 0.0, %v657
    %v659 = vpop.f32.mrf.mxu0
    %v660 = vadd.f32 0.0, %v659
    %661 = vmatmul.bf16.gmra.mxu0 %v272
    %v662 = vpop.f32.mrf.mxu0
    %v663 = vadd.f32 0.0, %v662
    %v664 = vpop.f32.mrf.mxu0
    %v665 = vadd.f32 0.0, %v664
    %666 = vmatmul.bf16.gmra.mxu0 %v273
    %v667 = vpop.f32.mrf.mxu0
    %v668 = vadd.f32 0.0, %v667
    %v669 = vpop.f32.mrf.mxu0
    %v670 = vadd.f32 0.0, %v669
    %671 = vmatmul.bf16.gmra.mxu0 %v274
    %v672 = vpop.f32.mrf.mxu0
    %v673 = vadd.f32 0.0, %v672
    %v674 = vpop.f32.mrf.mxu0
    %v675 = vadd.f32 0.0, %v674
    %676 = vmatmul.bf16.gmra.mxu0 %v275
    %v677 = vpop.f32.mrf.mxu0
    %v678 = vadd.f32 0.0, %v677
    %v679 = vpop.f32.mrf.mxu0
    %v680 = vadd.f32 0.0, %v679
    %681 = vmatmul.bf16.gmra.mxu0 %v276
    %v682 = vpop.f32.mrf.mxu0
    %v683 = vadd.f32 0.0, %v682
    %v684 = vpop.f32.mrf.mxu0
    %v685 = vadd.f32 0.0, %v684
    %686 = vmatmul.bf16.gmra.mxu0 %v277
    %v687 = vpop.f32.mrf.mxu0
    %v688 = vadd.f32 0.0, %v687
    %v689 = vpop.f32.mrf.mxu0
    %v690 = vadd.f32 0.0, %v689
    %691 = vmatmul.bf16.gmra.mxu0 %v278
    %v692 = vpop.f32.mrf.mxu0
    %v693 = vadd.f32 0.0, %v692
    %v694 = vpop.f32.mrf.mxu0
    %v695 = vadd.f32 0.0, %v694
    %696 = vmatmul.bf16.gmra.mxu0 %v279
    %v697 = vpop.f32.mrf.mxu0
    %v698 = vadd.f32 0.0, %v697
    %v699 = vpop.f32.mrf.mxu0
    %v700 = vadd.f32 0.0, %v699
    %701 = vmatmul.bf16.gmra.mxu0 %v280
    %v702 = vpop.f32.mrf.mxu0
    %v703 = vadd.f32 0.0, %v702
    %v704 = vpop.f32.mrf.mxu0
    %v705 = vadd.f32 0.0, %v704
    %706 = vmatmul.bf16.gmra.mxu0 %v281
    %v707 = vpop.f32.mrf.mxu0
    %v708 = vadd.f32 0.0, %v707
    %v709 = vpop.f32.mrf.mxu0
    %v710 = vadd.f32 0.0, %v709
    %711 = vmatmul.bf16.gmra.mxu0 %v282
    %v712 = vpop.f32.mrf.mxu0
    %v713 = vadd.f32 0.0, %v712
    %v714 = vpop.f32.mrf.mxu0
    %v715 = vadd.f32 0.0, %v714
    %716 = vmatmul.bf16.gmra.mxu0 %v283
    %v717 = vpop.f32.mrf.mxu0
    %v718 = vadd.f32 0.0, %v717
    %v719 = vpop.f32.mrf.mxu0
    %v720 = vadd.f32 0.0, %v719
    %721 = vmatmul.bf16.gmra.mxu0 %v284
    %v722 = vpop.f32.mrf.mxu0
    %v723 = vadd.f32 0.0, %v722
    %v724 = vpop.f32.mrf.mxu0
    %v725 = vadd.f32 0.0, %v724
    %726 = vmatmul.bf16.gmra.mxu0 %v285
    %v727 = vpop.f32.mrf.mxu0
    %v728 = vadd.f32 0.0, %v727
    %v729 = vpop.f32.mrf.mxu0
    %v730 = vadd.f32 0.0, %v729
    %731 = vmatmul.bf16.gmra.mxu0 %v286
    %v732 = vpop.f32.mrf.mxu0
    %v733 = vadd.f32 0.0, %v732
    %v734 = vpop.f32.mrf.mxu0
    %v735 = vadd.f32 0.0, %v734
    %736 = vmatmul.bf16.gmra.mxu0 %v287
    %v737 = vpop.f32.mrf.mxu0
    %v738 = vadd.f32 0.0, %v737
    %v739 = vpop.f32.mrf.mxu0
    %v740 = vadd.f32 0.0, %v739
    %741 = vmatmul.bf16.gmra.mxu0 %v288
    %v742 = vpop.f32.mrf.mxu0
    %v743 = vadd.f32 0.0, %v742
    %v744 = vpop.f32.mrf.mxu0
    %v745 = vadd.f32 0.0, %v744
    %746 = vmatmul.bf16.gmra.mxu0 %v289
    %v747 = vpop.f32.mrf.mxu0
    %v748 = vadd.f32 0.0, %v747
    %v749 = vpop.f32.mrf.mxu0
    %v750 = vadd.f32 0.0, %v749
    %751 = vmatmul.bf16.gmra.mxu0 %v290
    %v752 = vpop.f32.mrf.mxu0
    %v753 = vadd.f32 0.0, %v752
    %v754 = vpop.f32.mrf.mxu0
    %v755 = vadd.f32 0.0, %v754
    %756 = vmatmul.bf16.gmra.mxu0 %v291
    %v757 = vpop.f32.mrf.mxu0
    %v758 = vadd.f32 0.0, %v757
    %v759 = vpop.f32.mrf.mxu0
    %v760 = vadd.f32 0.0, %v759
    %761 = vmatmul.bf16.gmra.mxu0 %v292
    %v762 = vpop.f32.mrf.mxu0
    %v763 = vadd.f32 0.0, %v762
    %v764 = vpop.f32.mrf.mxu0
    %v765 = vadd.f32 0.0, %v764
    %766 = vmatmul.bf16.gmra.mxu0 %v293
    %v767 = vpop.f32.mrf.mxu0
    %v768 = vadd.f32 0.0, %v767
    %v769 = vpop.f32.mrf.mxu0
    %v770 = vadd.f32 0.0, %v769
    %771 = vmatmul.bf16.gmra.mxu0 %v294
    %v772 = vpop.f32.mrf.mxu0
    %v773 = vadd.f32 0.0, %v772
    %v774 = vpop.f32.mrf.mxu0
    %v775 = vadd.f32 0.0, %v774
    %776 = vmatmul.bf16.gmra.mxu0 %v295
    %v777 = vpop.f32.mrf.mxu0
    %v778 = vadd.f32 0.0, %v777
    %v779 = vpop.f32.mrf.mxu0
    %v780 = vadd.f32 0.0, %v779
    %781 = vmatmul.bf16.gmra.mxu0 %v296
    %v782 = vpop.f32.mrf.mxu0
    %v783 = vadd.f32 0.0, %v782
    %v784 = vpop.f32.mrf.mxu0
    %v785 = vadd.f32 0.0, %v784
    %786 = vmatmul.bf16.gmra.mxu0 %v297
    %v787 = vpop.f32.mrf.mxu0
    %v788 = vadd.f32 0.0, %v787
    %v789 = vpop.f32.mrf.mxu0
    %v790 = vadd.f32 0.0, %v789
    %791 = vmatmul.bf16.gmra.mxu0 %v298
    %v792 = vpop.f32.mrf.mxu0
    %v793 = vadd.f32 0.0, %v792
    %v794 = vpop.f32.mrf.mxu0
    %v795 = vadd.f32 0.0, %v794
    %796 = vdwg.mxu0
    %797 = vmatpush.bf16.msra.mxu0 %v434
    %798 = vmatpush.bf16.msra.mxu0 %v431
    %799 = vmatpush.bf16.msra.mxu0 %v428
    %800 = vmatpush.bf16.msra.mxu0 %v425
    %801 = vmatpush.bf16.msra.mxu0 %v422
    %802 = vmatpush.bf16.msra.mxu0 %v419
    %803 = vmatpush.bf16.msra.mxu0 %v416
    %804 = vmatpush.bf16.msra.mxu0 %v413
    %805 = vmatmul.bf16.gmra.mxu0 %v267
    %v806 = vpop.f32.mrf.mxu0
    %v807 = vadd.f32 0.0, %v806
    %v808 = vpop.f32.mrf.mxu0
    %v809 = vadd.f32 0.0, %v808
    %810 = vmatmul.bf16.gmra.mxu0 %v268
    %v811 = vpop.f32.mrf.mxu0
    %v812 = vadd.f32 0.0, %v811
    %v813 = vpop.f32.mrf.mxu0
    %v814 = vadd.f32 0.0, %v813
    %815 = vmatmul.bf16.gmra.mxu0 %v269
    %v816 = vpop.f32.mrf.mxu0
    %v817 = vadd.f32 0.0, %v816
    %v818 = vpop.f32.mrf.mxu0
    %v819 = vadd.f32 0.0, %v818
    %820 = vmatmul.bf16.gmra.mxu0 %v270
    %v821 = vpop.f32.mrf.mxu0
    %v822 = vadd.f32 0.0, %v821
    %v823 = vpop.f32.mrf.mxu0
    %v824 = vadd.f32 0.0, %v823
    %825 = vmatmul.bf16.gmra.mxu0 %v271
    %v826 = vpop.f32.mrf.mxu0
    %v827 = vadd.f32 0.0, %v826
    %v828 = vpop.f32.mrf.mxu0
    %v829 = vadd.f32 0.0, %v828
    %830 = vmatmul.bf16.gmra.mxu0 %v272
    %v831 = vpop.f32.mrf.mxu0
    %v832 = vadd.f32 0.0, %v831
    %v833 = vpop.f32.mrf.mxu0
    %v834 = vadd.f32 0.0, %v833
    %835 = vmatmul.bf16.gmra.mxu0 %v273
    %v836 = vpop.f32.mrf.mxu0
    %v837 = vadd.f32 0.0, %v836
    %v838 = vpop.f32.mrf.mxu0
    %v839 = vadd.f32 0.0, %v838
    %840 = vmatmul.bf16.gmra.mxu0 %v274
    %v841 = vpop.f32.mrf.mxu0
    %v842 = vadd.f32 0.0, %v841
    %v843 = vpop.f32.mrf.mxu0
    %v844 = vadd.f32 0.0, %v843
    %845 = vmatmul.bf16.gmra.mxu0 %v275
    %v846 = vpop.f32.mrf.mxu0
    %v847 = vadd.f32 0.0, %v846
    %v848 = vpop.f32.mrf.mxu0
    %v849 = vadd.f32 0.0, %v848
    %850 = vmatmul.bf16.gmra.mxu0 %v276
    %v851 = vpop.f32.mrf.mxu0
    %v852 = vadd.f32 0.0, %v851
    %v853 = vpop.f32.mrf.mxu0
    %v854 = vadd.f32 0.0, %v853
    %855 = vmatmul.bf16.gmra.mxu0 %v277
    %v856 = vpop.f32.mrf.mxu0
    %v857 = vadd.f32 0.0, %v856
    %v858 = vpop.f32.mrf.mxu0
    %v859 = vadd.f32 0.0, %v858
    %860 = vmatmul.bf16.gmra.mxu0 %v278
    %v861 = vpop.f32.mrf.mxu0
    %v862 = vadd.f32 0.0, %v861
    %v863 = vpop.f32.mrf.mxu0
    %v864 = vadd.f32 0.0, %v863
    %865 = vmatmul.bf16.gmra.mxu0 %v279
    %v866 = vpop.f32.mrf.mxu0
    %v867 = vadd.f32 0.0, %v866
    %v868 = vpop.f32.mrf.mxu0
    %v869 = vadd.f32 0.0, %v868
    %870 = vmatmul.bf16.gmra.mxu0 %v280
    %v871 = vpop.f32.mrf.mxu0
    %v872 = vadd.f32 0.0, %v871
    %v873 = vpop.f32.mrf.mxu0
    %v874 = vadd.f32 0.0, %v873
    %875 = vmatmul.bf16.gmra.mxu0 %v281
    %v876 = vpop.f32.mrf.mxu0
    %v877 = vadd.f32 0.0, %v876
    %v878 = vpop.f32.mrf.mxu0
    %v879 = vadd.f32 0.0, %v878
    %880 = vmatmul.bf16.gmra.mxu0 %v282
    %v881 = vpop.f32.mrf.mxu0
    %v882 = vadd.f32 0.0, %v881
    %v883 = vpop.f32.mrf.mxu0
    %v884 = vadd.f32 0.0, %v883
    %885 = vmatmul.bf16.gmra.mxu0 %v283
    %v886 = vpop.f32.mrf.mxu0
    %v887 = vadd.f32 0.0, %v886
    %v888 = vpop.f32.mrf.mxu0
    %v889 = vadd.f32 0.0, %v888
    %890 = vmatmul.bf16.gmra.mxu0 %v284
    %v891 = vpop.f32.mrf.mxu0
    %v892 = vadd.f32 0.0, %v891
    %v893 = vpop.f32.mrf.mxu0
    %v894 = vadd.f32 0.0, %v893
    %895 = vmatmul.bf16.gmra.mxu0 %v285
    %v896 = vpop.f32.mrf.mxu0
    %v897 = vadd.f32 0.0, %v896
    %v898 = vpop.f32.mrf.mxu0
    %v899 = vadd.f32 0.0, %v898
    %900 = vmatmul.bf16.gmra.mxu0 %v286
    %v901 = vpop.f32.mrf.mxu0
    %v902 = vadd.f32 0.0, %v901
    %v903 = vpop.f32.mrf.mxu0
    %v904 = vadd.f32 0.0, %v903
    %905 = vmatmul.bf16.gmra.mxu0 %v287
    %v906 = vpop.f32.mrf.mxu0
    %v907 = vadd.f32 0.0, %v906
    %v908 = vpop.f32.mrf.mxu0
    %v909 = vadd.f32 0.0, %v908
    %910 = vmatmul.bf16.gmra.mxu0 %v288
    %v911 = vpop.f32.mrf.mxu0
    %v912 = vadd.f32 0.0, %v911
    %v913 = vpop.f32.mrf.mxu0
    %v914 = vadd.f32 0.0, %v913
    %915 = vmatmul.bf16.gmra.mxu0 %v289
    %v916 = vpop.f32.mrf.mxu0
    %v917 = vadd.f32 0.0, %v916
    %v918 = vpop.f32.mrf.mxu0
    %v919 = vadd.f32 0.0, %v918
    %920 = vmatmul.bf16.gmra.mxu0 %v290
    %v921 = vpop.f32.mrf.mxu0
    %v922 = vadd.f32 0.0, %v921
    %v923 = vpop.f32.mrf.mxu0
    %v924 = vadd.f32 0.0, %v923
    %925 = vmatmul.bf16.gmra.mxu0 %v291
    %v926 = vpop.f32.mrf.mxu0
    %v927 = vadd.f32 0.0, %v926
    %v928 = vpop.f32.mrf.mxu0
    %v929 = vadd.f32 0.0, %v928
    %930 = vmatmul.bf16.gmra.mxu0 %v292
    %v931 = vpop.f32.mrf.mxu0
    %v932 = vadd.f32 0.0, %v931
    %v933 = vpop.f32.mrf.mxu0
    %v934 = vadd.f32 0.0, %v933
    %935 = vmatmul.bf16.gmra.mxu0 %v293
    %v936 = vpop.f32.mrf.mxu0
    %v937 = vadd.f32 0.0, %v936
    %v938 = vpop.f32.mrf.mxu0
    %v939 = vadd.f32 0.0, %v938
    %940 = vmatmul.bf16.gmra.mxu0 %v294
    %v941 = vpop.f32.mrf.mxu0
    %v942 = vadd.f32 0.0, %v941
    %v943 = vpop.f32.mrf.mxu0
    %v944 = vadd.f32 0.0, %v943
    %945 = vmatmul.bf16.gmra.mxu0 %v295
    %v946 = vpop.f32.mrf.mxu0
    %v947 = vadd.f32 0.0, %v946
    %v948 = vpop.f32.mrf.mxu0
    %v949 = vadd.f32 0.0, %v948
    %950 = vmatmul.bf16.gmra.mxu0 %v296
    %v951 = vpop.f32.mrf.mxu0
    %v952 = vadd.f32 0.0, %v951
    %v953 = vpop.f32.mrf.mxu0
    %v954 = vadd.f32 0.0, %v953
    %955 = vmatmul.bf16.gmra.mxu0 %v297
    %v956 = vpop.f32.mrf.mxu0
    %v957 = vadd.f32 0.0, %v956
    %v958 = vpop.f32.mrf.mxu0
    %v959 = vadd.f32 0.0, %v958
    %960 = vmatmul.bf16.gmra.mxu0 %v298
    %v961 = vpop.f32.mrf.mxu0
    %v962 = vadd.f32 0.0, %v961
    %v963 = vpop.f32.mrf.mxu0
    %v964 = vadd.f32 0.0, %v963
    %965 = vdwg.mxu0
    %v966 = vpack.c.bf16 %v469, %v469
    %v967 = vpack.c.bf16 %v471, %v471
    %v968 = vpack.c.bf16 %v474, %v474
    %v969 = vpack.c.bf16 %v476, %v476
    %v970 = vpack.c.bf16 %v479, %v479
    %v971 = vpack.c.bf16 %v481, %v481
    %v972 = vpack.c.bf16 %v484, %v484
    %v973 = vpack.c.bf16 %v486, %v486
    %v974 = vpack.c.bf16 %v489, %v489
    %v975 = vpack.c.bf16 %v491, %v491
    %v976 = vpack.c.bf16 %v494, %v494
    %v977 = vpack.c.bf16 %v496, %v496
    %v978 = vpack.c.bf16 %v499, %v499
    %v979 = vpack.c.bf16 %v501, %v501
    %v980 = vpack.c.bf16 %v504, %v504
    %v981 = vpack.c.bf16 %v506, %v506
    %v982 = vpack.c.bf16 %v509, %v509
    %v983 = vpack.c.bf16 %v511, %v511
    %v984 = vpack.c.bf16 %v514, %v514
    %v985 = vpack.c.bf16 %v516, %v516
    %v986 = vpack.c.bf16 %v519, %v519
    %v987 = vpack.c.bf16 %v521, %v521
    %v988 = vpack.c.bf16 %v524, %v524
    %v989 = vpack.c.bf16 %v526, %v526
    %v990 = vpack.c.bf16 %v529, %v529
    %v991 = vpack.c.bf16 %v531, %v531
    %v992 = vpack.c.bf16 %v534, %v534
    %v993 = vpack.c.bf16 %v536, %v536
    %v994 = vpack.c.bf16 %v539, %v539
    %v995 = vpack.c.bf16 %v541, %v541
    %v996 = vpack.c.bf16 %v544, %v544
    %v997 = vpack.c.bf16 %v546, %v546
    %v998 = vpack.c.bf16 %v549, %v549
    %v999 = vpack.c.bf16 %v551, %v551
    %v1000 = vpack.c.bf16 %v554, %v554
    %v1001 = vpack.c.bf16 %v556, %v556
    %v1002 = vpack.c.bf16 %v559, %v559
    %v1003 = vpack.c.bf16 %v561, %v561
    %v1004 = vpack.c.bf16 %v564, %v564
    %v1005 = vpack.c.bf16 %v566, %v566
    %v1006 = vpack.c.bf16 %v569, %v569
    %v1007 = vpack.c.bf16 %v571, %v571
    %v1008 = vpack.c.bf16 %v574, %v574
    %v1009 = vpack.c.bf16 %v576, %v576
    %v1010 = vpack.c.bf16 %v579, %v579
    %v1011 = vpack.c.bf16 %v581, %v581
    %v1012 = vpack.c.bf16 %v584, %v584
    %v1013 = vpack.c.bf16 %v586, %v586
    %v1014 = vpack.c.bf16 %v589, %v589
    %v1015 = vpack.c.bf16 %v591, %v591
    %v1016 = vpack.c.bf16 %v594, %v594
    %v1017 = vpack.c.bf16 %v596, %v596
    %v1018 = vpack.c.bf16 %v599, %v599
    %v1019 = vpack.c.bf16 %v601, %v601
    %v1020 = vpack.c.bf16 %v604, %v604
    %v1021 = vpack.c.bf16 %v606, %v606
    %v1022 = vpack.c.bf16 %v609, %v609
    %v1023 = vpack.c.bf16 %v611, %v611
    %v1024 = vpack.c.bf16 %v614, %v614
    %v1025 = vpack.c.bf16 %v616, %v616
    %v1026 = vpack.c.bf16 %v619, %v619
    %v1027 = vpack.c.bf16 %v621, %v621
    %v1028 = vpack.c.bf16 %v624, %v624
    %v1029 = vpack.c.bf16 %v626, %v626
    %v1030 = vpack.c.bf16 %v638, %v638
    %v1031 = vpack.c.bf16 %v640, %v640
    %v1032 = vpack.c.bf16 %v643, %v643
    %v1033 = vpack.c.bf16 %v645, %v645
    %v1034 = vpack.c.bf16 %v648, %v648
    %v1035 = vpack.c.bf16 %v650, %v650
    %v1036 = vpack.c.bf16 %v653, %v653
    %v1037 = vpack.c.bf16 %v655, %v655
    %v1038 = vpack.c.bf16 %v658, %v658
    %v1039 = vpack.c.bf16 %v660, %v660
    %v1040 = vpack.c.bf16 %v663, %v663
    %v1041 = vpack.c.bf16 %v665, %v665
    %v1042 = vpack.c.bf16 %v668, %v668
    %v1043 = vpack.c.bf16 %v670, %v670
    %v1044 = vpack.c.bf16 %v673, %v673
    %v1045 = vpack.c.bf16 %v675, %v675
    %v1046 = vpack.c.bf16 %v678, %v678
    %v1047 = vpack.c.bf16 %v680, %v680
    %v1048 = vpack.c.bf16 %v683, %v683
    %v1049 = vpack.c.bf16 %v685, %v685
    %v1050 = vpack.c.bf16 %v688, %v688
    %v1051 = vpack.c.bf16 %v690, %v690
    %v1052 = vpack.c.bf16 %v693, %v693
    %v1053 = vpack.c.bf16 %v695, %v695
    %v1054 = vpack.c.bf16 %v698, %v698
    %v1055 = vpack.c.bf16 %v700, %v700
    %v1056 = vpack.c.bf16 %v703, %v703
    %v1057 = vpack.c.bf16 %v705, %v705
    %v1058 = vpack.c.bf16 %v708, %v708
    %v1059 = vpack.c.bf16 %v710, %v710
    %v1060 = vpack.c.bf16 %v713, %v713
    %v1061 = vpack.c.bf16 %v715, %v715
    %v1062 = vpack.c.bf16 %v718, %v718
    %v1063 = vpack.c.bf16 %v720, %v720
    %v1064 = vpack.c.bf16 %v723, %v723
    %v1065 = vpack.c.bf16 %v725, %v725
    %v1066 = vpack.c.bf16 %v728, %v728
    %v1067 = vpack.c.bf16 %v730, %v730
    %v1068 = vpack.c.bf16 %v733, %v733
    %v1069 = vpack.c.bf16 %v735, %v735
    %v1070 = vpack.c.bf16 %v738, %v738
    %v1071 = vpack.c.bf16 %v740, %v740
    %v1072 = vpack.c.bf16 %v743, %v743
    %v1073 = vpack.c.bf16 %v745, %v745
    %v1074 = vpack.c.bf16 %v748, %v748
    %v1075 = vpack.c.bf16 %v750, %v750
    %v1076 = vpack.c.bf16 %v753, %v753
    %v1077 = vpack.c.bf16 %v755, %v755
    %v1078 = vpack.c.bf16 %v758, %v758
    %v1079 = vpack.c.bf16 %v760, %v760
    %v1080 = vpack.c.bf16 %v763, %v763
    %v1081 = vpack.c.bf16 %v765, %v765
    %v1082 = vpack.c.bf16 %v768, %v768
    %v1083 = vpack.c.bf16 %v770, %v770
    %v1084 = vpack.c.bf16 %v773, %v773
    %v1085 = vpack.c.bf16 %v775, %v775
    %v1086 = vpack.c.bf16 %v778, %v778
    %v1087 = vpack.c.bf16 %v780, %v780
    %v1088 = vpack.c.bf16 %v783, %v783
    %v1089 = vpack.c.bf16 %v785, %v785
    %v1090 = vpack.c.bf16 %v788, %v788
    %v1091 = vpack.c.bf16 %v790, %v790
    %v1092 = vpack.c.bf16 %v793, %v793
    %v1093 = vpack.c.bf16 %v795, %v795
    %v1094 = vpack.c.bf16 %v807, %v807
    %v1095 = vpack.c.bf16 %v809, %v809
    %v1096 = vpack.c.bf16 %v812, %v812
    %v1097 = vpack.c.bf16 %v814, %v814
    %v1098 = vpack.c.bf16 %v817, %v817
    %v1099 = vpack.c.bf16 %v819, %v819
    %v1100 = vpack.c.bf16 %v822, %v822
    %v1101 = vpack.c.bf16 %v824, %v824
    %v1102 = vpack.c.bf16 %v827, %v827
    %v1103 = vpack.c.bf16 %v829, %v829
    %v1104 = vpack.c.bf16 %v832, %v832
    %v1105 = vpack.c.bf16 %v834, %v834
    %v1106 = vpack.c.bf16 %v837, %v837
    %v1107 = vpack.c.bf16 %v839, %v839
    %v1108 = vpack.c.bf16 %v842, %v842
    %v1109 = vpack.c.bf16 %v844, %v844
    %v1110 = vpack.c.bf16 %v847, %v847
    %v1111 = vpack.c.bf16 %v849, %v849
    %v1112 = vpack.c.bf16 %v852, %v852
    %v1113 = vpack.c.bf16 %v854, %v854
    %v1114 = vpack.c.bf16 %v857, %v857
    %v1115 = vpack.c.bf16 %v859, %v859
    %v1116 = vpack.c.bf16 %v862, %v862
    %v1117 = vpack.c.bf16 %v864, %v864
    %v1118 = vpack.c.bf16 %v867, %v867
    %v1119 = vpack.c.bf16 %v869, %v869
    %v1120 = vpack.c.bf16 %v872, %v872
    %v1121 = vpack.c.bf16 %v874, %v874
    %v1122 = vpack.c.bf16 %v877, %v877
    %v1123 = vpack.c.bf16 %v879, %v879
    %v1124 = vpack.c.bf16 %v882, %v882
    %v1125 = vpack.c.bf16 %v884, %v884
    %v1126 = vpack.c.bf16 %v887, %v887
    %v1127 = vpack.c.bf16 %v889, %v889
    %v1128 = vpack.c.bf16 %v892, %v892
    %v1129 = vpack.c.bf16 %v894, %v894
    %v1130 = vpack.c.bf16 %v897, %v897
    %v1131 = vpack.c.bf16 %v899, %v899
    %v1132 = vpack.c.bf16 %v902, %v902
    %v1133 = vpack.c.bf16 %v904, %v904
    %v1134 = vpack.c.bf16 %v907, %v907
    %v1135 = vpack.c.bf16 %v909, %v909
    %v1136 = vpack.c.bf16 %v912, %v912
    %v1137 = vpack.c.bf16 %v914, %v914
    %v1138 = vpack.c.bf16 %v917, %v917
    %v1139 = vpack.c.bf16 %v919, %v919
    %v1140 = vpack.c.bf16 %v922, %v922
    %v1141 = vpack.c.bf16 %v924, %v924
    %v1142 = vpack.c.bf16 %v927, %v927
    %v1143 = vpack.c.bf16 %v929, %v929
    %v1144 = vpack.c.bf16 %v932, %v932
    %v1145 = vpack.c.bf16 %v934, %v934
    %v1146 = vpack.c.bf16 %v937, %v937
    %v1147 = vpack.c.bf16 %v939, %v939
    %v1148 = vpack.c.bf16 %v942, %v942
    %v1149 = vpack.c.bf16 %v944, %v944
    %v1150 = vpack.c.bf16 %v947, %v947
    %v1151 = vpack.c.bf16 %v949, %v949
    %v1152 = vpack.c.bf16 %v952, %v952
    %v1153 = vpack.c.bf16 %v954, %v954
    %v1154 = vpack.c.bf16 %v957, %v957
    %v1155 = vpack.c.bf16 %v959, %v959
    %v1156 = vpack.c.bf16 %v962, %v962
    %v1157 = vpack.c.bf16 %v964, %v964
    %v1174 = vunpack.c.l.b16 %v1030
    %v1175 = vunpack.c.l.b16 %v1031
    %v1176 = vunpack.c.l.b16 %v1032
    %v1177 = vunpack.c.l.b16 %v1033
    %v1178 = vunpack.c.l.b16 %v1034
    %v1179 = vunpack.c.l.b16 %v1035
    %v1180 = vunpack.c.l.b16 %v1036
    %v1181 = vunpack.c.l.b16 %v1037
    %v1182 = vunpack.c.l.b16 %v1038
    %v1183 = vunpack.c.l.b16 %v1039
    %v1184 = vunpack.c.l.b16 %v1040
    %v1185 = vunpack.c.l.b16 %v1041
    %v1186 = vunpack.c.l.b16 %v1042
    %v1187 = vunpack.c.l.b16 %v1043
    %v1188 = vunpack.c.l.b16 %v1044
    %v1189 = vunpack.c.l.b16 %v1045
    %v1190 = vpack.c.b16 %v1175, %v1174
    %v1191 = vpack.c.b16 %v1177, %v1176
    %v1192 = vpack.c.b16 %v1179, %v1178
    %v1193 = vpack.c.b16 %v1181, %v1180
    %v1194 = vpack.c.b16 %v1183, %v1182
    %v1195 = vpack.c.b16 %v1185, %v1184
    %v1196 = vpack.c.b16 %v1187, %v1186
    %v1197 = vpack.c.b16 %v1189, %v1188
    %v1222 = vunpack.c.l.b16 %v966
    %v1223 = vunpack.c.l.b16 %v967
    %v1224 = vunpack.c.l.b16 %v968
    %v1225 = vunpack.c.l.b16 %v969
    %v1226 = vunpack.c.l.b16 %v970
    %v1227 = vunpack.c.l.b16 %v971
    %v1228 = vunpack.c.l.b16 %v972
    %v1229 = vunpack.c.l.b16 %v973
    %v1230 = vunpack.c.l.b16 %v974
    %v1231 = vunpack.c.l.b16 %v975
    %v1232 = vunpack.c.l.b16 %v976
    %v1233 = vunpack.c.l.b16 %v977
    %v1234 = vunpack.c.l.b16 %v978
    %v1235 = vunpack.c.l.b16 %v979
    %v1236 = vunpack.c.l.b16 %v980
    %v1237 = vunpack.c.l.b16 %v981
    %v1238 = vpack.c.b16 %v1223, %v1222
    %v1239 = vpack.c.b16 %v1225, %v1224
    %v1240 = vpack.c.b16 %v1227, %v1226
    %v1241 = vpack.c.b16 %v1229, %v1228
    %v1242 = vpack.c.b16 %v1231, %v1230
    %v1243 = vpack.c.b16 %v1233, %v1232
    %v1244 = vpack.c.b16 %v1235, %v1234
    %v1245 = vpack.c.b16 %v1237, %v1236
    %1254 = vmatpush.bf16.xpose.msra.mxu0 %v1245
    %1255 = vmatpush.bf16.xpose.msra.mxu0 %v1244
    %1256 = vmatpush.bf16.xpose.msra.mxu0 %v1243
    %1257 = vmatpush.bf16.xpose.msra.mxu0 %v1242
    %1258 = vmatpush.bf16.xpose.msra.mxu0 %v1241
    %1259 = vmatpush.bf16.xpose.msra.mxu0 %v1240
    %1260 = vmatpush.bf16.xpose.msra.mxu0 %v1239
    %1261 = vmatpush.bf16.xpose.msra.mxu0 %v1238
    %1262 = vmatmul.bf16.gmra.mxu0 %v1190
    %v1263 = vpop.f32.mrf.mxu0
    %v1264 = vadd.f32 0.0, %v1263
    %v1265 = vpop.f32.mrf.mxu0
    %v1266 = vadd.f32 0.0, %v1265
    %1267 = vmatmul.bf16.gmra.mxu0 %v1191
    %v1268 = vpop.f32.mrf.mxu0
    %v1269 = vadd.f32 0.0, %v1268
    %v1270 = vpop.f32.mrf.mxu0
    %v1271 = vadd.f32 0.0, %v1270
    %1272 = vmatmul.bf16.gmra.mxu0 %v1192
    %v1273 = vpop.f32.mrf.mxu0
    %v1274 = vadd.f32 0.0, %v1273
    %v1275 = vpop.f32.mrf.mxu0
    %v1276 = vadd.f32 0.0, %v1275
    %1277 = vmatmul.bf16.gmra.mxu0 %v1193
    %v1278 = vpop.f32.mrf.mxu0
    %v1279 = vadd.f32 0.0, %v1278
    %v1280 = vpop.f32.mrf.mxu0
    %v1281 = vadd.f32 0.0, %v1280
    %1282 = vmatmul.bf16.gmra.mxu0 %v1194
    %v1283 = vpop.f32.mrf.mxu0
    %v1284 = vadd.f32 0.0, %v1283
    %v1285 = vpop.f32.mrf.mxu0
    %v1286 = vadd.f32 0.0, %v1285
    %1287 = vmatmul.bf16.gmra.mxu0 %v1195
    %v1288 = vpop.f32.mrf.mxu0
    %v1289 = vadd.f32 0.0, %v1288
    %v1290 = vpop.f32.mrf.mxu0
    %v1291 = vadd.f32 0.0, %v1290
    %1292 = vmatmul.bf16.gmra.mxu0 %v1196
    %v1293 = vpop.f32.mrf.mxu0
    %v1294 = vadd.f32 0.0, %v1293
    %v1295 = vpop.f32.mrf.mxu0
    %v1296 = vadd.f32 0.0, %v1295
    %1297 = vmatmul.bf16.gmra.mxu0 %v1197
    %v1298 = vpop.f32.mrf.mxu0
    %v1299 = vadd.f32 0.0, %v1298
    %v1300 = vpop.f32.mrf.mxu0
    %v1301 = vadd.f32 0.0, %v1300
    %1302 = vdwg.mxu0
    %v1319 = vunpack.c.l.b16 %v1046
    %v1320 = vunpack.c.l.b16 %v1047
    %v1321 = vunpack.c.l.b16 %v1048
    %v1322 = vunpack.c.l.b16 %v1049
    %v1323 = vunpack.c.l.b16 %v1050
    %v1324 = vunpack.c.l.b16 %v1051
    %v1325 = vunpack.c.l.b16 %v1052
    %v1326 = vunpack.c.l.b16 %v1053
    %v1327 = vunpack.c.l.b16 %v1054
    %v1328 = vunpack.c.l.b16 %v1055
    %v1329 = vunpack.c.l.b16 %v1056
    %v1330 = vunpack.c.l.b16 %v1057
    %v1331 = vunpack.c.l.b16 %v1058
    %v1332 = vunpack.c.l.b16 %v1059
    %v1333 = vunpack.c.l.b16 %v1060
    %v1334 = vunpack.c.l.b16 %v1061
    %v1335 = vpack.c.b16 %v1320, %v1319
    %v1336 = vpack.c.b16 %v1322, %v1321
    %v1337 = vpack.c.b16 %v1324, %v1323
    %v1338 = vpack.c.b16 %v1326, %v1325
    %v1339 = vpack.c.b16 %v1328, %v1327
    %v1340 = vpack.c.b16 %v1330, %v1329
    %v1341 = vpack.c.b16 %v1332, %v1331
    %v1342 = vpack.c.b16 %v1334, %v1333
    %v1367 = vunpack.c.l.b16 %v982
    %v1368 = vunpack.c.l.b16 %v983
    %v1369 = vunpack.c.l.b16 %v984
    %v1370 = vunpack.c.l.b16 %v985
    %v1371 = vunpack.c.l.b16 %v986
    %v1372 = vunpack.c.l.b16 %v987
    %v1373 = vunpack.c.l.b16 %v988
    %v1374 = vunpack.c.l.b16 %v989
    %v1375 = vunpack.c.l.b16 %v990
    %v1376 = vunpack.c.l.b16 %v991
    %v1377 = vunpack.c.l.b16 %v992
    %v1378 = vunpack.c.l.b16 %v993
    %v1379 = vunpack.c.l.b16 %v994
    %v1380 = vunpack.c.l.b16 %v995
    %v1381 = vunpack.c.l.b16 %v996
    %v1382 = vunpack.c.l.b16 %v997
    %v1383 = vpack.c.b16 %v1368, %v1367
    %v1384 = vpack.c.b16 %v1370, %v1369
    %v1385 = vpack.c.b16 %v1372, %v1371
    %v1386 = vpack.c.b16 %v1374, %v1373
    %v1387 = vpack.c.b16 %v1376, %v1375
    %v1388 = vpack.c.b16 %v1378, %v1377
    %v1389 = vpack.c.b16 %v1380, %v1379
    %v1390 = vpack.c.b16 %v1382, %v1381
    %1399 = vmatpush.bf16.xpose.msra.mxu0 %v1390
    %1400 = vmatpush.bf16.xpose.msra.mxu0 %v1389
    %1401 = vmatpush.bf16.xpose.msra.mxu0 %v1388
    %1402 = vmatpush.bf16.xpose.msra.mxu0 %v1387
    %1403 = vmatpush.bf16.xpose.msra.mxu0 %v1386
    %1404 = vmatpush.bf16.xpose.msra.mxu0 %v1385
    %1405 = vmatpush.bf16.xpose.msra.mxu0 %v1384
    %1406 = vmatpush.bf16.xpose.msra.mxu0 %v1383
    %1407 = vmatmul.bf16.gmra.mxu0 %v1335
    %v1408 = vpop.f32.mrf.mxu0
    %v1409 = vadd.f32 0.0, %v1408
    %v1410 = vpop.f32.mrf.mxu0
    %v1411 = vadd.f32 0.0, %v1410
    %1412 = vmatmul.bf16.gmra.mxu0 %v1336
    %v1413 = vpop.f32.mrf.mxu0
    %v1414 = vadd.f32 0.0, %v1413
    %v1415 = vpop.f32.mrf.mxu0
    %v1416 = vadd.f32 0.0, %v1415
    %1417 = vmatmul.bf16.gmra.mxu0 %v1337
    %v1418 = vpop.f32.mrf.mxu0
    %v1419 = vadd.f32 0.0, %v1418
    %v1420 = vpop.f32.mrf.mxu0
    %v1421 = vadd.f32 0.0, %v1420
    %1422 = vmatmul.bf16.gmra.mxu0 %v1338
    %v1423 = vpop.f32.mrf.mxu0
    %v1424 = vadd.f32 0.0, %v1423
    %v1425 = vpop.f32.mrf.mxu0
    %v1426 = vadd.f32 0.0, %v1425
    %1427 = vmatmul.bf16.gmra.mxu0 %v1339
    %v1428 = vpop.f32.mrf.mxu0
    %v1429 = vadd.f32 0.0, %v1428
    %v1430 = vpop.f32.mrf.mxu0
    %v1431 = vadd.f32 0.0, %v1430
    %1432 = vmatmul.bf16.gmra.mxu0 %v1340
    %v1433 = vpop.f32.mrf.mxu0
    %v1434 = vadd.f32 0.0, %v1433
    %v1435 = vpop.f32.mrf.mxu0
    %v1436 = vadd.f32 0.0, %v1435
    %1437 = vmatmul.bf16.gmra.mxu0 %v1341
    %v1438 = vpop.f32.mrf.mxu0
    %v1439 = vadd.f32 0.0, %v1438
    %v1440 = vpop.f32.mrf.mxu0
    %v1441 = vadd.f32 0.0, %v1440
    %1442 = vmatmul.bf16.gmra.mxu0 %v1342
    %v1443 = vpop.f32.mrf.mxu0
    %v1444 = vadd.f32 0.0, %v1443
    %v1445 = vpop.f32.mrf.mxu0
    %v1446 = vadd.f32 0.0, %v1445
    %1447 = vdwg.mxu0
    %v1464 = vunpack.c.l.b16 %v1062
    %v1465 = vunpack.c.l.b16 %v1063
    %v1466 = vunpack.c.l.b16 %v1064
    %v1467 = vunpack.c.l.b16 %v1065
    %v1468 = vunpack.c.l.b16 %v1066
    %v1469 = vunpack.c.l.b16 %v1067
    %v1470 = vunpack.c.l.b16 %v1068
    %v1471 = vunpack.c.l.b16 %v1069
    %v1472 = vunpack.c.l.b16 %v1070
    %v1473 = vunpack.c.l.b16 %v1071
    %v1474 = vunpack.c.l.b16 %v1072
    %v1475 = vunpack.c.l.b16 %v1073
    %v1476 = vunpack.c.l.b16 %v1074
    %v1477 = vunpack.c.l.b16 %v1075
    %v1478 = vunpack.c.l.b16 %v1076
    %v1479 = vunpack.c.l.b16 %v1077
    %v1480 = vpack.c.b16 %v1465, %v1464
    %v1481 = vpack.c.b16 %v1467, %v1466
    %v1482 = vpack.c.b16 %v1469, %v1468
    %v1483 = vpack.c.b16 %v1471, %v1470
    %v1484 = vpack.c.b16 %v1473, %v1472
    %v1485 = vpack.c.b16 %v1475, %v1474
    %v1486 = vpack.c.b16 %v1477, %v1476
    %v1487 = vpack.c.b16 %v1479, %v1478
    %v1512 = vunpack.c.l.b16 %v998
    %v1513 = vunpack.c.l.b16 %v999
    %v1514 = vunpack.c.l.b16 %v1000
    %v1515 = vunpack.c.l.b16 %v1001
    %v1516 = vunpack.c.l.b16 %v1002
    %v1517 = vunpack.c.l.b16 %v1003
    %v1518 = vunpack.c.l.b16 %v1004
    %v1519 = vunpack.c.l.b16 %v1005
    %v1520 = vunpack.c.l.b16 %v1006
    %v1521 = vunpack.c.l.b16 %v1007
    %v1522 = vunpack.c.l.b16 %v1008
    %v1523 = vunpack.c.l.b16 %v1009
    %v1524 = vunpack.c.l.b16 %v1010
    %v1525 = vunpack.c.l.b16 %v1011
    %v1526 = vunpack.c.l.b16 %v1012
    %v1527 = vunpack.c.l.b16 %v1013
    %v1528 = vpack.c.b16 %v1513, %v1512
    %v1529 = vpack.c.b16 %v1515, %v1514
    %v1530 = vpack.c.b16 %v1517, %v1516
    %v1531 = vpack.c.b16 %v1519, %v1518
    %v1532 = vpack.c.b16 %v1521, %v1520
    %v1533 = vpack.c.b16 %v1523, %v1522
    %v1534 = vpack.c.b16 %v1525, %v1524
    %v1535 = vpack.c.b16 %v1527, %v1526
    %1544 = vmatpush.bf16.xpose.msra.mxu0 %v1535
    %1545 = vmatpush.bf16.xpose.msra.mxu0 %v1534
    %1546 = vmatpush.bf16.xpose.msra.mxu0 %v1533
    %1547 = vmatpush.bf16.xpose.msra.mxu0 %v1532
    %1548 = vmatpush.bf16.xpose.msra.mxu0 %v1531
    %1549 = vmatpush.bf16.xpose.msra.mxu0 %v1530
    %1550 = vmatpush.bf16.xpose.msra.mxu0 %v1529
    %1551 = vmatpush.bf16.xpose.msra.mxu0 %v1528
    %1552 = vmatmul.bf16.gmra.mxu0 %v1480
    %v1553 = vpop.f32.mrf.mxu0
    %v1554 = vadd.f32 0.0, %v1553
    %v1555 = vpop.f32.mrf.mxu0
    %v1556 = vadd.f32 0.0, %v1555
    %1557 = vmatmul.bf16.gmra.mxu0 %v1481
    %v1558 = vpop.f32.mrf.mxu0
    %v1559 = vadd.f32 0.0, %v1558
    %v1560 = vpop.f32.mrf.mxu0
    %v1561 = vadd.f32 0.0, %v1560
    %1562 = vmatmul.bf16.gmra.mxu0 %v1482
    %v1563 = vpop.f32.mrf.mxu0
    %v1564 = vadd.f32 0.0, %v1563
    %v1565 = vpop.f32.mrf.mxu0
    %v1566 = vadd.f32 0.0, %v1565
    %1567 = vmatmul.bf16.gmra.mxu0 %v1483
    %v1568 = vpop.f32.mrf.mxu0
    %v1569 = vadd.f32 0.0, %v1568
    %v1570 = vpop.f32.mrf.mxu0
    %v1571 = vadd.f32 0.0, %v1570
    %1572 = vmatmul.bf16.gmra.mxu0 %v1484
    %v1573 = vpop.f32.mrf.mxu0
    %v1574 = vadd.f32 0.0, %v1573
    %v1575 = vpop.f32.mrf.mxu0
    %v1576 = vadd.f32 0.0, %v1575
    %1577 = vmatmul.bf16.gmra.mxu0 %v1485
    %v1578 = vpop.f32.mrf.mxu0
    %v1579 = vadd.f32 0.0, %v1578
    %v1580 = vpop.f32.mrf.mxu0
    %v1581 = vadd.f32 0.0, %v1580
    %1582 = vmatmul.bf16.gmra.mxu0 %v1486
    %v1583 = vpop.f32.mrf.mxu0
    %v1584 = vadd.f32 0.0, %v1583
    %v1585 = vpop.f32.mrf.mxu0
    %v1586 = vadd.f32 0.0, %v1585
    %1587 = vmatmul.bf16.gmra.mxu0 %v1487
    %v1588 = vpop.f32.mrf.mxu0
    %v1589 = vadd.f32 0.0, %v1588
    %v1590 = vpop.f32.mrf.mxu0
    %v1591 = vadd.f32 0.0, %v1590
    %1592 = vdwg.mxu0
    %v1609 = vunpack.c.l.b16 %v1078
    %v1610 = vunpack.c.l.b16 %v1079
    %v1611 = vunpack.c.l.b16 %v1080
    %v1612 = vunpack.c.l.b16 %v1081
    %v1613 = vunpack.c.l.b16 %v1082
    %v1614 = vunpack.c.l.b16 %v1083
    %v1615 = vunpack.c.l.b16 %v1084
    %v1616 = vunpack.c.l.b16 %v1085
    %v1617 = vunpack.c.l.b16 %v1086
    %v1618 = vunpack.c.l.b16 %v1087
    %v1619 = vunpack.c.l.b16 %v1088
    %v1620 = vunpack.c.l.b16 %v1089
    %v1621 = vunpack.c.l.b16 %v1090
    %v1622 = vunpack.c.l.b16 %v1091
    %v1623 = vunpack.c.l.b16 %v1092
    %v1624 = vunpack.c.l.b16 %v1093
    %v1625 = vpack.c.b16 %v1610, %v1609
    %v1626 = vpack.c.b16 %v1612, %v1611
    %v1627 = vpack.c.b16 %v1614, %v1613
    %v1628 = vpack.c.b16 %v1616, %v1615
    %v1629 = vpack.c.b16 %v1618, %v1617
    %v1630 = vpack.c.b16 %v1620, %v1619
    %v1631 = vpack.c.b16 %v1622, %v1621
    %v1632 = vpack.c.b16 %v1624, %v1623
    %v1657 = vunpack.c.l.b16 %v1014
    %v1658 = vunpack.c.l.b16 %v1015
    %v1659 = vunpack.c.l.b16 %v1016
    %v1660 = vunpack.c.l.b16 %v1017
    %v1661 = vunpack.c.l.b16 %v1018
    %v1662 = vunpack.c.l.b16 %v1019
    %v1663 = vunpack.c.l.b16 %v1020
    %v1664 = vunpack.c.l.b16 %v1021
    %v1665 = vunpack.c.l.b16 %v1022
    %v1666 = vunpack.c.l.b16 %v1023
    %v1667 = vunpack.c.l.b16 %v1024
    %v1668 = vunpack.c.l.b16 %v1025
    %v1669 = vunpack.c.l.b16 %v1026
    %v1670 = vunpack.c.l.b16 %v1027
    %v1671 = vunpack.c.l.b16 %v1028
    %v1672 = vunpack.c.l.b16 %v1029
    %v1673 = vpack.c.b16 %v1658, %v1657
    %v1674 = vpack.c.b16 %v1660, %v1659
    %v1675 = vpack.c.b16 %v1662, %v1661
    %v1676 = vpack.c.b16 %v1664, %v1663
    %v1677 = vpack.c.b16 %v1666, %v1665
    %v1678 = vpack.c.b16 %v1668, %v1667
    %v1679 = vpack.c.b16 %v1670, %v1669
    %v1680 = vpack.c.b16 %v1672, %v1671
    %1689 = vmatpush.bf16.xpose.msra.mxu0 %v1680
    %1690 = vmatpush.bf16.xpose.msra.mxu0 %v1679
    %1691 = vmatpush.bf16.xpose.msra.mxu0 %v1678
    %1692 = vmatpush.bf16.xpose.msra.mxu0 %v1677
    %1693 = vmatpush.bf16.xpose.msra.mxu0 %v1676
    %1694 = vmatpush.bf16.xpose.msra.mxu0 %v1675
    %1695 = vmatpush.bf16.xpose.msra.mxu0 %v1674
    %1696 = vmatpush.bf16.xpose.msra.mxu0 %v1673
    %1697 = vmatmul.bf16.gmra.mxu0 %v1625
    %v1698 = vpop.f32.mrf.mxu0
    %v1699 = vadd.f32 0.0, %v1698
    %v1700 = vpop.f32.mrf.mxu0
    %v1701 = vadd.f32 0.0, %v1700
    %1702 = vmatmul.bf16.gmra.mxu0 %v1626
    %v1703 = vpop.f32.mrf.mxu0
    %v1704 = vadd.f32 0.0, %v1703
    %v1705 = vpop.f32.mrf.mxu0
    %v1706 = vadd.f32 0.0, %v1705
    %1707 = vmatmul.bf16.gmra.mxu0 %v1627
    %v1708 = vpop.f32.mrf.mxu0
    %v1709 = vadd.f32 0.0, %v1708
    %v1710 = vpop.f32.mrf.mxu0
    %v1711 = vadd.f32 0.0, %v1710
    %1712 = vmatmul.bf16.gmra.mxu0 %v1628
    %v1713 = vpop.f32.mrf.mxu0
    %v1714 = vadd.f32 0.0, %v1713
    %v1715 = vpop.f32.mrf.mxu0
    %v1716 = vadd.f32 0.0, %v1715
    %1717 = vmatmul.bf16.gmra.mxu0 %v1629
    %v1718 = vpop.f32.mrf.mxu0
    %v1719 = vadd.f32 0.0, %v1718
    %v1720 = vpop.f32.mrf.mxu0
    %v1721 = vadd.f32 0.0, %v1720
    %1722 = vmatmul.bf16.gmra.mxu0 %v1630
    %v1723 = vpop.f32.mrf.mxu0
    %v1724 = vadd.f32 0.0, %v1723
    %v1725 = vpop.f32.mrf.mxu0
    %v1726 = vadd.f32 0.0, %v1725
    %1727 = vmatmul.bf16.gmra.mxu0 %v1631
    %v1728 = vpop.f32.mrf.mxu0
    %v1729 = vadd.f32 0.0, %v1728
    %v1730 = vpop.f32.mrf.mxu0
    %v1731 = vadd.f32 0.0, %v1730
    %1732 = vmatmul.bf16.gmra.mxu0 %v1632
    %v1733 = vpop.f32.mrf.mxu0
    %v1734 = vadd.f32 0.0, %v1733
    %v1735 = vpop.f32.mrf.mxu0
    %v1736 = vadd.f32 0.0, %v1735
    %1737 = vdwg.mxu0
    %v1738 = vlaneseq
    %v1739 = vshrl.u32 %v1738, 7
    %v1740 = vadd.s32 %v1739, 8
    %v1741 = vadd.s32 %v1739, 16
    %v1742 = vadd.s32 %v1739, 24
    %v1743 = vadd.s32 %v1739, 32
    %v1744 = vadd.s32 %v1739, 40
    %v1745 = vadd.s32 %v1739, 48
    %v1746 = vadd.s32 %v1739, 56
    %v1747 = vadd.s32 %v1739, 64
    %v1748 = vadd.s32 %v1739, 72
    %v1749 = vadd.s32 %v1739, 80
    %v1750 = vadd.s32 %v1739, 88
    %v1751 = vadd.s32 %v1739, 96
    %v1752 = vadd.s32 %v1739, 104
    %v1753 = vadd.s32 %v1739, 112
    %v1754 = vadd.s32 %v1739, 120
    %v1755 = vlaneseq
    %v1756 = vand.u32 %v1755, 127
    %vm1757 = vcmp.le.s32.totalorder %v1756, %v1739
    %vm1758 = vcmp.le.s32.totalorder %v1756, %v1740
    %vm1759 = vcmp.le.s32.totalorder %v1756, %v1741
    %vm1760 = vcmp.le.s32.totalorder %v1756, %v1742
    %vm1761 = vcmp.le.s32.totalorder %v1756, %v1743
    %vm1762 = vcmp.le.s32.totalorder %v1756, %v1744
    %vm1763 = vcmp.le.s32.totalorder %v1756, %v1745
    %vm1764 = vcmp.le.s32.totalorder %v1756, %v1746
    %vm1765 = vcmp.le.s32.totalorder %v1756, %v1747
    %vm1766 = vcmp.le.s32.totalorder %v1756, %v1748
    %vm1767 = vcmp.le.s32.totalorder %v1756, %v1749
    %vm1768 = vcmp.le.s32.totalorder %v1756, %v1750
    %vm1769 = vcmp.le.s32.totalorder %v1756, %v1751
    %vm1770 = vcmp.le.s32.totalorder %v1756, %v1752
    %vm1771 = vcmp.le.s32.totalorder %v1756, %v1753
    %vm1772 = vcmp.le.s32.totalorder %v1756, %v1754
    %v1773 = vsel %vm1757, 1, 0
    %v1774 = vsel %vm1758, 1, 0
    %v1775 = vsel %vm1759, 1, 0
    %v1776 = vsel %vm1760, 1, 0
    %v1777 = vsel %vm1761, 1, 0
    %v1778 = vsel %vm1762, 1, 0
    %v1779 = vsel %vm1763, 1, 0
    %v1780 = vsel %vm1764, 1, 0
    %v1781 = vsel %vm1765, 1, 0
    %v1782 = vsel %vm1766, 1, 0
    %v1783 = vsel %vm1767, 1, 0
    %v1784 = vsel %vm1768, 1, 0
    %v1785 = vsel %vm1769, 1, 0
    %v1786 = vsel %vm1770, 1, 0
    %v1787 = vsel %vm1771, 1, 0
    %v1788 = vsel %vm1772, 1, 0
    %vm1789 = vcmp.eq.s32.totalorder %v1773, 1
    %vm1790 = vcmp.eq.s32.totalorder %v1774, 1
    %vm1791 = vcmp.eq.s32.totalorder %v1775, 1
    %vm1792 = vcmp.eq.s32.totalorder %v1776, 1
    %vm1793 = vcmp.eq.s32.totalorder %v1777, 1
    %vm1794 = vcmp.eq.s32.totalorder %v1778, 1
    %vm1795 = vcmp.eq.s32.totalorder %v1779, 1
    %vm1796 = vcmp.eq.s32.totalorder %v1780, 1
    %vm1797 = vcmp.eq.s32.totalorder %v1781, 1
    %vm1798 = vcmp.eq.s32.totalorder %v1782, 1
    %vm1799 = vcmp.eq.s32.totalorder %v1783, 1
    %vm1800 = vcmp.eq.s32.totalorder %v1784, 1
    %vm1801 = vcmp.eq.s32.totalorder %v1785, 1
    %vm1802 = vcmp.eq.s32.totalorder %v1786, 1
    %vm1803 = vcmp.eq.s32.totalorder %v1787, 1
    %vm1804 = vcmp.eq.s32.totalorder %v1788, 1
    %v1805 = vsel %vm1789, %v1264, -inf
    %v1806 = vsel %vm1790, %v1266, -inf
    %v1807 = vsel %vm1791, %v1269, -inf
    %v1808 = vsel %vm1792, %v1271, -inf
    %v1809 = vsel %vm1793, %v1274, -inf
    %v1810 = vsel %vm1794, %v1276, -inf
    %v1811 = vsel %vm1795, %v1279, -inf
    %v1812 = vsel %vm1796, %v1281, -inf
    %v1813 = vsel %vm1797, %v1284, -inf
    %v1814 = vsel %vm1798, %v1286, -inf
    %v1815 = vsel %vm1799, %v1289, -inf
    %v1816 = vsel %vm1800, %v1291, -inf
    %v1817 = vsel %vm1801, %v1294, -inf
    %v1818 = vsel %vm1802, %v1296, -inf
    %v1819 = vsel %vm1803, %v1299, -inf
    %v1820 = vsel %vm1804, %v1301, -inf
    %v1821 = vsel %vm1789, %v1409, -inf
    %v1822 = vsel %vm1790, %v1411, -inf
    %v1823 = vsel %vm1791, %v1414, -inf
    %v1824 = vsel %vm1792, %v1416, -inf
    %v1825 = vsel %vm1793, %v1419, -inf
    %v1826 = vsel %vm1794, %v1421, -inf
    %v1827 = vsel %vm1795, %v1424, -inf
    %v1828 = vsel %vm1796, %v1426, -inf
    %v1829 = vsel %vm1797, %v1429, -inf
    %v1830 = vsel %vm1798, %v1431, -inf
    %v1831 = vsel %vm1799, %v1434, -inf
    %v1832 = vsel %vm1800, %v1436, -inf
    %v1833 = vsel %vm1801, %v1439, -inf
    %v1834 = vsel %vm1802, %v1441, -inf
    %v1835 = vsel %vm1803, %v1444, -inf
    %v1836 = vsel %vm1804, %v1446, -inf
    %v1837 = vsel %vm1789, %v1554, -inf
    %v1838 = vsel %vm1790, %v1556, -inf
    %v1839 = vsel %vm1791, %v1559, -inf
    %v1840 = vsel %vm1792, %v1561, -inf
    %v1841 = vsel %vm1793, %v1564, -inf
    %v1842 = vsel %vm1794, %v1566, -inf
    %v1843 = vsel %vm1795, %v1569, -inf
    %v1844 = vsel %vm1796, %v1571, -inf
    %v1845 = vsel %vm1797, %v1574, -inf
    %v1846 = vsel %vm1798, %v1576, -inf
    %v1847 = vsel %vm1799, %v1579, -inf
    %v1848 = vsel %vm1800, %v1581, -inf
    %v1849 = vsel %vm1801, %v1584, -inf
    %v1850 = vsel %vm1802, %v1586, -inf
    %v1851 = vsel %vm1803, %v1589, -inf
    %v1852 = vsel %vm1804, %v1591, -inf
    %v1853 = vsel %vm1789, %v1699, -inf
    %v1854 = vsel %vm1790, %v1701, -inf
    %v1855 = vsel %vm1791, %v1704, -inf
    %v1856 = vsel %vm1792, %v1706, -inf
    %v1857 = vsel %vm1793, %v1709, -inf
    %v1858 = vsel %vm1794, %v1711, -inf
    %v1859 = vsel %vm1795, %v1714, -inf
    %v1860 = vsel %vm1796, %v1716, -inf
    %v1861 = vsel %vm1797, %v1719, -inf
    %v1862 = vsel %vm1798, %v1721, -inf
    %v1863 = vsel %vm1799, %v1724, -inf
    %v1864 = vsel %vm1800, %v1726, -inf
    %v1865 = vsel %vm1801, %v1729, -inf
    %v1866 = vsel %vm1802, %v1731, -inf
    %v1867 = vsel %vm1803, %v1734, -inf
    %v1868 = vsel %vm1804, %v1736, -inf
    %1869 = vmax.xlane.f32.xlu0 %v1805
    %v1870 = vpop.xlane.xlu0 %1869
    %1871 = vmax.xlane.f32.xlu0 %v1806
    %v1872 = vpop.xlane.xlu0 %1871
    %1873 = vmax.xlane.f32.xlu0 %v1807
    %v1874 = vpop.xlane.xlu0 %1873
    %1875 = vmax.xlane.f32.xlu0 %v1808
    %v1876 = vpop.xlane.xlu0 %1875
    %1877 = vmax.xlane.f32.xlu0 %v1809
    %v1878 = vpop.xlane.xlu0 %1877
    %1879 = vmax.xlane.f32.xlu0 %v1810
    %v1880 = vpop.xlane.xlu0 %1879
    %1881 = vmax.xlane.f32.xlu0 %v1811
    %v1882 = vpop.xlane.xlu0 %1881
    %1883 = vmax.xlane.f32.xlu0 %v1812
    %v1884 = vpop.xlane.xlu0 %1883
    %1885 = vmax.xlane.f32.xlu0 %v1813
    %v1886 = vpop.xlane.xlu0 %1885
    %1887 = vmax.xlane.f32.xlu0 %v1814
    %v1888 = vpop.xlane.xlu0 %1887
    %1889 = vmax.xlane.f32.xlu0 %v1815
    %v1890 = vpop.xlane.xlu0 %1889
    %1891 = vmax.xlane.f32.xlu0 %v1816
    %v1892 = vpop.xlane.xlu0 %1891
    %1893 = vmax.xlane.f32.xlu0 %v1817
    %v1894 = vpop.xlane.xlu0 %1893
    %1895 = vmax.xlane.f32.xlu0 %v1818
    %v1896 = vpop.xlane.xlu0 %1895
    %1897 = vmax.xlane.f32.xlu0 %v1819
    %v1898 = vpop.xlane.xlu0 %1897
    %1899 = vmax.xlane.f32.xlu0 %v1820
    %v1900 = vpop.xlane.xlu0 %1899
    %1901 = vmax.xlane.f32.xlu0 %v1821
    %v1902 = vpop.xlane.xlu0 %1901
    %1903 = vmax.xlane.f32.xlu0 %v1822
    %v1904 = vpop.xlane.xlu0 %1903
    %1905 = vmax.xlane.f32.xlu0 %v1823
    %v1906 = vpop.xlane.xlu0 %1905
    %1907 = vmax.xlane.f32.xlu0 %v1824
    %v1908 = vpop.xlane.xlu0 %1907
    %1909 = vmax.xlane.f32.xlu0 %v1825
    %v1910 = vpop.xlane.xlu0 %1909
    %1911 = vmax.xlane.f32.xlu0 %v1826
    %v1912 = vpop.xlane.xlu0 %1911
    %1913 = vmax.xlane.f32.xlu0 %v1827
    %v1914 = vpop.xlane.xlu0 %1913
    %1915 = vmax.xlane.f32.xlu0 %v1828
    %v1916 = vpop.xlane.xlu0 %1915
    %1917 = vmax.xlane.f32.xlu0 %v1829
    %v1918 = vpop.xlane.xlu0 %1917
    %1919 = vmax.xlane.f32.xlu0 %v1830
    %v1920 = vpop.xlane.xlu0 %1919
    %1921 = vmax.xlane.f32.xlu0 %v1831
    %v1922 = vpop.xlane.xlu0 %1921
    %1923 = vmax.xlane.f32.xlu0 %v1832
    %v1924 = vpop.xlane.xlu0 %1923
    %1925 = vmax.xlane.f32.xlu0 %v1833
    %v1926 = vpop.xlane.xlu0 %1925
    %1927 = vmax.xlane.f32.xlu0 %v1834
    %v1928 = vpop.xlane.xlu0 %1927
    %1929 = vmax.xlane.f32.xlu0 %v1835
    %v1930 = vpop.xlane.xlu0 %1929
    %1931 = vmax.xlane.f32.xlu0 %v1836
    %v1932 = vpop.xlane.xlu0 %1931
    %1933 = vmax.xlane.f32.xlu0 %v1837
    %v1934 = vpop.xlane.xlu0 %1933
    %1935 = vmax.xlane.f32.xlu0 %v1838
    %v1936 = vpop.xlane.xlu0 %1935
    %1937 = vmax.xlane.f32.xlu0 %v1839
    %v1938 = vpop.xlane.xlu0 %1937
    %1939 = vmax.xlane.f32.xlu0 %v1840
    %v1940 = vpop.xlane.xlu0 %1939
    %1941 = vmax.xlane.f32.xlu0 %v1841
    %v1942 = vpop.xlane.xlu0 %1941
    %1943 = vmax.xlane.f32.xlu0 %v1842
    %v1944 = vpop.xlane.xlu0 %1943
    %1945 = vmax.xlane.f32.xlu0 %v1843
    %v1946 = vpop.xlane.xlu0 %1945
    %1947 = vmax.xlane.f32.xlu0 %v1844
    %v1948 = vpop.xlane.xlu0 %1947
    %1949 = vmax.xlane.f32.xlu0 %v1845
    %v1950 = vpop.xlane.xlu0 %1949
    %1951 = vmax.xlane.f32.xlu0 %v1846
    %v1952 = vpop.xlane.xlu0 %1951
    %1953 = vmax.xlane.f32.xlu0 %v1847
    %v1954 = vpop.xlane.xlu0 %1953
    %1955 = vmax.xlane.f32.xlu0 %v1848
    %v1956 = vpop.xlane.xlu0 %1955
    %1957 = vmax.xlane.f32.xlu0 %v1849
    %v1958 = vpop.xlane.xlu0 %1957
    %1959 = vmax.xlane.f32.xlu0 %v1850
    %v1960 = vpop.xlane.xlu0 %1959
    %1961 = vmax.xlane.f32.xlu0 %v1851
    %v1962 = vpop.xlane.xlu0 %1961
    %1963 = vmax.xlane.f32.xlu0 %v1852
    %v1964 = vpop.xlane.xlu0 %1963
    %1965 = vmax.xlane.f32.xlu0 %v1853
    %v1966 = vpop.xlane.xlu0 %1965
    %1967 = vmax.xlane.f32.xlu0 %v1854
    %v1968 = vpop.xlane.xlu0 %1967
    %1969 = vmax.xlane.f32.xlu0 %v1855
    %v1970 = vpop.xlane.xlu0 %1969
    %1971 = vmax.xlane.f32.xlu0 %v1856
    %v1972 = vpop.xlane.xlu0 %1971
    %1973 = vmax.xlane.f32.xlu0 %v1857
    %v1974 = vpop.xlane.xlu0 %1973
    %1975 = vmax.xlane.f32.xlu0 %v1858
    %v1976 = vpop.xlane.xlu0 %1975
    %1977 = vmax.xlane.f32.xlu0 %v1859
    %v1978 = vpop.xlane.xlu0 %1977
    %1979 = vmax.xlane.f32.xlu0 %v1860
    %v1980 = vpop.xlane.xlu0 %1979
    %1981 = vmax.xlane.f32.xlu0 %v1861
    %v1982 = vpop.xlane.xlu0 %1981
    %1983 = vmax.xlane.f32.xlu0 %v1862
    %v1984 = vpop.xlane.xlu0 %1983
    %1985 = vmax.xlane.f32.xlu0 %v1863
    %v1986 = vpop.xlane.xlu0 %1985
    %1987 = vmax.xlane.f32.xlu0 %v1864
    %v1988 = vpop.xlane.xlu0 %1987
    %1989 = vmax.xlane.f32.xlu0 %v1865
    %v1990 = vpop.xlane.xlu0 %1989
    %1991 = vmax.xlane.f32.xlu0 %v1866
    %v1992 = vpop.xlane.xlu0 %1991
    %1993 = vmax.xlane.f32.xlu0 %v1867
    %v1994 = vpop.xlane.xlu0 %1993
    %1995 = vmax.xlane.f32.xlu0 %v1868
    %v1996 = vpop.xlane.xlu0 %1995
    %v1997 = vsub.f32 %v1805, %v1870
    %v1998 = vsub.f32 %v1806, %v1872
    %v1999 = vsub.f32 %v1807, %v1874
    %v2000 = vsub.f32 %v1808, %v1876
    %v2001 = vsub.f32 %v1809, %v1878
    %v2002 = vsub.f32 %v1810, %v1880
    %v2003 = vsub.f32 %v1811, %v1882
    %v2004 = vsub.f32 %v1812, %v1884
    %v2005 = vsub.f32 %v1813, %v1886
    %v2006 = vsub.f32 %v1814, %v1888
    %v2007 = vsub.f32 %v1815, %v1890
    %v2008 = vsub.f32 %v1816, %v1892
    %v2009 = vsub.f32 %v1817, %v1894
    %v2010 = vsub.f32 %v1818, %v1896
    %v2011 = vsub.f32 %v1819, %v1898
    %v2012 = vsub.f32 %v1820, %v1900
    %v2013 = vsub.f32 %v1821, %v1902
    %v2014 = vsub.f32 %v1822, %v1904
    %v2015 = vsub.f32 %v1823, %v1906
    %v2016 = vsub.f32 %v1824, %v1908
    %v2017 = vsub.f32 %v1825, %v1910
    %v2018 = vsub.f32 %v1826, %v1912
    %v2019 = vsub.f32 %v1827, %v1914
    %v2020 = vsub.f32 %v1828, %v1916
    %v2021 = vsub.f32 %v1829, %v1918
    %v2022 = vsub.f32 %v1830, %v1920
    %v2023 = vsub.f32 %v1831, %v1922
    %v2024 = vsub.f32 %v1832, %v1924
    %v2025 = vsub.f32 %v1833, %v1926
    %v2026 = vsub.f32 %v1834, %v1928
    %v2027 = vsub.f32 %v1835, %v1930
    %v2028 = vsub.f32 %v1836, %v1932
    %v2029 = vsub.f32 %v1837, %v1934
    %v2030 = vsub.f32 %v1838, %v1936
    %v2031 = vsub.f32 %v1839, %v1938
    %v2032 = vsub.f32 %v1840, %v1940
    %v2033 = vsub.f32 %v1841, %v1942
    %v2034 = vsub.f32 %v1842, %v1944
    %v2035 = vsub.f32 %v1843, %v1946
    %v2036 = vsub.f32 %v1844, %v1948
    %v2037 = vsub.f32 %v1845, %v1950
    %v2038 = vsub.f32 %v1846, %v1952
    %v2039 = vsub.f32 %v1847, %v1954
    %v2040 = vsub.f32 %v1848, %v1956
    %v2041 = vsub.f32 %v1849, %v1958
    %v2042 = vsub.f32 %v1850, %v1960
    %v2043 = vsub.f32 %v1851, %v1962
    %v2044 = vsub.f32 %v1852, %v1964
    %v2045 = vsub.f32 %v1853, %v1966
    %v2046 = vsub.f32 %v1854, %v1968
    %v2047 = vsub.f32 %v1855, %v1970
    %v2048 = vsub.f32 %v1856, %v1972
    %v2049 = vsub.f32 %v1857, %v1974
    %v2050 = vsub.f32 %v1858, %v1976
    %v2051 = vsub.f32 %v1859, %v1978
    %v2052 = vsub.f32 %v1860, %v1980
    %v2053 = vsub.f32 %v1861, %v1982
    %v2054 = vsub.f32 %v1862, %v1984
    %v2055 = vsub.f32 %v1863, %v1986
    %v2056 = vsub.f32 %v1864, %v1988
    %v2057 = vsub.f32 %v1865, %v1990
    %v2058 = vsub.f32 %v1866, %v1992
    %v2059 = vsub.f32 %v1867, %v1994
    %v2060 = vsub.f32 %v1868, %v1996
    %v2061 = vmul.f32 %v1997, 1.442695
    %v2062 = vpow.pop %v2061
    %v2063 = vmul.f32 %v1998, 1.442695
    %v2064 = vpow.pop %v2063
    %v2065 = vmul.f32 %v1999, 1.442695
    %v2066 = vpow.pop %v2065
    %v2067 = vmul.f32 %v2000, 1.442695
    %v2068 = vpow.pop %v2067
    %v2069 = vmul.f32 %v2001, 1.442695
    %v2070 = vpow.pop %v2069
    %v2071 = vmul.f32 %v2002, 1.442695
    %v2072 = vpow.pop %v2071
    %v2073 = vmul.f32 %v2003, 1.442695
    %v2074 = vpow.pop %v2073
    %v2075 = vmul.f32 %v2004, 1.442695
    %v2076 = vpow.pop %v2075
    %v2077 = vmul.f32 %v2005, 1.442695
    %v2078 = vpow.pop %v2077
    %v2079 = vmul.f32 %v2006, 1.442695
    %v2080 = vpow.pop %v2079
    %v2081 = vmul.f32 %v2007, 1.442695
    %v2082 = vpow.pop %v2081
    %v2083 = vmul.f32 %v2008, 1.442695
    %v2084 = vpow.pop %v2083
    %v2085 = vmul.f32 %v2009, 1.442695
    %v2086 = vpow.pop %v2085
    %v2087 = vmul.f32 %v2010, 1.442695
    %v2088 = vpow.pop %v2087
    %v2089 = vmul.f32 %v2011, 1.442695
    %v2090 = vpow.pop %v2089
    %v2091 = vmul.f32 %v2012, 1.442695
    %v2092 = vpow.pop %v2091
    %v2093 = vmul.f32 %v2013, 1.442695
    %v2094 = vpow.pop %v2093
    %v2095 = vmul.f32 %v2014, 1.442695
    %v2096 = vpow.pop %v2095
    %v2097 = vmul.f32 %v2015, 1.442695
    %v2098 = vpow.pop %v2097
    %v2099 = vmul.f32 %v2016, 1.442695
    %v2100 = vpow.pop %v2099
    %v2101 = vmul.f32 %v2017, 1.442695
    %v2102 = vpow.pop %v2101
    %v2103 = vmul.f32 %v2018, 1.442695
    %v2104 = vpow.pop %v2103
    %v2105 = vmul.f32 %v2019, 1.442695
    %v2106 = vpow.pop %v2105
    %v2107 = vmul.f32 %v2020, 1.442695
    %v2108 = vpow.pop %v2107
    %v2109 = vmul.f32 %v2021, 1.442695
    %v2110 = vpow.pop %v2109
    %v2111 = vmul.f32 %v2022, 1.442695
    %v2112 = vpow.pop %v2111
    %v2113 = vmul.f32 %v2023, 1.442695
    %v2114 = vpow.pop %v2113
    %v2115 = vmul.f32 %v2024, 1.442695
    %v2116 = vpow.pop %v2115
    %v2117 = vmul.f32 %v2025, 1.442695
    %v2118 = vpow.pop %v2117
    %v2119 = vmul.f32 %v2026, 1.442695
    %v2120 = vpow.pop %v2119
    %v2121 = vmul.f32 %v2027, 1.442695
    %v2122 = vpow.pop %v2121
    %v2123 = vmul.f32 %v2028, 1.442695
    %v2124 = vpow.pop %v2123
    %v2125 = vmul.f32 %v2029, 1.442695
    %v2126 = vpow.pop %v2125
    %v2127 = vmul.f32 %v2030, 1.442695
    %v2128 = vpow.pop %v2127
    %v2129 = vmul.f32 %v2031, 1.442695
    %v2130 = vpow.pop %v2129
    %v2131 = vmul.f32 %v2032, 1.442695
    %v2132 = vpow.pop %v2131
    %v2133 = vmul.f32 %v2033, 1.442695
    %v2134 = vpow.pop %v2133
    %v2135 = vmul.f32 %v2034, 1.442695
    %v2136 = vpow.pop %v2135
    %v2137 = vmul.f32 %v2035, 1.442695
    %v2138 = vpow.pop %v2137
    %v2139 = vmul.f32 %v2036, 1.442695
    %v2140 = vpow.pop %v2139
    %v2141 = vmul.f32 %v2037, 1.442695
    %v2142 = vpow.pop %v2141
    %v2143 = vmul.f32 %v2038, 1.442695
    %v2144 = vpow.pop %v2143
    %v2145 = vmul.f32 %v2039, 1.442695
    %v2146 = vpow.pop %v2145
    %v2147 = vmul.f32 %v2040, 1.442695
    %v2148 = vpow.pop %v2147
    %v2149 = vmul.f32 %v2041, 1.442695
    %v2150 = vpow.pop %v2149
    %v2151 = vmul.f32 %v2042, 1.442695
    %v2152 = vpow.pop %v2151
    %v2153 = vmul.f32 %v2043, 1.442695
    %v2154 = vpow.pop %v2153
    %v2155 = vmul.f32 %v2044, 1.442695
    %v2156 = vpow.pop %v2155
    %v2157 = vmul.f32 %v2045, 1.442695
    %v2158 = vpow.pop %v2157
    %v2159 = vmul.f32 %v2046, 1.442695
    %v2160 = vpow.pop %v2159
    %v2161 = vmul.f32 %v2047, 1.442695
    %v2162 = vpow.pop %v2161
    %v2163 = vmul.f32 %v2048, 1.442695
    %v2164 = vpow.pop %v2163
    %v2165 = vmul.f32 %v2049, 1.442695
    %v2166 = vpow.pop %v2165
    %v2167 = vmul.f32 %v2050, 1.442695
    %v2168 = vpow.pop %v2167
    %v2169 = vmul.f32 %v2051, 1.442695
    %v2170 = vpow.pop %v2169
    %v2171 = vmul.f32 %v2052, 1.442695
    %v2172 = vpow.pop %v2171
    %v2173 = vmul.f32 %v2053, 1.442695
    %v2174 = vpow.pop %v2173
    %v2175 = vmul.f32 %v2054, 1.442695
    %v2176 = vpow.pop %v2175
    %v2177 = vmul.f32 %v2055, 1.442695
    %v2178 = vpow.pop %v2177
    %v2179 = vmul.f32 %v2056, 1.442695
    %v2180 = vpow.pop %v2179
    %v2181 = vmul.f32 %v2057, 1.442695
    %v2182 = vpow.pop %v2181
    %v2183 = vmul.f32 %v2058, 1.442695
    %v2184 = vpow.pop %v2183
    %v2185 = vmul.f32 %v2059, 1.442695
    %v2186 = vpow.pop %v2185
    %v2187 = vmul.f32 %v2060, 1.442695
    %v2188 = vpow.pop %v2187
    %2189 = vadd.xlane.f32.xlu0 %v2062
    %v2190 = vpop.xlane.xlu0 %2189
    %2191 = vadd.xlane.f32.xlu0 %v2064
    %v2192 = vpop.xlane.xlu0 %2191
    %2193 = vadd.xlane.f32.xlu0 %v2066
    %v2194 = vpop.xlane.xlu0 %2193
    %2195 = vadd.xlane.f32.xlu0 %v2068
    %v2196 = vpop.xlane.xlu0 %2195
    %2197 = vadd.xlane.f32.xlu0 %v2070
    %v2198 = vpop.xlane.xlu0 %2197
    %2199 = vadd.xlane.f32.xlu0 %v2072
    %v2200 = vpop.xlane.xlu0 %2199
    %2201 = vadd.xlane.f32.xlu0 %v2074
    %v2202 = vpop.xlane.xlu0 %2201
    %2203 = vadd.xlane.f32.xlu0 %v2076
    %v2204 = vpop.xlane.xlu0 %2203
    %2205 = vadd.xlane.f32.xlu0 %v2078
    %v2206 = vpop.xlane.xlu0 %2205
    %2207 = vadd.xlane.f32.xlu0 %v2080
    %v2208 = vpop.xlane.xlu0 %2207
    %2209 = vadd.xlane.f32.xlu0 %v2082
    %v2210 = vpop.xlane.xlu0 %2209
    %2211 = vadd.xlane.f32.xlu0 %v2084
    %v2212 = vpop.xlane.xlu0 %2211
    %2213 = vadd.xlane.f32.xlu0 %v2086
    %v2214 = vpop.xlane.xlu0 %2213
    %2215 = vadd.xlane.f32.xlu0 %v2088
    %v2216 = vpop.xlane.xlu0 %2215
    %2217 = vadd.xlane.f32.xlu0 %v2090
    %v2218 = vpop.xlane.xlu0 %2217
    %2219 = vadd.xlane.f32.xlu0 %v2092
    %v2220 = vpop.xlane.xlu0 %2219
    %2221 = vadd.xlane.f32.xlu0 %v2094
    %v2222 = vpop.xlane.xlu0 %2221
    %2223 = vadd.xlane.f32.xlu0 %v2096
    %v2224 = vpop.xlane.xlu0 %2223
    %2225 = vadd.xlane.f32.xlu0 %v2098
    %v2226 = vpop.xlane.xlu0 %2225
    %2227 = vadd.xlane.f32.xlu0 %v2100
    %v2228 = vpop.xlane.xlu0 %2227
    %2229 = vadd.xlane.f32.xlu0 %v2102
    %v2230 = vpop.xlane.xlu0 %2229
    %2231 = vadd.xlane.f32.xlu0 %v2104
    %v2232 = vpop.xlane.xlu0 %2231
    %2233 = vadd.xlane.f32.xlu0 %v2106
    %v2234 = vpop.xlane.xlu0 %2233
    %2235 = vadd.xlane.f32.xlu0 %v2108
    %v2236 = vpop.xlane.xlu0 %2235
    %2237 = vadd.xlane.f32.xlu0 %v2110
    %v2238 = vpop.xlane.xlu0 %2237
    %2239 = vadd.xlane.f32.xlu0 %v2112
    %v2240 = vpop.xlane.xlu0 %2239
    %2241 = vadd.xlane.f32.xlu0 %v2114
    %v2242 = vpop.xlane.xlu0 %2241
    %2243 = vadd.xlane.f32.xlu0 %v2116
    %v2244 = vpop.xlane.xlu0 %2243
    %2245 = vadd.xlane.f32.xlu0 %v2118
    %v2246 = vpop.xlane.xlu0 %2245
    %2247 = vadd.xlane.f32.xlu0 %v2120
    %v2248 = vpop.xlane.xlu0 %2247
    %2249 = vadd.xlane.f32.xlu0 %v2122
    %v2250 = vpop.xlane.xlu0 %2249
    %2251 = vadd.xlane.f32.xlu0 %v2124
    %v2252 = vpop.xlane.xlu0 %2251
    %2253 = vadd.xlane.f32.xlu0 %v2126
    %v2254 = vpop.xlane.xlu0 %2253
    %2255 = vadd.xlane.f32.xlu0 %v2128
    %v2256 = vpop.xlane.xlu0 %2255
    %2257 = vadd.xlane.f32.xlu0 %v2130
    %v2258 = vpop.xlane.xlu0 %2257
    %2259 = vadd.xlane.f32.xlu0 %v2132
    %v2260 = vpop.xlane.xlu0 %2259
    %2261 = vadd.xlane.f32.xlu0 %v2134
    %v2262 = vpop.xlane.xlu0 %2261
    %2263 = vadd.xlane.f32.xlu0 %v2136
    %v2264 = vpop.xlane.xlu0 %2263
    %2265 = vadd.xlane.f32.xlu0 %v2138
    %v2266 = vpop.xlane.xlu0 %2265
    %2267 = vadd.xlane.f32.xlu0 %v2140
    %v2268 = vpop.xlane.xlu0 %2267
    %2269 = vadd.xlane.f32.xlu0 %v2142
    %v2270 = vpop.xlane.xlu0 %2269
    %2271 = vadd.xlane.f32.xlu0 %v2144
    %v2272 = vpop.xlane.xlu0 %2271
    %2273 = vadd.xlane.f32.xlu0 %v2146
    %v2274 = vpop.xlane.xlu0 %2273
    %2275 = vadd.xlane.f32.xlu0 %v2148
    %v2276 = vpop.xlane.xlu0 %2275
    %2277 = vadd.xlane.f32.xlu0 %v2150
    %v2278 = vpop.xlane.xlu0 %2277
    %2279 = vadd.xlane.f32.xlu0 %v2152
    %v2280 = vpop.xlane.xlu0 %2279
    %2281 = vadd.xlane.f32.xlu0 %v2154
    %v2282 = vpop.xlane.xlu0 %2281
    %2283 = vadd.xlane.f32.xlu0 %v2156
    %v2284 = vpop.xlane.xlu0 %2283
    %2285 = vadd.xlane.f32.xlu0 %v2158
    %v2286 = vpop.xlane.xlu0 %2285
    %2287 = vadd.xlane.f32.xlu0 %v2160
    %v2288 = vpop.xlane.xlu0 %2287
    %2289 = vadd.xlane.f32.xlu0 %v2162
    %v2290 = vpop.xlane.xlu0 %2289
    %2291 = vadd.xlane.f32.xlu0 %v2164
    %v2292 = vpop.xlane.xlu0 %2291
    %2293 = vadd.xlane.f32.xlu0 %v2166
    %v2294 = vpop.xlane.xlu0 %2293
    %2295 = vadd.xlane.f32.xlu0 %v2168
    %v2296 = vpop.xlane.xlu0 %2295
    %2297 = vadd.xlane.f32.xlu0 %v2170
    %v2298 = vpop.xlane.xlu0 %2297
    %2299 = vadd.xlane.f32.xlu0 %v2172
    %v2300 = vpop.xlane.xlu0 %2299
    %2301 = vadd.xlane.f32.xlu0 %v2174
    %v2302 = vpop.xlane.xlu0 %2301
    %2303 = vadd.xlane.f32.xlu0 %v2176
    %v2304 = vpop.xlane.xlu0 %2303
    %2305 = vadd.xlane.f32.xlu0 %v2178
    %v2306 = vpop.xlane.xlu0 %2305
    %2307 = vadd.xlane.f32.xlu0 %v2180
    %v2308 = vpop.xlane.xlu0 %2307
    %2309 = vadd.xlane.f32.xlu0 %v2182
    %v2310 = vpop.xlane.xlu0 %2309
    %2311 = vadd.xlane.f32.xlu0 %v2184
    %v2312 = vpop.xlane.xlu0 %2311
    %2313 = vadd.xlane.f32.xlu0 %v2186
    %v2314 = vpop.xlane.xlu0 %2313
    %2315 = vadd.xlane.f32.xlu0 %v2188
    %v2316 = vpop.xlane.xlu0 %2315
    %v2317 = vrcp.pop %v2190
    %v2318 = vrcp.pop %v2192
    %v2319 = vrcp.pop %v2194
    %v2320 = vrcp.pop %v2196
    %v2321 = vrcp.pop %v2198
    %v2322 = vrcp.pop %v2200
    %v2323 = vrcp.pop %v2202
    %v2324 = vrcp.pop %v2204
    %v2325 = vrcp.pop %v2206
    %v2326 = vrcp.pop %v2208
    %v2327 = vrcp.pop %v2210
    %v2328 = vrcp.pop %v2212
    %v2329 = vrcp.pop %v2214
    %v2330 = vrcp.pop %v2216
    %v2331 = vrcp.pop %v2218
    %v2332 = vrcp.pop %v2220
    %v2333 = vrcp.pop %v2222
    %v2334 = vrcp.pop %v2224
    %v2335 = vrcp.pop %v2226
    %v2336 = vrcp.pop %v2228
    %v2337 = vrcp.pop %v2230
    %v2338 = vrcp.pop %v2232
    %v2339 = vrcp.pop %v2234
    %v2340 = vrcp.pop %v2236
    %v2341 = vrcp.pop %v2238
    %v2342 = vrcp.pop %v2240
    %v2343 = vrcp.pop %v2242
    %v2344 = vrcp.pop %v2244
    %v2345 = vrcp.pop %v2246
    %v2346 = vrcp.pop %v2248
    %v2347 = vrcp.pop %v2250
    %v2348 = vrcp.pop %v2252
    %v2349 = vrcp.pop %v2254
    %v2350 = vrcp.pop %v2256
    %v2351 = vrcp.pop %v2258
    %v2352 = vrcp.pop %v2260
    %v2353 = vrcp.pop %v2262
    %v2354 = vrcp.pop %v2264
    %v2355 = vrcp.pop %v2266
    %v2356 = vrcp.pop %v2268
    %v2357 = vrcp.pop %v2270
    %v2358 = vrcp.pop %v2272
    %v2359 = vrcp.pop %v2274
    %v2360 = vrcp.pop %v2276
    %v2361 = vrcp.pop %v2278
    %v2362 = vrcp.pop %v2280
    %v2363 = vrcp.pop %v2282
    %v2364 = vrcp.pop %v2284
    %v2365 = vrcp.pop %v2286
    %v2366 = vrcp.pop %v2288
    %v2367 = vrcp.pop %v2290
    %v2368 = vrcp.pop %v2292
    %v2369 = vrcp.pop %v2294
    %v2370 = vrcp.pop %v2296
    %v2371 = vrcp.pop %v2298
    %v2372 = vrcp.pop %v2300
    %v2373 = vrcp.pop %v2302
    %v2374 = vrcp.pop %v2304
    %v2375 = vrcp.pop %v2306
    %v2376 = vrcp.pop %v2308
    %v2377 = vrcp.pop %v2310
    %v2378 = vrcp.pop %v2312
    %v2379 = vrcp.pop %v2314
    %v2380 = vrcp.pop %v2316
    %v2381 = vmul.f32 %v2062, %v2317
    %v2382 = vmul.f32 %v2064, %v2318
    %v2383 = vmul.f32 %v2066, %v2319
    %v2384 = vmul.f32 %v2068, %v2320
    %v2385 = vmul.f32 %v2070, %v2321
    %v2386 = vmul.f32 %v2072, %v2322
    %v2387 = vmul.f32 %v2074, %v2323
    %v2388 = vmul.f32 %v2076, %v2324
    %v2389 = vmul.f32 %v2078, %v2325
    %v2390 = vmul.f32 %v2080, %v2326
    %v2391 = vmul.f32 %v2082, %v2327
    %v2392 = vmul.f32 %v2084, %v2328
    %v2393 = vmul.f32 %v2086, %v2329
    %v2394 = vmul.f32 %v2088, %v2330
    %v2395 = vmul.f32 %v2090, %v2331
    %v2396 = vmul.f32 %v2092, %v2332
    %v2397 = vmul.f32 %v2094, %v2333
    %v2398 = vmul.f32 %v2096, %v2334
    %v2399 = vmul.f32 %v2098, %v2335
    %v2400 = vmul.f32 %v2100, %v2336
    %v2401 = vmul.f32 %v2102, %v2337
    %v2402 = vmul.f32 %v2104, %v2338
    %v2403 = vmul.f32 %v2106, %v2339
    %v2404 = vmul.f32 %v2108, %v2340
    %v2405 = vmul.f32 %v2110, %v2341
    %v2406 = vmul.f32 %v2112, %v2342
    %v2407 = vmul.f32 %v2114, %v2343
    %v2408 = vmul.f32 %v2116, %v2344
    %v2409 = vmul.f32 %v2118, %v2345
    %v2410 = vmul.f32 %v2120, %v2346
    %v2411 = vmul.f32 %v2122, %v2347
    %v2412 = vmul.f32 %v2124, %v2348
    %v2413 = vmul.f32 %v2126, %v2349
    %v2414 = vmul.f32 %v2128, %v2350
    %v2415 = vmul.f32 %v2130, %v2351
    %v2416 = vmul.f32 %v2132, %v2352
    %v2417 = vmul.f32 %v2134, %v2353
    %v2418 = vmul.f32 %v2136, %v2354
    %v2419 = vmul.f32 %v2138, %v2355
    %v2420 = vmul.f32 %v2140, %v2356
    %v2421 = vmul.f32 %v2142, %v2357
    %v2422 = vmul.f32 %v2144, %v2358
    %v2423 = vmul.f32 %v2146, %v2359
    %v2424 = vmul.f32 %v2148, %v2360
    %v2425 = vmul.f32 %v2150, %v2361
    %v2426 = vmul.f32 %v2152, %v2362
    %v2427 = vmul.f32 %v2154, %v2363
    %v2428 = vmul.f32 %v2156, %v2364
    %v2429 = vmul.f32 %v2158, %v2365
    %v2430 = vmul.f32 %v2160, %v2366
    %v2431 = vmul.f32 %v2162, %v2367
    %v2432 = vmul.f32 %v2164, %v2368
    %v2433 = vmul.f32 %v2166, %v2369
    %v2434 = vmul.f32 %v2168, %v2370
    %v2435 = vmul.f32 %v2170, %v2371
    %v2436 = vmul.f32 %v2172, %v2372
    %v2437 = vmul.f32 %v2174, %v2373
    %v2438 = vmul.f32 %v2176, %v2374
    %v2439 = vmul.f32 %v2178, %v2375
    %v2440 = vmul.f32 %v2180, %v2376
    %v2441 = vmul.f32 %v2182, %v2377
    %v2442 = vmul.f32 %v2184, %v2378
    %v2443 = vmul.f32 %v2186, %v2379
    %v2444 = vmul.f32 %v2188, %v2380
    %v2445 = vpack.c.bf16 %v2381, %v2381
    %v2446 = vpack.c.bf16 %v2382, %v2382
    %v2447 = vpack.c.bf16 %v2383, %v2383
    %v2448 = vpack.c.bf16 %v2384, %v2384
    %v2449 = vpack.c.bf16 %v2385, %v2385
    %v2450 = vpack.c.bf16 %v2386, %v2386
    %v2451 = vpack.c.bf16 %v2387, %v2387
    %v2452 = vpack.c.bf16 %v2388, %v2388
    %v2453 = vpack.c.bf16 %v2389, %v2389
    %v2454 = vpack.c.bf16 %v2390, %v2390
    %v2455 = vpack.c.bf16 %v2391, %v2391
    %v2456 = vpack.c.bf16 %v2392, %v2392
    %v2457 = vpack.c.bf16 %v2393, %v2393
    %v2458 = vpack.c.bf16 %v2394, %v2394
    %v2459 = vpack.c.bf16 %v2395, %v2395
    %v2460 = vpack.c.bf16 %v2396, %v2396
    %v2461 = vpack.c.bf16 %v2397, %v2397
    %v2462 = vpack.c.bf16 %v2398, %v2398
    %v2463 = vpack.c.bf16 %v2399, %v2399
    %v2464 = vpack.c.bf16 %v2400, %v2400
    %v2465 = vpack.c.bf16 %v2401, %v2401
    %v2466 = vpack.c.bf16 %v2402, %v2402
    %v2467 = vpack.c.bf16 %v2403, %v2403
    %v2468 = vpack.c.bf16 %v2404, %v2404
    %v2469 = vpack.c.bf16 %v2405, %v2405
    %v2470 = vpack.c.bf16 %v2406, %v2406
    %v2471 = vpack.c.bf16 %v2407, %v2407
    %v2472 = vpack.c.bf16 %v2408, %v2408
    %v2473 = vpack.c.bf16 %v2409, %v2409
    %v2474 = vpack.c.bf16 %v2410, %v2410
    %v2475 = vpack.c.bf16 %v2411, %v2411
    %v2476 = vpack.c.bf16 %v2412, %v2412
    %v2477 = vpack.c.bf16 %v2413, %v2413
    %v2478 = vpack.c.bf16 %v2414, %v2414
    %v2479 = vpack.c.bf16 %v2415, %v2415
    %v2480 = vpack.c.bf16 %v2416, %v2416
    %v2481 = vpack.c.bf16 %v2417, %v2417
    %v2482 = vpack.c.bf16 %v2418, %v2418
    %v2483 = vpack.c.bf16 %v2419, %v2419
    %v2484 = vpack.c.bf16 %v2420, %v2420
    %v2485 = vpack.c.bf16 %v2421, %v2421
    %v2486 = vpack.c.bf16 %v2422, %v2422
    %v2487 = vpack.c.bf16 %v2423, %v2423
    %v2488 = vpack.c.bf16 %v2424, %v2424
    %v2489 = vpack.c.bf16 %v2425, %v2425
    %v2490 = vpack.c.bf16 %v2426, %v2426
    %v2491 = vpack.c.bf16 %v2427, %v2427
    %v2492 = vpack.c.bf16 %v2428, %v2428
    %v2493 = vpack.c.bf16 %v2429, %v2429
    %v2494 = vpack.c.bf16 %v2430, %v2430
    %v2495 = vpack.c.bf16 %v2431, %v2431
    %v2496 = vpack.c.bf16 %v2432, %v2432
    %v2497 = vpack.c.bf16 %v2433, %v2433
    %v2498 = vpack.c.bf16 %v2434, %v2434
    %v2499 = vpack.c.bf16 %v2435, %v2435
    %v2500 = vpack.c.bf16 %v2436, %v2436
    %v2501 = vpack.c.bf16 %v2437, %v2437
    %v2502 = vpack.c.bf16 %v2438, %v2438
    %v2503 = vpack.c.bf16 %v2439, %v2439
    %v2504 = vpack.c.bf16 %v2440, %v2440
    %v2505 = vpack.c.bf16 %v2441, %v2441
    %v2506 = vpack.c.bf16 %v2442, %v2442
    %v2507 = vpack.c.bf16 %v2443, %v2443
    %v2508 = vpack.c.bf16 %v2444, %v2444
    %v2525 = vunpack.c.l.b16 %v2445
    %v2526 = vunpack.c.l.b16 %v2446
    %v2527 = vunpack.c.l.b16 %v2447
    %v2528 = vunpack.c.l.b16 %v2448
    %v2529 = vunpack.c.l.b16 %v2449
    %v2530 = vunpack.c.l.b16 %v2450
    %v2531 = vunpack.c.l.b16 %v2451
    %v2532 = vunpack.c.l.b16 %v2452
    %v2533 = vunpack.c.l.b16 %v2453
    %v2534 = vunpack.c.l.b16 %v2454
    %v2535 = vunpack.c.l.b16 %v2455
    %v2536 = vunpack.c.l.b16 %v2456
    %v2537 = vunpack.c.l.b16 %v2457
    %v2538 = vunpack.c.l.b16 %v2458
    %v2539 = vunpack.c.l.b16 %v2459
    %v2540 = vunpack.c.l.b16 %v2460
    %v2541 = vpack.c.b16 %v2526, %v2525
    %v2542 = vpack.c.b16 %v2528, %v2527
    %v2543 = vpack.c.b16 %v2530, %v2529
    %v2544 = vpack.c.b16 %v2532, %v2531
    %v2545 = vpack.c.b16 %v2534, %v2533
    %v2546 = vpack.c.b16 %v2536, %v2535
    %v2547 = vpack.c.b16 %v2538, %v2537
    %v2548 = vpack.c.b16 %v2540, %v2539
    %v2573 = vunpack.c.l.b16 %v1094
    %v2574 = vunpack.c.l.b16 %v1095
    %v2575 = vunpack.c.l.b16 %v1096
    %v2576 = vunpack.c.l.b16 %v1097
    %v2577 = vunpack.c.l.b16 %v1098
    %v2578 = vunpack.c.l.b16 %v1099
    %v2579 = vunpack.c.l.b16 %v1100
    %v2580 = vunpack.c.l.b16 %v1101
    %v2581 = vunpack.c.l.b16 %v1102
    %v2582 = vunpack.c.l.b16 %v1103
    %v2583 = vunpack.c.l.b16 %v1104
    %v2584 = vunpack.c.l.b16 %v1105
    %v2585 = vunpack.c.l.b16 %v1106
    %v2586 = vunpack.c.l.b16 %v1107
    %v2587 = vunpack.c.l.b16 %v1108
    %v2588 = vunpack.c.l.b16 %v1109
    %v2589 = vpack.c.b16 %v2574, %v2573
    %v2590 = vpack.c.b16 %v2576, %v2575
    %v2591 = vpack.c.b16 %v2578, %v2577
    %v2592 = vpack.c.b16 %v2580, %v2579
    %v2593 = vpack.c.b16 %v2582, %v2581
    %v2594 = vpack.c.b16 %v2584, %v2583
    %v2595 = vpack.c.b16 %v2586, %v2585
    %v2596 = vpack.c.b16 %v2588, %v2587
    %2605 = vmatpush.bf16.msra.mxu0 %v2596
    %2606 = vmatpush.bf16.msra.mxu0 %v2595
    %2607 = vmatpush.bf16.msra.mxu0 %v2594
    %2608 = vmatpush.bf16.msra.mxu0 %v2593
    %2609 = vmatpush.bf16.msra.mxu0 %v2592
    %2610 = vmatpush.bf16.msra.mxu0 %v2591
    %2611 = vmatpush.bf16.msra.mxu0 %v2590
    %2612 = vmatpush.bf16.msra.mxu0 %v2589
    %2613 = vmatmul.bf16.gmra.mxu0 %v2541
    %v2614 = vpop.f32.mrf.mxu0
    %v2615 = vadd.f32 0.0, %v2614
    %v2616 = vpop.f32.mrf.mxu0
    %v2617 = vadd.f32 0.0, %v2616
    %2618 = vmatmul.bf16.gmra.mxu0 %v2542
    %v2619 = vpop.f32.mrf.mxu0
    %v2620 = vadd.f32 0.0, %v2619
    %v2621 = vpop.f32.mrf.mxu0
    %v2622 = vadd.f32 0.0, %v2621
    %2623 = vmatmul.bf16.gmra.mxu0 %v2543
    %v2624 = vpop.f32.mrf.mxu0
    %v2625 = vadd.f32 0.0, %v2624
    %v2626 = vpop.f32.mrf.mxu0
    %v2627 = vadd.f32 0.0, %v2626
    %2628 = vmatmul.bf16.gmra.mxu0 %v2544
    %v2629 = vpop.f32.mrf.mxu0
    %v2630 = vadd.f32 0.0, %v2629
    %v2631 = vpop.f32.mrf.mxu0
    %v2632 = vadd.f32 0.0, %v2631
    %2633 = vmatmul.bf16.gmra.mxu0 %v2545
    %v2634 = vpop.f32.mrf.mxu0
    %v2635 = vadd.f32 0.0, %v2634
    %v2636 = vpop.f32.mrf.mxu0
    %v2637 = vadd.f32 0.0, %v2636
    %2638 = vmatmul.bf16.gmra.mxu0 %v2546
    %v2639 = vpop.f32.mrf.mxu0
    %v2640 = vadd.f32 0.0, %v2639
    %v2641 = vpop.f32.mrf.mxu0
    %v2642 = vadd.f32 0.0, %v2641
    %2643 = vmatmul.bf16.gmra.mxu0 %v2547
    %v2644 = vpop.f32.mrf.mxu0
    %v2645 = vadd.f32 0.0, %v2644
    %v2646 = vpop.f32.mrf.mxu0
    %v2647 = vadd.f32 0.0, %v2646
    %2648 = vmatmul.bf16.gmra.mxu0 %v2548
    %v2649 = vpop.f32.mrf.mxu0
    %v2650 = vadd.f32 0.0, %v2649
    %v2651 = vpop.f32.mrf.mxu0
    %v2652 = vadd.f32 0.0, %v2651
    %2653 = vdwg.mxu0
    %v2670 = vunpack.c.l.b16 %v2461
    %v2671 = vunpack.c.l.b16 %v2462
    %v2672 = vunpack.c.l.b16 %v2463
    %v2673 = vunpack.c.l.b16 %v2464
    %v2674 = vunpack.c.l.b16 %v2465
    %v2675 = vunpack.c.l.b16 %v2466
    %v2676 = vunpack.c.l.b16 %v2467
    %v2677 = vunpack.c.l.b16 %v2468
    %v2678 = vunpack.c.l.b16 %v2469
    %v2679 = vunpack.c.l.b16 %v2470
    %v2680 = vunpack.c.l.b16 %v2471
    %v2681 = vunpack.c.l.b16 %v2472
    %v2682 = vunpack.c.l.b16 %v2473
    %v2683 = vunpack.c.l.b16 %v2474
    %v2684 = vunpack.c.l.b16 %v2475
    %v2685 = vunpack.c.l.b16 %v2476
    %v2686 = vpack.c.b16 %v2671, %v2670
    %v2687 = vpack.c.b16 %v2673, %v2672
    %v2688 = vpack.c.b16 %v2675, %v2674
    %v2689 = vpack.c.b16 %v2677, %v2676
    %v2690 = vpack.c.b16 %v2679, %v2678
    %v2691 = vpack.c.b16 %v2681, %v2680
    %v2692 = vpack.c.b16 %v2683, %v2682
    %v2693 = vpack.c.b16 %v2685, %v2684
    %v2718 = vunpack.c.l.b16 %v1110
    %v2719 = vunpack.c.l.b16 %v1111
    %v2720 = vunpack.c.l.b16 %v1112
    %v2721 = vunpack.c.l.b16 %v1113
    %v2722 = vunpack.c.l.b16 %v1114
    %v2723 = vunpack.c.l.b16 %v1115
    %v2724 = vunpack.c.l.b16 %v1116
    %v2725 = vunpack.c.l.b16 %v1117
    %v2726 = vunpack.c.l.b16 %v1118
    %v2727 = vunpack.c.l.b16 %v1119
    %v2728 = vunpack.c.l.b16 %v1120
    %v2729 = vunpack.c.l.b16 %v1121
    %v2730 = vunpack.c.l.b16 %v1122
    %v2731 = vunpack.c.l.b16 %v1123
    %v2732 = vunpack.c.l.b16 %v1124
    %v2733 = vunpack.c.l.b16 %v1125
    %v2734 = vpack.c.b16 %v2719, %v2718
    %v2735 = vpack.c.b16 %v2721, %v2720
    %v2736 = vpack.c.b16 %v2723, %v2722
    %v2737 = vpack.c.b16 %v2725, %v2724
    %v2738 = vpack.c.b16 %v2727, %v2726
    %v2739 = vpack.c.b16 %v2729, %v2728
    %v2740 = vpack.c.b16 %v2731, %v2730
    %v2741 = vpack.c.b16 %v2733, %v2732
    %2750 = vmatpush.bf16.msra.mxu0 %v2741
    %2751 = vmatpush.bf16.msra.mxu0 %v2740
    %2752 = vmatpush.bf16.msra.mxu0 %v2739
    %2753 = vmatpush.bf16.msra.mxu0 %v2738
    %2754 = vmatpush.bf16.msra.mxu0 %v2737
    %2755 = vmatpush.bf16.msra.mxu0 %v2736
    %2756 = vmatpush.bf16.msra.mxu0 %v2735
    %2757 = vmatpush.bf16.msra.mxu0 %v2734
    %2758 = vmatmul.bf16.gmra.mxu0 %v2686
    %v2759 = vpop.f32.mrf.mxu0
    %v2760 = vadd.f32 0.0, %v2759
    %v2761 = vpop.f32.mrf.mxu0
    %v2762 = vadd.f32 0.0, %v2761
    %2763 = vmatmul.bf16.gmra.mxu0 %v2687
    %v2764 = vpop.f32.mrf.mxu0
    %v2765 = vadd.f32 0.0, %v2764
    %v2766 = vpop.f32.mrf.mxu0
    %v2767 = vadd.f32 0.0, %v2766
    %2768 = vmatmul.bf16.gmra.mxu0 %v2688
    %v2769 = vpop.f32.mrf.mxu0
    %v2770 = vadd.f32 0.0, %v2769
    %v2771 = vpop.f32.mrf.mxu0
    %v2772 = vadd.f32 0.0, %v2771
    %2773 = vmatmul.bf16.gmra.mxu0 %v2689
    %v2774 = vpop.f32.mrf.mxu0
    %v2775 = vadd.f32 0.0, %v2774
    %v2776 = vpop.f32.mrf.mxu0
    %v2777 = vadd.f32 0.0, %v2776
    %2778 = vmatmul.bf16.gmra.mxu0 %v2690
    %v2779 = vpop.f32.mrf.mxu0
    %v2780 = vadd.f32 0.0, %v2779
    %v2781 = vpop.f32.mrf.mxu0
    %v2782 = vadd.f32 0.0, %v2781
    %2783 = vmatmul.bf16.gmra.mxu0 %v2691
    %v2784 = vpop.f32.mrf.mxu0
    %v2785 = vadd.f32 0.0, %v2784
    %v2786 = vpop.f32.mrf.mxu0
    %v2787 = vadd.f32 0.0, %v2786
    %2788 = vmatmul.bf16.gmra.mxu0 %v2692
    %v2789 = vpop.f32.mrf.mxu0
    %v2790 = vadd.f32 0.0, %v2789
    %v2791 = vpop.f32.mrf.mxu0
    %v2792 = vadd.f32 0.0, %v2791
    %2793 = vmatmul.bf16.gmra.mxu0 %v2693
    %v2794 = vpop.f32.mrf.mxu0
    %v2795 = vadd.f32 0.0, %v2794
    %v2796 = vpop.f32.mrf.mxu0
    %v2797 = vadd.f32 0.0, %v2796
    %2798 = vdwg.mxu0
    %v2815 = vunpack.c.l.b16 %v2477
    %v2816 = vunpack.c.l.b16 %v2478
    %v2817 = vunpack.c.l.b16 %v2479
    %v2818 = vunpack.c.l.b16 %v2480
    %v2819 = vunpack.c.l.b16 %v2481
    %v2820 = vunpack.c.l.b16 %v2482
    %v2821 = vunpack.c.l.b16 %v2483
    %v2822 = vunpack.c.l.b16 %v2484
    %v2823 = vunpack.c.l.b16 %v2485
    %v2824 = vunpack.c.l.b16 %v2486
    %v2825 = vunpack.c.l.b16 %v2487
    %v2826 = vunpack.c.l.b16 %v2488
    %v2827 = vunpack.c.l.b16 %v2489
    %v2828 = vunpack.c.l.b16 %v2490
    %v2829 = vunpack.c.l.b16 %v2491
    %v2830 = vunpack.c.l.b16 %v2492
    %v2831 = vpack.c.b16 %v2816, %v2815
    %v2832 = vpack.c.b16 %v2818, %v2817
    %v2833 = vpack.c.b16 %v2820, %v2819
    %v2834 = vpack.c.b16 %v2822, %v2821
    %v2835 = vpack.c.b16 %v2824, %v2823
    %v2836 = vpack.c.b16 %v2826, %v2825
    %v2837 = vpack.c.b16 %v2828, %v2827
    %v2838 = vpack.c.b16 %v2830, %v2829
    %v2863 = vunpack.c.l.b16 %v1126
    %v2864 = vunpack.c.l.b16 %v1127
    %v2865 = vunpack.c.l.b16 %v1128
    %v2866 = vunpack.c.l.b16 %v1129
    %v2867 = vunpack.c.l.b16 %v1130
    %v2868 = vunpack.c.l.b16 %v1131
    %v2869 = vunpack.c.l.b16 %v1132
    %v2870 = vunpack.c.l.b16 %v1133
    %v2871 = vunpack.c.l.b16 %v1134
    %v2872 = vunpack.c.l.b16 %v1135
    %v2873 = vunpack.c.l.b16 %v1136
    %v2874 = vunpack.c.l.b16 %v1137
    %v2875 = vunpack.c.l.b16 %v1138
    %v2876 = vunpack.c.l.b16 %v1139
    %v2877 = vunpack.c.l.b16 %v1140
    %v2878 = vunpack.c.l.b16 %v1141
    %v2879 = vpack.c.b16 %v2864, %v2863
    %v2880 = vpack.c.b16 %v2866, %v2865
    %v2881 = vpack.c.b16 %v2868, %v2867
    %v2882 = vpack.c.b16 %v2870, %v2869
    %v2883 = vpack.c.b16 %v2872, %v2871
    %v2884 = vpack.c.b16 %v2874, %v2873
    %v2885 = vpack.c.b16 %v2876, %v2875
    %v2886 = vpack.c.b16 %v2878, %v2877
    %2895 = vmatpush.bf16.msra.mxu0 %v2886
    %2896 = vmatpush.bf16.msra.mxu0 %v2885
    %2897 = vmatpush.bf16.msra.mxu0 %v2884
    %2898 = vmatpush.bf16.msra.mxu0 %v2883
    %2899 = vmatpush.bf16.msra.mxu0 %v2882
    %2900 = vmatpush.bf16.msra.mxu0 %v2881
    %2901 = vmatpush.bf16.msra.mxu0 %v2880
    %2902 = vmatpush.bf16.msra.mxu0 %v2879
    %2903 = vmatmul.bf16.gmra.mxu0 %v2831
    %v2904 = vpop.f32.mrf.mxu0
    %v2905 = vadd.f32 0.0, %v2904
    %v2906 = vpop.f32.mrf.mxu0
    %v2907 = vadd.f32 0.0, %v2906
    %2908 = vmatmul.bf16.gmra.mxu0 %v2832
    %v2909 = vpop.f32.mrf.mxu0
    %v2910 = vadd.f32 0.0, %v2909
    %v2911 = vpop.f32.mrf.mxu0
    %v2912 = vadd.f32 0.0, %v2911
    %2913 = vmatmul.bf16.gmra.mxu0 %v2833
    %v2914 = vpop.f32.mrf.mxu0
    %v2915 = vadd.f32 0.0, %v2914
    %v2916 = vpop.f32.mrf.mxu0
    %v2917 = vadd.f32 0.0, %v2916
    %2918 = vmatmul.bf16.gmra.mxu0 %v2834
    %v2919 = vpop.f32.mrf.mxu0
    %v2920 = vadd.f32 0.0, %v2919
    %v2921 = vpop.f32.mrf.mxu0
    %v2922 = vadd.f32 0.0, %v2921
    %2923 = vmatmul.bf16.gmra.mxu0 %v2835
    %v2924 = vpop.f32.mrf.mxu0
    %v2925 = vadd.f32 0.0, %v2924
    %v2926 = vpop.f32.mrf.mxu0
    %v2927 = vadd.f32 0.0, %v2926
    %2928 = vmatmul.bf16.gmra.mxu0 %v2836
    %v2929 = vpop.f32.mrf.mxu0
    %v2930 = vadd.f32 0.0, %v2929
    %v2931 = vpop.f32.mrf.mxu0
    %v2932 = vadd.f32 0.0, %v2931
    %2933 = vmatmul.bf16.gmra.mxu0 %v2837
    %v2934 = vpop.f32.mrf.mxu0
    %v2935 = vadd.f32 0.0, %v2934
    %v2936 = vpop.f32.mrf.mxu0
    %v2937 = vadd.f32 0.0, %v2936
    %2938 = vmatmul.bf16.gmra.mxu0 %v2838
    %v2939 = vpop.f32.mrf.mxu0
    %v2940 = vadd.f32 0.0, %v2939
    %v2941 = vpop.f32.mrf.mxu0
    %v2942 = vadd.f32 0.0, %v2941
    %2943 = vdwg.mxu0
    %v2960 = vunpack.c.l.b16 %v2493
    %v2961 = vunpack.c.l.b16 %v2494
    %v2962 = vunpack.c.l.b16 %v2495
    %v2963 = vunpack.c.l.b16 %v2496
    %v2964 = vunpack.c.l.b16 %v2497
    %v2965 = vunpack.c.l.b16 %v2498
    %v2966 = vunpack.c.l.b16 %v2499
    %v2967 = vunpack.c.l.b16 %v2500
    %v2968 = vunpack.c.l.b16 %v2501
    %v2969 = vunpack.c.l.b16 %v2502
    %v2970 = vunpack.c.l.b16 %v2503
    %v2971 = vunpack.c.l.b16 %v2504
    %v2972 = vunpack.c.l.b16 %v2505
    %v2973 = vunpack.c.l.b16 %v2506
    %v2974 = vunpack.c.l.b16 %v2507
    %v2975 = vunpack.c.l.b16 %v2508
    %v2976 = vpack.c.b16 %v2961, %v2960
    %v2977 = vpack.c.b16 %v2963, %v2962
    %v2978 = vpack.c.b16 %v2965, %v2964
    %v2979 = vpack.c.b16 %v2967, %v2966
    %v2980 = vpack.c.b16 %v2969, %v2968
    %v2981 = vpack.c.b16 %v2971, %v2970
    %v2982 = vpack.c.b16 %v2973, %v2972
    %v2983 = vpack.c.b16 %v2975, %v2974
    %v3008 = vunpack.c.l.b16 %v1142
    %v3009 = vunpack.c.l.b16 %v1143
    %v3010 = vunpack.c.l.b16 %v1144
    %v3011 = vunpack.c.l.b16 %v1145
    %v3012 = vunpack.c.l.b16 %v1146
    %v3013 = vunpack.c.l.b16 %v1147
    %v3014 = vunpack.c.l.b16 %v1148
    %v3015 = vunpack.c.l.b16 %v1149
    %v3016 = vunpack.c.l.b16 %v1150
    %v3017 = vunpack.c.l.b16 %v1151
    %v3018 = vunpack.c.l.b16 %v1152
    %v3019 = vunpack.c.l.b16 %v1153
    %v3020 = vunpack.c.l.b16 %v1154
    %v3021 = vunpack.c.l.b16 %v1155
    %v3022 = vunpack.c.l.b16 %v1156
    %v3023 = vunpack.c.l.b16 %v1157
    %v3024 = vpack.c.b16 %v3009, %v3008
    %v3025 = vpack.c.b16 %v3011, %v3010
    %v3026 = vpack.c.b16 %v3013, %v3012
    %v3027 = vpack.c.b16 %v3015, %v3014
    %v3028 = vpack.c.b16 %v3017, %v3016
    %v3029 = vpack.c.b16 %v3019, %v3018
    %v3030 = vpack.c.b16 %v3021, %v3020
    %v3031 = vpack.c.b16 %v3023, %v3022
    %3040 = vmatpush.bf16.msra.mxu0 %v3031
    %3041 = vmatpush.bf16.msra.mxu0 %v3030
    %3042 = vmatpush.bf16.msra.mxu0 %v3029
    %3043 = vmatpush.bf16.msra.mxu0 %v3028
    %3044 = vmatpush.bf16.msra.mxu0 %v3027
    %3045 = vmatpush.bf16.msra.mxu0 %v3026
    %3046 = vmatpush.bf16.msra.mxu0 %v3025
    %3047 = vmatpush.bf16.msra.mxu0 %v3024
    %3048 = vmatmul.bf16.gmra.mxu0 %v2976
    %v3049 = vpop.f32.mrf.mxu0
    %v3050 = vadd.f32 0.0, %v3049
    %v3051 = vpop.f32.mrf.mxu0
    %v3052 = vadd.f32 0.0, %v3051
    %3053 = vmatmul.bf16.gmra.mxu0 %v2977
    %v3054 = vpop.f32.mrf.mxu0
    %v3055 = vadd.f32 0.0, %v3054
    %v3056 = vpop.f32.mrf.mxu0
    %v3057 = vadd.f32 0.0, %v3056
    %3058 = vmatmul.bf16.gmra.mxu0 %v2978
    %v3059 = vpop.f32.mrf.mxu0
    %v3060 = vadd.f32 0.0, %v3059
    %v3061 = vpop.f32.mrf.mxu0
    %v3062 = vadd.f32 0.0, %v3061
    %3063 = vmatmul.bf16.gmra.mxu0 %v2979
    %v3064 = vpop.f32.mrf.mxu0
    %v3065 = vadd.f32 0.0, %v3064
    %v3066 = vpop.f32.mrf.mxu0
    %v3067 = vadd.f32 0.0, %v3066
    %3068 = vmatmul.bf16.gmra.mxu0 %v2980
    %v3069 = vpop.f32.mrf.mxu0
    %v3070 = vadd.f32 0.0, %v3069
    %v3071 = vpop.f32.mrf.mxu0
    %v3072 = vadd.f32 0.0, %v3071
    %3073 = vmatmul.bf16.gmra.mxu0 %v2981
    %v3074 = vpop.f32.mrf.mxu0
    %v3075 = vadd.f32 0.0, %v3074
    %v3076 = vpop.f32.mrf.mxu0
    %v3077 = vadd.f32 0.0, %v3076
    %3078 = vmatmul.bf16.gmra.mxu0 %v2982
    %v3079 = vpop.f32.mrf.mxu0
    %v3080 = vadd.f32 0.0, %v3079
    %v3081 = vpop.f32.mrf.mxu0
    %v3082 = vadd.f32 0.0, %v3081
    %3083 = vmatmul.bf16.gmra.mxu0 %v2983
    %v3084 = vpop.f32.mrf.mxu0
    %v3085 = vadd.f32 0.0, %v3084
    %v3086 = vpop.f32.mrf.mxu0
    %v3087 = vadd.f32 0.0, %v3086
    %3088 = vdwg.mxu0
    %vm3089 = vcmask 523264
    %3090 = vst.msk [vmem:[%s2] sm:$0xff] %vm3089, %v2615
    %3091 = vst.msk [vmem:[%s2 + $0x8] sm:$0xff] %vm3089, %v2617
    %3092 = vst.msk [vmem:[%s2 + $0x10] sm:$0xff] %vm3089, %v2620
    %3093 = vst.msk [vmem:[%s2 + $0x18] sm:$0xff] %vm3089, %v2622
    %3094 = vst.msk [vmem:[%s2 + $0x20] sm:$0xff] %vm3089, %v2625
    %3095 = vst.msk [vmem:[%s2 + $0x28] sm:$0xff] %vm3089, %v2627
    %3096 = vst.msk [vmem:[%s2 + $0x30] sm:$0xff] %vm3089, %v2630
    %3097 = vst.msk [vmem:[%s2 + $0x38] sm:$0xff] %vm3089, %v2632
    %3098 = vst.msk [vmem:[%s2 + $0x40] sm:$0xff] %vm3089, %v2635
    %3099 = vst.msk [vmem:[%s2 + $0x48] sm:$0xff] %vm3089, %v2637
    %3100 = vst.msk [vmem:[%s2 + $0x50] sm:$0xff] %vm3089, %v2640
    %3101 = vst.msk [vmem:[%s2 + $0x58] sm:$0xff] %vm3089, %v2642
    %3102 = vst.msk [vmem:[%s2 + $0x60] sm:$0xff] %vm3089, %v2645
    %3103 = vst.msk [vmem:[%s2 + $0x68] sm:$0xff] %vm3089, %v2647
    %3104 = vst.msk [vmem:[%s2 + $0x70] sm:$0xff] %vm3089, %v2650
    %3105 = vst.msk [vmem:[%s2 + $0x78] sm:$0xff] %vm3089, %v2652
    %3106 = vst.msk [vmem:[%s2 + $0x80] sm:$0xff] %vm3089, %v2760
    %3107 = vst.msk [vmem:[%s2 + $0x88] sm:$0xff] %vm3089, %v2762
    %3108 = vst.msk [vmem:[%s2 + $0x90] sm:$0xff] %vm3089, %v2765
    %3109 = vst.msk [vmem:[%s2 + $0x98] sm:$0xff] %vm3089, %v2767
    %3110 = vst.msk [vmem:[%s2 + $0xa0] sm:$0xff] %vm3089, %v2770
    %3111 = vst.msk [vmem:[%s2 + $0xa8] sm:$0xff] %vm3089, %v2772
    %3112 = vst.msk [vmem:[%s2 + $0xb0] sm:$0xff] %vm3089, %v2775
    %3113 = vst.msk [vmem:[%s2 + $0xb8] sm:$0xff] %vm3089, %v2777
    %3114 = vst.msk [vmem:[%s2 + $0xc0] sm:$0xff] %vm3089, %v2780
    %3115 = vst.msk [vmem:[%s2 + $0xc8] sm:$0xff] %vm3089, %v2782
    %3116 = vst.msk [vmem:[%s2 + $0xd0] sm:$0xff] %vm3089, %v2785
    %3117 = vst.msk [vmem:[%s2 + $0xd8] sm:$0xff] %vm3089, %v2787
    %3118 = vst.msk [vmem:[%s2 + $0xe0] sm:$0xff] %vm3089, %v2790
    %3119 = vst.msk [vmem:[%s2 + $0xe8] sm:$0xff] %vm3089, %v2792
    %3120 = vst.msk [vmem:[%s2 + $0xf0] sm:$0xff] %vm3089, %v2795
    %3121 = vst.msk [vmem:[%s2 + $0xf8] sm:$0xff] %vm3089, %v2797
    %3122 = vst.msk [vmem:[%s2 + $0x100] sm:$0xff] %vm3089, %v2905
    %3123 = vst.msk [vmem:[%s2 + $0x108] sm:$0xff] %vm3089, %v2907
    %3124 = vst.msk [vmem:[%s2 + $0x110] sm:$0xff] %vm3089, %v2910
    %3125 = vst.msk [vmem:[%s2 + $0x118] sm:$0xff] %vm3089, %v2912
    %3126 = vst.msk [vmem:[%s2 + $0x120] sm:$0xff] %vm3089, %v2915
    %3127 = vst.msk [vmem:[%s2 + $0x128] sm:$0xff] %vm3089, %v2917
    %3128 = vst.msk [vmem:[%s2 + $0x130] sm:$0xff] %vm3089, %v2920
    %3129 = vst.msk [vmem:[%s2 + $0x138] sm:$0xff] %vm3089, %v2922
    %3130 = vst.msk [vmem:[%s2 + $0x140] sm:$0xff] %vm3089, %v2925
    %3131 = vst.msk [vmem:[%s2 + $0x148] sm:$0xff] %vm3089, %v2927
    %3132 = vst.msk [vmem:[%s2 + $0x150] sm:$0xff] %vm3089, %v2930
    %3133 = vst.msk [vmem:[%s2 + $0x158] sm:$0xff] %vm3089, %v2932
    %3134 = vst.msk [vmem:[%s2 + $0x160] sm:$0xff] %vm3089, %v2935
    %3135 = vst.msk [vmem:[%s2 + $0x168] sm:$0xff] %vm3089, %v2937
    %3136 = vst.msk [vmem:[%s2 + $0x170] sm:$0xff] %vm3089, %v2940
    %3137 = vst.msk [vmem:[%s2 + $0x178] sm:$0xff] %vm3089, %v2942
    %3138 = vst.msk [vmem:[%s2 + $0x180] sm:$0xff] %vm3089, %v3050
    %3139 = vst.msk [vmem:[%s2 + $0x188] sm:$0xff] %vm3089, %v3052
    %3140 = vst.msk [vmem:[%s2 + $0x190] sm:$0xff] %vm3089, %v3055
    %3141 = vst.msk [vmem:[%s2 + $0x198] sm:$0xff] %vm3089, %v3057
    %3142 = vst.msk [vmem:[%s2 + $0x1a0] sm:$0xff] %vm3089, %v3060
    %3143 = vst.msk [vmem:[%s2 + $0x1a8] sm:$0xff] %vm3089, %v3062
    %3144 = vst.msk [vmem:[%s2 + $0x1b0] sm:$0xff] %vm3089, %v3065
    %3145 = vst.msk [vmem:[%s2 + $0x1b8] sm:$0xff] %vm3089, %v3067
    %3146 = vst.msk [vmem:[%s2 + $0x1c0] sm:$0xff] %vm3089, %v3070
    %3147 = vst.msk [vmem:[%s2 + $0x1c8] sm:$0xff] %vm3089, %v3072
    %3148 = vst.msk [vmem:[%s2 + $0x1d0] sm:$0xff] %vm3089, %v3075
    %3149 = vst.msk [vmem:[%s2 + $0x1d8] sm:$0xff] %vm3089, %v3077
    %3150 = vst.msk [vmem:[%s2 + $0x1e0] sm:$0xff] %vm3089, %v3080
    %3151 = vst.msk [vmem:[%s2 + $0x1e8] sm:$0xff] %vm3089, %v3082
    %3152 = vst.msk [vmem:[%s2 + $0x1f0] sm:$0xff] %vm3089, %v3085
    %3153 = vst.msk [vmem:[%s2 + $0x1f8] sm:$0xff] %vm3089, %v3087
    // Predicated region
    $region18: #{tpu_custom_call.1} parent=1 // pred_check
      _
    $region19: #{tpu_custom_call.1} parent=1 // pred_check_branch
      %3155 = sbr.rel (0) target = $region21
    $region20: #{tpu_custom_call.1} parent=1 // pred_region
      _
    $region21: #{tpu_custom_call.1} parent=1 // pred_fallthru
      _
    // Predicated region
    $region22: #{tpu_custom_call.1} parent=1 // pred_check
      _
    $region23: #{tpu_custom_call.1} parent=1 // pred_check_branch
      %3157 = sbr.rel (0) target = $region25
    $region24: #{tpu_custom_call.1} parent=1 // pred_region
      _
    $region25: #{tpu_custom_call.1} parent=1 // pred_fallthru
      _
    %3158 = vsyncpa [#allocation3], 1
    %3159 = vsyncpa [#allocation5], 1

</llo_original>
